<compile_context>
chip_gen: v7x
topology: tpu7x:2x2x1
jax: 0.10.0
libtpu: 0.0.40
codegen_flags: <defaults>
</compile_context>

<pallas_src>
import functools

import numpy as np
import jax
import jax.numpy as jnp
from jax.experimental import pallas as pl
from jax.experimental.pallas import tpu as pltpu


# ----------------------------- tiling helpers -------------------------------

def _units_per_block(n_units, unit_rows, target_rows=1024):
    """Pick u | n_units (units per grid block).  Preference order: >=2 grid blocks
    (v7x has two TensorCores), block sublane extent % 8 == 0 (BlockSpec rule, waived
    when the block spans the full array), and the largest block that stays under
    target_rows (per-grid-step overhead amortization).  Falls back to the full extent."""
    best_u, best_key = n_units, None
    for u in range(1, n_units + 1):
        if n_units % u:
            continue
        rows, blocks = u * unit_rows, n_units // u
        if rows % 8 and u != n_units:          # partial blocks must be 8-row aligned
            continue
        key = (blocks >= 2, rows <= target_rows,
               rows if rows <= target_rows else -rows)
        if best_key is None or key > best_key:
            best_key, best_u = key, u
    return best_u


# ----------------------------- Pallas kernels -------------------------------

def _gcn_m2r_proj_kernel(a_ref, x_ref,
                         gw1_ref, gb1_ref, gw2_ref, gb2_ref,
                         mw1_ref, mb1_ref, mw2_ref, mb2_ref, mw3_ref, mb3_ref,
                         wxi_ref, wxm_ref, o_ref):
    """Fused GCNConv+ReLU x2 -> MLP2RNN (Lin-ReLU-Lin-ReLU-Lin) -> RNN input projection.

    One block holds G = rows // N whole graphs.  A_hat is applied per graph with a single
    batched matmul (no block-diagonal kron, no redundant FLOPs).  The output is
    x @ Wih[:F_in] + MLP2RNN(gcn(x)) @ Wih[F_in:], i.e. the RNN's per-step input
    projection, so no lane-narrow GCN activation ever round-trips through HBM.
    """
    rows = x_ref.shape[0]
    n = a_ref.shape[0]
    g = rows // n
    a_b = jnp.broadcast_to(a_ref[...], (g, n, n))       # hoisted once per block

    def adj(h):                                         # per-graph A_hat @ h
        # N == sublane tile (8) keeps this reshape layout-free.
        h3 = h.reshape(g, n, h.shape[-1])
        out = jnp.einsum('gij,gjf->gif', a_b, h3,
                         preferred_element_type=jnp.float32)
        return out.reshape(rows, h.shape[-1])

    x = x_ref[...]
    h = jnp.maximum(adj(jnp.dot(x, gw1_ref[...], preferred_element_type=jnp.float32))
                    + gb1_ref[...], 0.0)
    h = jnp.maximum(adj(jnp.dot(h, gw2_ref[...], preferred_element_type=jnp.float32))
                    + gb2_ref[...], 0.0)
    h = jnp.maximum(jnp.dot(h, mw1_ref[...], preferred_element_type=jnp.float32)
                    + mb1_ref[...], 0.0)
    h = jnp.maximum(jnp.dot(h, mw2_ref[...], preferred_element_type=jnp.float32)
                    + mb2_ref[...], 0.0)
    m = jnp.dot(h, mw3_ref[...], preferred_element_type=jnp.float32) + mb3_ref[...]
    # RNN input projection (W_ih split into x / m2r halves -> no concat anywhere).
    o_ref[...] = (jnp.dot(x, wxi_ref[...], preferred_element_type=jnp.float32)
                  + jnp.dot(m, wxm_ref[...], preferred_element_type=jnp.float32))


def gcn_m2r_proj_forward(a_hat, x_flat,
                         gw1t, gb1, gw2t, gb2,
                         mw1t, mb1, mw2t, mb2, mw3t, mb3,
                         wih_in_t, wih_m2r_t, *, n_nodes, target_rows=1024):
    R, Fin = x_flat.shape
    H = wih_in_t.shape[1]
    assert R % n_nodes == 0
    n_graphs = R // n_nodes
    g_blk = _units_per_block(n_graphs, n_nodes, target_rows)
    rows_blk = g_blk * n_nodes
    grid = (n_graphs // g_blk,)
    const = lambda arr: pl.BlockSpec(arr.shape, lambda i: (0, 0))
    return pl.pallas_call(
        _gcn_m2r_proj_kernel,
        out_shape=jax.ShapeDtypeStruct((R, H), jnp.float32),
        grid=grid,
        in_specs=[
            const(a_hat),
            pl.BlockSpec((rows_blk, Fin), lambda i: (i, 0)),
            const(gw1t), const(gb1), const(gw2t), const(gb2),
            const(mw1t), const(mb1), const(mw2t), const(mb2), const(mw3t), const(mb3),
            const(wih_in_t), const(wih_m2r_t),
        ],
        out_specs=pl.BlockSpec((rows_blk, H), lambda i: (i, 0)),
        compiler_params=pltpu.CompilerParams(dimension_semantics=("parallel",)),
    )(a_hat, x_flat, gw1t, gb1, gw2t, gb2, mw1t, mb1, mw2t, mb2, mw3t, mb3,
      wih_in_t, wih_m2r_t)


def _rnn_head_kernel(xw_ref, whh_ref, b_ref,
                     hw1_ref, hb1_ref, hw2_ref, hb2_ref, hw3_ref, hb3_ref, o_ref):
    """Elman RNN (tanh) with a pre-hoisted input projection + fused head MLP.

    xw_ref is lane-packed (rows, T*H): columns t*H..(t+1)*H hold x_t @ W_ih.  Prediction
    steps see a zero input (torch reads the still-zero feedback row), so they are
    recurrence-only.  All T+P hidden states are stacked and the 3-layer head runs ONCE
    (big-M matmuls); the result is written with one lane-packed store.
    """
    rows = xw_ref.shape[0]
    hsz = whh_ref.shape[0]
    t_in = xw_ref.shape[1] // hsz
    f_tot = hw3_ref.shape[1]
    t_run = o_ref.shape[1] // f_tot              # = input_horizon + pred_hor

    xw = xw_ref[...]
    whh = whh_ref[...]
    b = b_ref[...]

    # Recurrence only inside the (short, static) unrolled loop; everything else hoisted.
    # TODO(synk): if t_run ever grows large, switch to lax.fori_loop(..., unroll=True)
    # with a VMEM scratch for the hidden-state stack to bound live ranges.
    h = jnp.tanh(xw[:, :hsz] + b)                # h_{-1} = 0
    hs = [h]
    for t in range(1, t_run):
        rec = jnp.dot(h, whh, preferred_element_type=jnp.float32) + b
        if t < t_in:
            rec = rec + xw[:, t * hsz:(t + 1) * hsz]
        h = jnp.tanh(rec)
        hs.append(h)

    hs_all = jnp.concatenate(hs, axis=0)         # (t_run*rows, H), timestep-major
    y = jnp.maximum(jnp.dot(hs_all, hw1_ref[...], preferred_element_type=jnp.float32)
                    + hb1_ref[...], 0.0)
    y = jnp.maximum(jnp.dot(y, hw2_ref[...], preferred_element_type=jnp.float32)
                    + hb2_ref[...], 0.0)
    y = jnp.dot(y, hw3_ref[...], preferred_element_type=jnp.float32) + hb3_ref[...]
    # Single lane-packed store: o[q, t*F_tot:(t+1)*F_tot] = head(h_t)[q].
    o_ref[...] = jnp.concatenate(
        [y[t * rows:(t + 1) * rows, :] for t in range(t_run)], axis=-1)


def rnn_head_forward(xw_packed, whh_t, rnn_b,
                     hw1t, hb1, hw2t, hb2, hw3t, hb3, *, t_run, target_rows=1024):
    BN, TH = xw_packed.shape
    F_tot = hw3t.shape[1]
    bn_tile = _units_per_block(BN, 1, target_rows)
    grid = (BN // bn_tile,)
    const = lambda arr: pl.BlockSpec(arr.shape, lambda i: (0, 0))
    return pl.pallas_call(
        _rnn_head_kernel,
        out_shape=jax.ShapeDtypeStruct((BN, t_run * F_tot), jnp.float32),
        grid=grid,
        in_specs=[
            pl.BlockSpec((bn_tile, TH), lambda i: (i, 0)),
            const(whh_t), const(rnn_b),
            const(hw1t), const(hb1), const(hw2t), const(hb2), const(hw3t), const(hb3),
        ],
        out_specs=pl.BlockSpec((bn_tile, t_run * F_tot), lambda i: (i, 0)),
        compiler_params=pltpu.CompilerParams(dimension_semantics=("parallel",)),
    )(xw_packed, whh_t, rnn_b, hw1t, hb1, hw2t, hb2, hw3t, hb3)


# ------------------------------- glue / model -------------------------------

def build_normalized_adjacency(n_nodes, edge_src, edge_dst, edge_w):
    """A_hat = D^-1/2 (A + I) D^-1/2 with A[dst, src] = w (PyG GCNConv gcn_norm).
    One-time scatter-style preprocessing done in plain XLA (not a kernel)."""
    A = jnp.zeros((n_nodes, n_nodes), jnp.float32)
    A = A.at[edge_dst, edge_src].add(edge_w)
    A = A + jnp.eye(n_nodes, dtype=jnp.float32)   # self-loops, fill value 1
    deg = A.sum(axis=1)
    dinv = jnp.where(deg > 0, 1.0 / jnp.sqrt(deg), 0.0)
    return dinv[:, None] * A * dinv[None, :]


def init_params(key, n_features, n_out_features, h_size, mlp_width):
    F_in, F_out, H, W = n_features, n_out_features, h_size, mlp_width
    F_rnn = F_in + F_out
    keys = jax.random.split(key, 10)

    def lin(k, fan_in, fan_out):
        kw, kb = jax.random.split(k)
        bound = 1.0 / np.sqrt(fan_in)
        w = jax.random.uniform(kw, (fan_out, fan_in), jnp.float32, -bound, bound)
        b = jax.random.uniform(kb, (fan_out,), jnp.float32, -bound, bound)
        return w, b

    gcn_w1, gcn_b1 = lin(keys[0], F_in, F_out)
    gcn_w2, gcn_b2 = lin(keys[1], F_out, F_out)
    m2r_w1, m2r_b1 = lin(keys[2], F_out, F_out * W)
    m2r_w2, m2r_b2 = lin(keys[3], F_out * W, F_out * W)
    m2r_w3, m2r_b3 = lin(keys[4], F_out * W, F_out)
    rnn_wih, rnn_bih = lin(keys[5], F_rnn, H)
    rnn_whh, rnn_bhh = lin(keys[6], H, H)
    mlp_w1, mlp_b1 = lin(keys[7], H, H * W)
    mlp_w2, mlp_b2 = lin(keys[8], H * W, H * W)
    mlp_w3, mlp_b3 = lin(keys[9], H * W, F_rnn)

    t = lambda w: jnp.asarray(w).T
    return dict(
        gcn_w1t=t(gcn_w1), gcn_b1=gcn_b1[None, :],
        gcn_w2t=t(gcn_w2), gcn_b2=gcn_b2[None, :],
        m2r_w1t=t(m2r_w1), m2r_b1=m2r_b1[None, :],
        m2r_w2t=t(m2r_w2), m2r_b2=m2r_b2[None, :],
        m2r_w3t=t(m2r_w3), m2r_b3=m2r_b3[None, :],
        rnn_wih_t=t(rnn_wih), rnn_whh_t=t(rnn_whh),
        rnn_b=(rnn_bih + rnn_bhh)[None, :],
        mlp_w1t=t(mlp_w1), mlp_b1=mlp_b1[None, :],
        mlp_w2t=t(mlp_w2), mlp_b2=mlp_b2[None, :],
        mlp_w3t=t(mlp_w3), mlp_b3=mlp_b3[None, :],
    )


def gcnn_rnn_forward(params, a_hat, x_in, *, n_nodes, n_features, n_out_features,
                     h_size, input_horizon, prediction_horizon, pred_hor):
    B = x_in.shape[0]
    T, N, F_in, F_out, H = input_horizon, n_nodes, n_features, n_out_features, h_size
    F_tot = F_in + F_out
    BN = B * N

    x_flat = x_in.reshape(B * T * N, F_in)                 # torch: x_in.view(-1, N, F) rows

    # Split W_ih^T into its x / MLP2RNN halves -> the RNN-input concat disappears.
    wih_in_t = params["rnn_wih_t"][:F_in]
    wih_m2r_t = params["rnn_wih_t"][F_in:]

    # ---- kernel 1: GCN x2 + MLP2RNN + RNN input projection, all on-chip ------------
    xw = gcn_m2r_proj_forward(a_hat, x_flat,
                              params["gcn_w1t"], params["gcn_b1"],
                              params["gcn_w2t"], params["gcn_b2"],
                              params["m2r_w1t"], params["m2r_b1"],
                              params["m2r_w2t"], params["m2r_b2"],
                              params["m2r_w3t"], params["m2r_b3"],
                              wih_in_t, wih_m2r_t, n_nodes=N)       # (B*T*N, H)

    # torch's raw `.view(B*N, T, ...)` memory reinterpretation (NOT a transpose),
    # lane-packed so kernel 2 reads T*H-wide rows.
    xw_packed = xw.reshape(BN, T * H)

    # ---- kernel 2: full RNN recurrence + head MLP (pred steps are zero-input) -------
    T_run = T + pred_hor
    head = rnn_head_forward(xw_packed, params["rnn_whh_t"], params["rnn_b"],
                            params["mlp_w1t"], params["mlp_b1"],
                            params["mlp_w2t"], params["mlp_b2"],
                            params["mlp_w3t"], params["mlp_b3"],
                            t_run=T_run)                            # (BN, T_run*F_tot)
    head = head.reshape(BN, T_run, F_tot)

    T_total = T + prediction_horizon
    if T_total > T_run:
        # torch leaves the remaining timesteps of x_out_final untouched (zeros).
        head = jnp.concatenate(
            [head, jnp.zeros((BN, T_total - T_run, F_tot), jnp.float32)], axis=1)

    # torch: raw `.view(B, T_total, N, F_tot)` of the (B*N, T_total, F_tot) buffer.
    return head.reshape(B, T_total, N, F_tot)


# --------------------------- pure-JAX reference ------------------------------

def reference_forward(params, a_hat, x_in, *, n_nodes, n_features, n_out_features,
                      h_size, input_horizon, prediction_horizon, pred_hor):
    B = x_in.shape[0]
    T, N, F_in, F_out = input_horizon, n_nodes, n_features, n_out_features
    F_tot = F_in + F_out
    x_flat = x_in.reshape(B * T, N, F_in)

    h = jnp.einsum("ij,bjf->bif", a_hat, x_flat @ params["gcn_w1t"]) + params["gcn_b1"]
    h = jnp.maximum(h, 0.0)
    h = jnp.einsum("ij,bjf->bif", a_hat, h @ params["gcn_w2t"]) + params["gcn_b2"]
    x_gcn = jnp.maximum(h, 0.0)

    def mlp3(x, w1, b1, w2, b2, w3, b3):
        x = jnp.maximum(x @ w1 + b1, 0.0)
        x = jnp.maximum(x @ w2 + b2, 0.0)
        return x @ w3 + b3

    m = mlp3(x_gcn.reshape(B * T * N, F_out), params["m2r_w1t"], params["m2r_b1"],
             params["m2r_w2t"], params["m2r_b2"], params["m2r_w3t"], params["m2r_b3"])
    x_rnn = jnp.concatenate([x_in.reshape(B * N, T, F_in), m.reshape(B * N, T, F_out)], -1)
    x_rnn = jnp.concatenate([x_rnn, jnp.zeros((B * N, pred_hor, F_tot), jnp.float32)], 1)

    hstate = jnp.zeros((B * N, h_size), jnp.float32)
    outs = []
    for t in range(T + pred_hor):
        hstate = jnp.tanh(x_rnn[:, t, :] @ params["rnn_wih_t"]
                          + hstate @ params["rnn_whh_t"] + params["rnn_b"])
        outs.append(hstate)
    rnn_out = jnp.stack(outs, axis=1)

    head = mlp3(rnn_out.reshape(-1, h_size), params["mlp_w1t"], params["mlp_b1"],
                params["mlp_w2t"], params["mlp_b2"], params["mlp_w3t"], params["mlp_b3"])
    head = head.reshape(B * N, T + pred_hor, F_tot)
    T_total = T + prediction_horizon
    pad = jnp.zeros((B * N, T_total - (T + pred_hor), F_tot), jnp.float32)
    return jnp.concatenate([head, pad], axis=1).reshape(B, T_total, N, F_tot)


# ----------------------------------- main ------------------------------------

if __name__ == "__main__":
    B, T, P = 2, 4, 2                 # batch, input_horizon, prediction_horizon
    N, F_in, F_out, H, W = 8, 4, 8, 16, 2
    pred_hor = P

    key = jax.random.PRNGKey(0)
    k_x, k_p = jax.random.split(key)
    x_in = jax.random.normal(k_x, (B, T, N, F_in), jnp.float32)

    # synthetic fixed edge list: bidirectional ring over N nodes with deterministic weights
    src = np.concatenate([np.arange(N), (np.arange(N) + 1) % N]).astype(np.int32)
    dst = np.concatenate([(np.arange(N) + 1) % N, np.arange(N)]).astype(np.int32)
    w = (0.5 + 0.05 * np.arange(2 * N)).astype(np.float32)
    a_hat = build_normalized_adjacency(N, jnp.asarray(src), jnp.asarray(dst), jnp.asarray(w))

    params = init_params(k_p, F_in, F_out, H, W)

    kw = dict(n_nodes=N, n_features=F_in, n_out_features=F_out, h_size=H,
              input_horizon=T, prediction_horizon=P, pred_hor=pred_hor)

    fwd = jax.jit(functools.partial(gcnn_rnn_forward, **kw))
    out = jax.block_until_ready(fwd(params, a_hat, x_in))
    assert out.shape == (B, T + P, N, F_in + F_out)
    assert out.dtype == jnp.float32

    ref = jax.block_until_ready(reference_forward(params, a_hat, x_in, **kw))
    np.testing.assert_allclose(np.asarray(out), np.asarray(ref), rtol=1e-2, atol=2e-3)

    print("KERNEL_OK")
</pallas_src>

<mosaic_0001>
module attributes {stable_mosaic.version = 11 : i64} {
  func.func @_gcn_m2r_proj_kernel(%arg0: i32, %arg1: memref<8x8xf32, #tpu.memory_space<vmem>>, %arg2: memref<32x4xf32, #tpu.memory_space<vmem>>, %arg3: memref<4x8xf32, #tpu.memory_space<vmem>>, %arg4: memref<1x8xf32, #tpu.memory_space<vmem>>, %arg5: memref<8x8xf32, #tpu.memory_space<vmem>>, %arg6: memref<1x8xf32, #tpu.memory_space<vmem>>, %arg7: memref<8x16xf32, #tpu.memory_space<vmem>>, %arg8: memref<1x16xf32, #tpu.memory_space<vmem>>, %arg9: memref<16x16xf32, #tpu.memory_space<vmem>>, %arg10: memref<1x16xf32, #tpu.memory_space<vmem>>, %arg11: memref<16x8xf32, #tpu.memory_space<vmem>>, %arg12: memref<1x8xf32, #tpu.memory_space<vmem>>, %arg13: memref<4x16xf32, #tpu.memory_space<vmem>>, %arg14: memref<8x16xf32, #tpu.memory_space<vmem>>, %arg15: memref<32x16xf32, #tpu.memory_space<vmem>>) attributes {dimension_semantics = [#tpu.dimension_semantics<parallel>], iteration_bounds = array<i64: 2>, scalar_prefetch = 0 : i64, scratch_operands = 0 : i64, tpu.core_type = #tpu.core_type<tc>, window_params = [{pipeline_mode = #tpu.pipeline_mode<synchronous>, transform_indices = @transform_0, window_bounds = array<i64: 8, 8>}, {transform_indices = @transform_1, window_bounds = array<i64: 32, 4>}, {pipeline_mode = #tpu.pipeline_mode<synchronous>, transform_indices = @transform_2, window_bounds = array<i64: 4, 8>}, {pipeline_mode = #tpu.pipeline_mode<synchronous>, transform_indices = @transform_3, window_bounds = array<i64: 1, 8>}, {pipeline_mode = #tpu.pipeline_mode<synchronous>, transform_indices = @transform_4, window_bounds = array<i64: 8, 8>}, {pipeline_mode = #tpu.pipeline_mode<synchronous>, transform_indices = @transform_5, window_bounds = array<i64: 1, 8>}, {pipeline_mode = #tpu.pipeline_mode<synchronous>, transform_indices = @transform_6, window_bounds = array<i64: 8, 16>}, {pipeline_mode = #tpu.pipeline_mode<synchronous>, transform_indices = @transform_7, window_bounds = array<i64: 1, 16>}, {pipeline_mode = #tpu.pipeline_mode<synchronous>, transform_indices = @transform_8, window_bounds = array<i64: 16, 16>}, {pipeline_mode = #tpu.pipeline_mode<synchronous>, transform_indices = @transform_9, window_bounds = array<i64: 1, 16>}, {pipeline_mode = #tpu.pipeline_mode<synchronous>, transform_indices = @transform_10, window_bounds = array<i64: 16, 8>}, {pipeline_mode = #tpu.pipeline_mode<synchronous>, transform_indices = @transform_11, window_bounds = array<i64: 1, 8>}, {pipeline_mode = #tpu.pipeline_mode<synchronous>, transform_indices = @transform_12, window_bounds = array<i64: 4, 16>}, {pipeline_mode = #tpu.pipeline_mode<synchronous>, transform_indices = @transform_13, window_bounds = array<i64: 8, 16>}, {transform_indices = @transform_14, window_bounds = array<i64: 32, 16>}]} {
    %c0 = arith.constant 0 : index
    %c0_0 = arith.constant 0 : index
    %0 = vector.load %arg1[%c0, %c0_0] : memref<8x8xf32, #tpu.memory_space<vmem>>, vector<8x8xf32>
    %1 = vector.shape_cast %0 : vector<8x8xf32> to vector<1x8x8xf32>
    %2 = vector.broadcast %1 : vector<1x8x8xf32> to vector<4x8x8xf32>
    %c0_1 = arith.constant 0 : index
    %c0_2 = arith.constant 0 : index
    %3 = vector.load %arg2[%c0_1, %c0_2] : memref<32x4xf32, #tpu.memory_space<vmem>>, vector<32x4xf32>
    %c0_3 = arith.constant 0 : index
    %c0_4 = arith.constant 0 : index
    %4 = vector.load %arg3[%c0_3, %c0_4] : memref<4x8xf32, #tpu.memory_space<vmem>>, vector<4x8xf32>
    %cst = arith.constant dense<0.000000e+00> : vector<32x8xf32>
    %5 = tpu.matmul %3, %4, %cst {dimension_numbers = #tpu.dot_dimension_numbers<[1], [0], [0], [1], [0, 0, 1, 1], [], []>} : vector<32x4xf32>, vector<4x8xf32>, vector<32x8xf32> -> vector<32x8xf32>
    %6 = vector.shape_cast %5 : vector<32x8xf32> to vector<4x8x8xf32>
    "tpu.trace_start"() <{level = 10 : i32, message = "gij,gjf->gif"}> : () -> ()
    %cst_5 = arith.constant dense<0.000000e+00> : vector<4x8x8xf32>
    %7 = tpu.matmul %2, %6, %cst_5 {dimension_numbers = #tpu.dot_dimension_numbers<[2], [1], [1], [2], [0, 0, 0, 1, 1, 2], [0], [0]>} : vector<4x8x8xf32>, vector<4x8x8xf32>, vector<4x8x8xf32> -> vector<4x8x8xf32>
    "tpu.trace_stop"() : () -> ()
    %8 = vector.shape_cast %7 : vector<4x8x8xf32> to vector<32x8xf32>
    %c0_6 = arith.constant 0 : index
    %c0_7 = arith.constant 0 : index
    %9 = vector.load %arg4[%c0_6, %c0_7] : memref<1x8xf32, #tpu.memory_space<vmem>>, vector<1x8xf32>
    %10 = vector.broadcast %9 : vector<1x8xf32> to vector<32x8xf32>
    %11 = arith.addf %8, %10 : vector<32x8xf32>
    %cst_8 = arith.constant 0.000000e+00 : f32
    %12 = vector.broadcast %cst_8 : f32 to vector<32x8xf32>
    %13 = arith.maximumf %11, %12 : vector<32x8xf32>
    %c0_9 = arith.constant 0 : index
    %c0_10 = arith.constant 0 : index
    %14 = vector.load %arg5[%c0_9, %c0_10] : memref<8x8xf32, #tpu.memory_space<vmem>>, vector<8x8xf32>
    %cst_11 = arith.constant dense<0.000000e+00> : vector<32x8xf32>
    %15 = tpu.matmul %13, %14, %cst_11 {dimension_numbers = #tpu.dot_dimension_numbers<[1], [0], [0], [1], [0, 0, 1, 1], [], []>} : vector<32x8xf32>, vector<8x8xf32>, vector<32x8xf32> -> vector<32x8xf32>
    %16 = vector.shape_cast %15 : vector<32x8xf32> to vector<4x8x8xf32>
    "tpu.trace_start"() <{level = 10 : i32, message = "gij,gjf->gif"}> : () -> ()
    %cst_12 = arith.constant dense<0.000000e+00> : vector<4x8x8xf32>
    %17 = tpu.matmul %2, %16, %cst_12 {dimension_numbers = #tpu.dot_dimension_numbers<[2], [1], [1], [2], [0, 0, 0, 1, 1, 2], [0], [0]>} : vector<4x8x8xf32>, vector<4x8x8xf32>, vector<4x8x8xf32> -> vector<4x8x8xf32>
    "tpu.trace_stop"() : () -> ()
    %18 = vector.shape_cast %17 : vector<4x8x8xf32> to vector<32x8xf32>
    %c0_13 = arith.constant 0 : index
    %c0_14 = arith.constant 0 : index
    %19 = vector.load %arg6[%c0_13, %c0_14] : memref<1x8xf32, #tpu.memory_space<vmem>>, vector<1x8xf32>
    %20 = vector.broadcast %19 : vector<1x8xf32> to vector<32x8xf32>
    %21 = arith.addf %18, %20 : vector<32x8xf32>
    %cst_15 = arith.constant 0.000000e+00 : f32
    %22 = vector.broadcast %cst_15 : f32 to vector<32x8xf32>
    %23 = arith.maximumf %21, %22 : vector<32x8xf32>
    %c0_16 = arith.constant 0 : index
    %c0_17 = arith.constant 0 : index
    %24 = vector.load %arg7[%c0_16, %c0_17] : memref<8x16xf32, #tpu.memory_space<vmem>>, vector<8x16xf32>
    %cst_18 = arith.constant dense<0.000000e+00> : vector<32x16xf32>
    %25 = tpu.matmul %23, %24, %cst_18 {dimension_numbers = #tpu.dot_dimension_numbers<[1], [0], [0], [1], [0, 0, 1, 1], [], []>} : vector<32x8xf32>, vector<8x16xf32>, vector<32x16xf32> -> vector<32x16xf32>
    %c0_19 = arith.constant 0 : index
    %c0_20 = arith.constant 0 : index
    %26 = vector.load %arg8[%c0_19, %c0_20] : memref<1x16xf32, #tpu.memory_space<vmem>>, vector<1x16xf32>
    %27 = vector.broadcast %26 : vector<1x16xf32> to vector<32x16xf32>
    %28 = arith.addf %25, %27 : vector<32x16xf32>
    %cst_21 = arith.constant 0.000000e+00 : f32
    %29 = vector.broadcast %cst_21 : f32 to vector<32x16xf32>
    %30 = arith.maximumf %28, %29 : vector<32x16xf32>
    %c0_22 = arith.constant 0 : index
    %c0_23 = arith.constant 0 : index
    %31 = vector.load %arg9[%c0_22, %c0_23] : memref<16x16xf32, #tpu.memory_space<vmem>>, vector<16x16xf32>
    %cst_24 = arith.constant dense<0.000000e+00> : vector<32x16xf32>
    %32 = tpu.matmul %30, %31, %cst_24 {dimension_numbers = #tpu.dot_dimension_numbers<[1], [0], [0], [1], [0, 0, 1, 1], [], []>} : vector<32x16xf32>, vector<16x16xf32>, vector<32x16xf32> -> vector<32x16xf32>
    %c0_25 = arith.constant 0 : index
    %c0_26 = arith.constant 0 : index
    %33 = vector.load %arg10[%c0_25, %c0_26] : memref<1x16xf32, #tpu.memory_space<vmem>>, vector<1x16xf32>
    %34 = vector.broadcast %33 : vector<1x16xf32> to vector<32x16xf32>
    %35 = arith.addf %32, %34 : vector<32x16xf32>
    %cst_27 = arith.constant 0.000000e+00 : f32
    %36 = vector.broadcast %cst_27 : f32 to vector<32x16xf32>
    %37 = arith.maximumf %35, %36 : vector<32x16xf32>
    %c0_28 = arith.constant 0 : index
    %c0_29 = arith.constant 0 : index
    %38 = vector.load %arg11[%c0_28, %c0_29] : memref<16x8xf32, #tpu.memory_space<vmem>>, vector<16x8xf32>
    %cst_30 = arith.constant dense<0.000000e+00> : vector<32x8xf32>
    %39 = tpu.matmul %37, %38, %cst_30 {dimension_numbers = #tpu.dot_dimension_numbers<[1], [0], [0], [1], [0, 0, 1, 1], [], []>} : vector<32x16xf32>, vector<16x8xf32>, vector<32x8xf32> -> vector<32x8xf32>
    %c0_31 = arith.constant 0 : index
    %c0_32 = arith.constant 0 : index
    %40 = vector.load %arg12[%c0_31, %c0_32] : memref<1x8xf32, #tpu.memory_space<vmem>>, vector<1x8xf32>
    %41 = vector.broadcast %40 : vector<1x8xf32> to vector<32x8xf32>
    %42 = arith.addf %39, %41 : vector<32x8xf32>
    %c0_33 = arith.constant 0 : index
    %c0_34 = arith.constant 0 : index
    %43 = vector.load %arg13[%c0_33, %c0_34] : memref<4x16xf32, #tpu.memory_space<vmem>>, vector<4x16xf32>
    %cst_35 = arith.constant dense<0.000000e+00> : vector<32x16xf32>
    %44 = tpu.matmul %3, %43, %cst_35 {dimension_numbers = #tpu.dot_dimension_numbers<[1], [0], [0], [1], [0, 0, 1, 1], [], []>} : vector<32x4xf32>, vector<4x16xf32>, vector<32x16xf32> -> vector<32x16xf32>
    %c0_36 = arith.constant 0 : index
    %c0_37 = arith.constant 0 : index
    %45 = vector.load %arg14[%c0_36, %c0_37] : memref<8x16xf32, #tpu.memory_space<vmem>>, vector<8x16xf32>
    %cst_38 = arith.constant dense<0.000000e+00> : vector<32x16xf32>
    %46 = tpu.matmul %42, %45, %cst_38 {dimension_numbers = #tpu.dot_dimension_numbers<[1], [0], [0], [1], [0, 0, 1, 1], [], []>} : vector<32x8xf32>, vector<8x16xf32>, vector<32x16xf32> -> vector<32x16xf32>
    %47 = arith.addf %44, %46 : vector<32x16xf32>
    %c0_39 = arith.constant 0 : index
    %c0_40 = arith.constant 0 : index
    %48 = vector.load %arg15[%c0_39, %c0_40] : memref<32x16xf32, #tpu.memory_space<vmem>>, vector<32x16xf32>
    tpu.vector_store %arg15[%c0_39, %c0_40], %47 {strides = array<i32>} : memref<32x16xf32, #tpu.memory_space<vmem>>, vector<32x16xf32>,
    return
  }
  func.func @transform_0(%arg0: i32) -> (i32, i32) {
    %c0_i32 = arith.constant 0 : i32
    %c0_i32_0 = arith.constant 0 : i32
    %c0_i32_1 = arith.constant 0 : i32
    return %c0_i32, %c0_i32_0 : i32, i32
  }
  func.func @transform_1(%arg0: i32) -> (i32, i32) {
    %c0_i32 = arith.constant 0 : i32
    %c0_i32_0 = arith.constant 0 : i32
    return %arg0, %c0_i32 : i32, i32
  }
  func.func @transform_2(%arg0: i32) -> (i32, i32) {
    %c0_i32 = arith.constant 0 : i32
    %c0_i32_0 = arith.constant 0 : i32
    %c0_i32_1 = arith.constant 0 : i32
    return %c0_i32, %c0_i32_0 : i32, i32
  }
  func.func @transform_3(%arg0: i32) -> (i32, i32) {
    %c0_i32 = arith.constant 0 : i32
    %c0_i32_0 = arith.constant 0 : i32
    %c0_i32_1 = arith.constant 0 : i32
    return %c0_i32, %c0_i32_0 : i32, i32
  }
  func.func @transform_4(%arg0: i32) -> (i32, i32) {
    %c0_i32 = arith.constant 0 : i32
    %c0_i32_0 = arith.constant 0 : i32
    %c0_i32_1 = arith.constant 0 : i32
    return %c0_i32, %c0_i32_0 : i32, i32
  }
  func.func @transform_5(%arg0: i32) -> (i32, i32) {
    %c0_i32 = arith.constant 0 : i32
    %c0_i32_0 = arith.constant 0 : i32
    %c0_i32_1 = arith.constant 0 : i32
    return %c0_i32, %c0_i32_0 : i32, i32
  }
  func.func @transform_6(%arg0: i32) -> (i32, i32) {
    %c0_i32 = arith.constant 0 : i32
    %c0_i32_0 = arith.constant 0 : i32
    %c0_i32_1 = arith.constant 0 : i32
    return %c0_i32, %c0_i32_0 : i32, i32
  }
  func.func @transform_7(%arg0: i32) -> (i32, i32) {
    %c0_i32 = arith.constant 0 : i32
    %c0_i32_0 = arith.constant 0 : i32
    %c0_i32_1 = arith.constant 0 : i32
    return %c0_i32, %c0_i32_0 : i32, i32
  }
  func.func @transform_8(%arg0: i32) -> (i32, i32) {
    %c0_i32 = arith.constant 0 : i32
    %c0_i32_0 = arith.constant 0 : i32
    %c0_i32_1 = arith.constant 0 : i32
    return %c0_i32, %c0_i32_0 : i32, i32
  }
  func.func @transform_9(%arg0: i32) -> (i32, i32) {
    %c0_i32 = arith.constant 0 : i32
    %c0_i32_0 = arith.constant 0 : i32
    %c0_i32_1 = arith.constant 0 : i32
    return %c0_i32, %c0_i32_0 : i32, i32
  }
  func.func @transform_10(%arg0: i32) -> (i32, i32) {
    %c0_i32 = arith.constant 0 : i32
    %c0_i32_0 = arith.constant 0 : i32
    %c0_i32_1 = arith.constant 0 : i32
    return %c0_i32, %c0_i32_0 : i32, i32
  }
  func.func @transform_11(%arg0: i32) -> (i32, i32) {
    %c0_i32 = arith.constant 0 : i32
    %c0_i32_0 = arith.constant 0 : i32
    %c0_i32_1 = arith.constant 0 : i32
    return %c0_i32, %c0_i32_0 : i32, i32
  }
  func.func @transform_12(%arg0: i32) -> (i32, i32) {
    %c0_i32 = arith.constant 0 : i32
    %c0_i32_0 = arith.constant 0 : i32
    %c0_i32_1 = arith.constant 0 : i32
    return %c0_i32, %c0_i32_0 : i32, i32
  }
  func.func @transform_13(%arg0: i32) -> (i32, i32) {
    %c0_i32 = arith.constant 0 : i32
    %c0_i32_0 = arith.constant 0 : i32
    %c0_i32_1 = arith.constant 0 : i32
    return %c0_i32, %c0_i32_0 : i32, i32
  }
  func.func @transform_14(%arg0: i32) -> (i32, i32) {
    %c0_i32 = arith.constant 0 : i32
    %c0_i32_0 = arith.constant 0 : i32
    return %arg0, %c0_i32 : i32, i32
  }
}

module attributes {stable_mosaic.version = 11 : i64} {
  func.func @_rnn_head_kernel(%arg0: i32, %arg1: memref<8x64xf32, #tpu.memory_space<vmem>>, %arg2: memref<16x16xf32, #tpu.memory_space<vmem>>, %arg3: memref<1x16xf32, #tpu.memory_space<vmem>>, %arg4: memref<16x32xf32, #tpu.memory_space<vmem>>, %arg5: memref<1x32xf32, #tpu.memory_space<vmem>>, %arg6: memref<32x32xf32, #tpu.memory_space<vmem>>, %arg7: memref<1x32xf32, #tpu.memory_space<vmem>>, %arg8: memref<32x12xf32, #tpu.memory_space<vmem>>, %arg9: memref<1x12xf32, #tpu.memory_space<vmem>>, %arg10: memref<8x72xf32, #tpu.memory_space<vmem>>) attributes {dimension_semantics = [#tpu.dimension_semantics<parallel>], iteration_bounds = array<i64: 2>, scalar_prefetch = 0 : i64, scratch_operands = 0 : i64, tpu.core_type = #tpu.core_type<tc>, window_params = [{transform_indices = @transform_0, window_bounds = array<i64: 8, 64>}, {pipeline_mode = #tpu.pipeline_mode<synchronous>, transform_indices = @transform_1, window_bounds = array<i64: 16, 16>}, {pipeline_mode = #tpu.pipeline_mode<synchronous>, transform_indices = @transform_2, window_bounds = array<i64: 1, 16>}, {pipeline_mode = #tpu.pipeline_mode<synchronous>, transform_indices = @transform_3, window_bounds = array<i64: 16, 32>}, {pipeline_mode = #tpu.pipeline_mode<synchronous>, transform_indices = @transform_4, window_bounds = array<i64: 1, 32>}, {pipeline_mode = #tpu.pipeline_mode<synchronous>, transform_indices = @transform_5, window_bounds = array<i64: 32, 32>}, {pipeline_mode = #tpu.pipeline_mode<synchronous>, transform_indices = @transform_6, window_bounds = array<i64: 1, 32>}, {pipeline_mode = #tpu.pipeline_mode<synchronous>, transform_indices = @transform_7, window_bounds = array<i64: 32, 12>}, {pipeline_mode = #tpu.pipeline_mode<synchronous>, transform_indices = @transform_8, window_bounds = array<i64: 1, 12>}, {transform_indices = @transform_9, window_bounds = array<i64: 8, 72>}]} {
    %c0 = arith.constant 0 : index
    %c0_0 = arith.constant 0 : index
    %0 = vector.load %arg1[%c0, %c0_0] : memref<8x64xf32, #tpu.memory_space<vmem>>, vector<8x64xf32>
    %c0_1 = arith.constant 0 : index
    %c0_2 = arith.constant 0 : index
    %1 = vector.load %arg2[%c0_1, %c0_2] : memref<16x16xf32, #tpu.memory_space<vmem>>, vector<16x16xf32>
    %c0_3 = arith.constant 0 : index
    %c0_4 = arith.constant 0 : index
    %2 = vector.load %arg3[%c0_3, %c0_4] : memref<1x16xf32, #tpu.memory_space<vmem>>, vector<1x16xf32>
    %3 = vector.extract_strided_slice %0 {offsets = [0, 0], sizes = [8, 16], strides = [1, 1]} : vector<8x64xf32> to vector<8x16xf32>
    %4 = vector.broadcast %2 : vector<1x16xf32> to vector<8x16xf32>
    %5 = arith.addf %3, %4 : vector<8x16xf32>
    %6 = math.tanh %5 : vector<8x16xf32>
    %cst = arith.constant dense<0.000000e+00> : vector<8x16xf32>
    %7 = tpu.matmul %6, %1, %cst {dimension_numbers = #tpu.dot_dimension_numbers<[1], [0], [0], [1], [0, 0, 1, 1], [], []>} : vector<8x16xf32>, vector<16x16xf32>, vector<8x16xf32> -> vector<8x16xf32>
    %8 = vector.broadcast %2 : vector<1x16xf32> to vector<8x16xf32>
    %9 = arith.addf %7, %8 : vector<8x16xf32>
    %10 = vector.extract_strided_slice %0 {offsets = [0, 16], sizes = [8, 16], strides = [1, 1]} : vector<8x64xf32> to vector<8x16xf32>
    %11 = arith.addf %9, %10 : vector<8x16xf32>
    %12 = math.tanh %11 : vector<8x16xf32>
    %cst_5 = arith.constant dense<0.000000e+00> : vector<8x16xf32>
    %13 = tpu.matmul %12, %1, %cst_5 {dimension_numbers = #tpu.dot_dimension_numbers<[1], [0], [0], [1], [0, 0, 1, 1], [], []>} : vector<8x16xf32>, vector<16x16xf32>, vector<8x16xf32> -> vector<8x16xf32>
    %14 = vector.broadcast %2 : vector<1x16xf32> to vector<8x16xf32>
    %15 = arith.addf %13, %14 : vector<8x16xf32>
    %16 = vector.extract_strided_slice %0 {offsets = [0, 32], sizes = [8, 16], strides = [1, 1]} : vector<8x64xf32> to vector<8x16xf32>
    %17 = arith.addf %15, %16 : vector<8x16xf32>
    %18 = math.tanh %17 : vector<8x16xf32>
    %cst_6 = arith.constant dense<0.000000e+00> : vector<8x16xf32>
    %19 = tpu.matmul %18, %1, %cst_6 {dimension_numbers = #tpu.dot_dimension_numbers<[1], [0], [0], [1], [0, 0, 1, 1], [], []>} : vector<8x16xf32>, vector<16x16xf32>, vector<8x16xf32> -> vector<8x16xf32>
    %20 = vector.broadcast %2 : vector<1x16xf32> to vector<8x16xf32>
    %21 = arith.addf %19, %20 : vector<8x16xf32>
    %22 = vector.extract_strided_slice %0 {offsets = [0, 48], sizes = [8, 16], strides = [1, 1]} : vector<8x64xf32> to vector<8x16xf32>
    %23 = arith.addf %21, %22 : vector<8x16xf32>
    %24 = math.tanh %23 : vector<8x16xf32>
    %cst_7 = arith.constant dense<0.000000e+00> : vector<8x16xf32>
    %25 = tpu.matmul %24, %1, %cst_7 {dimension_numbers = #tpu.dot_dimension_numbers<[1], [0], [0], [1], [0, 0, 1, 1], [], []>} : vector<8x16xf32>, vector<16x16xf32>, vector<8x16xf32> -> vector<8x16xf32>
    %26 = vector.broadcast %2 : vector<1x16xf32> to vector<8x16xf32>
    %27 = arith.addf %25, %26 : vector<8x16xf32>
    %28 = math.tanh %27 : vector<8x16xf32>
    %cst_8 = arith.constant dense<0.000000e+00> : vector<8x16xf32>
    %29 = tpu.matmul %28, %1, %cst_8 {dimension_numbers = #tpu.dot_dimension_numbers<[1], [0], [0], [1], [0, 0, 1, 1], [], []>} : vector<8x16xf32>, vector<16x16xf32>, vector<8x16xf32> -> vector<8x16xf32>
    %30 = vector.broadcast %2 : vector<1x16xf32> to vector<8x16xf32>
    %31 = arith.addf %29, %30 : vector<8x16xf32>
    %32 = math.tanh %31 : vector<8x16xf32>
    %33 = tpu.concatenate %6, %12, %18, %24, %28, %32 in 0 : vector<8x16xf32>, vector<8x16xf32>, vector<8x16xf32>, vector<8x16xf32>, vector<8x16xf32>, vector<8x16xf32> -> vector<48x16xf32>
    %c0_9 = arith.constant 0 : index
    %c0_10 = arith.constant 0 : index
    %34 = vector.load %arg4[%c0_9, %c0_10] : memref<16x32xf32, #tpu.memory_space<vmem>>, vector<16x32xf32>
    %cst_11 = arith.constant dense<0.000000e+00> : vector<48x32xf32>
    %35 = tpu.matmul %33, %34, %cst_11 {dimension_numbers = #tpu.dot_dimension_numbers<[1], [0], [0], [1], [0, 0, 1, 1], [], []>} : vector<48x16xf32>, vector<16x32xf32>, vector<48x32xf32> -> vector<48x32xf32>
    %c0_12 = arith.constant 0 : index
    %c0_13 = arith.constant 0 : index
    %36 = vector.load %arg5[%c0_12, %c0_13] : memref<1x32xf32, #tpu.memory_space<vmem>>, vector<1x32xf32>
    %37 = vector.broadcast %36 : vector<1x32xf32> to vector<48x32xf32>
    %38 = arith.addf %35, %37 : vector<48x32xf32>
    %cst_14 = arith.constant 0.000000e+00 : f32
    %39 = vector.broadcast %cst_14 : f32 to vector<48x32xf32>
    %40 = arith.maximumf %38, %39 : vector<48x32xf32>
    %c0_15 = arith.constant 0 : index
    %c0_16 = arith.constant 0 : index
    %41 = vector.load %arg6[%c0_15, %c0_16] : memref<32x32xf32, #tpu.memory_space<vmem>>, vector<32x32xf32>
    %cst_17 = arith.constant dense<0.000000e+00> : vector<48x32xf32>
    %42 = tpu.matmul %40, %41, %cst_17 {dimension_numbers = #tpu.dot_dimension_numbers<[1], [0], [0], [1], [0, 0, 1, 1], [], []>} : vector<48x32xf32>, vector<32x32xf32>, vector<48x32xf32> -> vector<48x32xf32>
    %c0_18 = arith.constant 0 : index
    %c0_19 = arith.constant 0 : index
    %43 = vector.load %arg7[%c0_18, %c0_19] : memref<1x32xf32, #tpu.memory_space<vmem>>, vector<1x32xf32>
    %44 = vector.broadcast %43 : vector<1x32xf32> to vector<48x32xf32>
    %45 = arith.addf %42, %44 : vector<48x32xf32>
    %cst_20 = arith.constant 0.000000e+00 : f32
    %46 = vector.broadcast %cst_20 : f32 to vector<48x32xf32>
    %47 = arith.maximumf %45, %46 : vector<48x32xf32>
    %c0_21 = arith.constant 0 : index
    %c0_22 = arith.constant 0 : index
    %48 = vector.load %arg8[%c0_21, %c0_22] : memref<32x12xf32, #tpu.memory_space<vmem>>, vector<32x12xf32>
    %cst_23 = arith.constant dense<0.000000e+00> : vector<48x12xf32>
    %49 = tpu.matmul %47, %48, %cst_23 {dimension_numbers = #tpu.dot_dimension_numbers<[1], [0], [0], [1], [0, 0, 1, 1], [], []>} : vector<48x32xf32>, vector<32x12xf32>, vector<48x12xf32> -> vector<48x12xf32>
    %c0_24 = arith.constant 0 : index
    %c0_25 = arith.constant 0 : index
    %50 = vector.load %arg9[%c0_24, %c0_25] : memref<1x12xf32, #tpu.memory_space<vmem>>, vector<1x12xf32>
    %51 = vector.broadcast %50 : vector<1x12xf32> to vector<48x12xf32>
    %52 = arith.addf %49, %51 : vector<48x12xf32>
    %53 = vector.extract_strided_slice %52 {offsets = [0, 0], sizes = [8, 12], strides = [1, 1]} : vector<48x12xf32> to vector<8x12xf32>
    %54 = vector.extract_strided_slice %52 {offsets = [8, 0], sizes = [8, 12], strides = [1, 1]} : vector<48x12xf32> to vector<8x12xf32>
    %55 = vector.extract_strided_slice %52 {offsets = [16, 0], sizes = [8, 12], strides = [1, 1]} : vector<48x12xf32> to vector<8x12xf32>
    %56 = vector.extract_strided_slice %52 {offsets = [24, 0], sizes = [8, 12], strides = [1, 1]} : vector<48x12xf32> to vector<8x12xf32>
    %57 = vector.extract_strided_slice %52 {offsets = [32, 0], sizes = [8, 12], strides = [1, 1]} : vector<48x12xf32> to vector<8x12xf32>
    %58 = vector.extract_strided_slice %52 {offsets = [40, 0], sizes = [8, 12], strides = [1, 1]} : vector<48x12xf32> to vector<8x12xf32>
    %59 = tpu.concatenate %53, %54, %55, %56, %57, %58 in 1 : vector<8x12xf32>, vector<8x12xf32>, vector<8x12xf32>, vector<8x12xf32>, vector<8x12xf32>, vector<8x12xf32> -> vector<8x72xf32>
    %c0_26 = arith.constant 0 : index
    %c0_27 = arith.constant 0 : index
    %60 = vector.load %arg10[%c0_26, %c0_27] : memref<8x72xf32, #tpu.memory_space<vmem>>, vector<8x72xf32>
    tpu.vector_store %arg10[%c0_26, %c0_27], %59 {strides = array<i32>} : memref<8x72xf32, #tpu.memory_space<vmem>>, vector<8x72xf32>,
    return
  }
  func.func @transform_0(%arg0: i32) -> (i32, i32) {
    %c0_i32 = arith.constant 0 : i32
    %c0_i32_0 = arith.constant 0 : i32
    return %arg0, %c0_i32 : i32, i32
  }
  func.func @transform_1(%arg0: i32) -> (i32, i32) {
    %c0_i32 = arith.constant 0 : i32
    %c0_i32_0 = arith.constant 0 : i32
    %c0_i32_1 = arith.constant 0 : i32
    return %c0_i32, %c0_i32_0 : i32, i32
  }
  func.func @transform_2(%arg0: i32) -> (i32, i32) {
    %c0_i32 = arith.constant 0 : i32
    %c0_i32_0 = arith.constant 0 : i32
    %c0_i32_1 = arith.constant 0 : i32
    return %c0_i32, %c0_i32_0 : i32, i32
  }
  func.func @transform_3(%arg0: i32) -> (i32, i32) {
    %c0_i32 = arith.constant 0 : i32
    %c0_i32_0 = arith.constant 0 : i32
    %c0_i32_1 = arith.constant 0 : i32
    return %c0_i32, %c0_i32_0 : i32, i32
  }
  func.func @transform_4(%arg0: i32) -> (i32, i32) {
    %c0_i32 = arith.constant 0 : i32
    %c0_i32_0 = arith.constant 0 : i32
    %c0_i32_1 = arith.constant 0 : i32
    return %c0_i32, %c0_i32_0 : i32, i32
  }
  func.func @transform_5(%arg0: i32) -> (i32, i32) {
    %c0_i32 = arith.constant 0 : i32
    %c0_i32_0 = arith.constant 0 : i32
    %c0_i32_1 = arith.constant 0 : i32
    return %c0_i32, %c0_i32_0 : i32, i32
  }
  func.func @transform_6(%arg0: i32) -> (i32, i32) {
    %c0_i32 = arith.constant 0 : i32
    %c0_i32_0 = arith.constant 0 : i32
    %c0_i32_1 = arith.constant 0 : i32
    return %c0_i32, %c0_i32_0 : i32, i32
  }
  func.func @transform_7(%arg0: i32) -> (i32, i32) {
    %c0_i32 = arith.constant 0 : i32
    %c0_i32_0 = arith.constant 0 : i32
    %c0_i32_1 = arith.constant 0 : i32
    return %c0_i32, %c0_i32_0 : i32, i32
  }
  func.func @transform_8(%arg0: i32) -> (i32, i32) {
    %c0_i32 = arith.constant 0 : i32
    %c0_i32_0 = arith.constant 0 : i32
    %c0_i32_1 = arith.constant 0 : i32
    return %c0_i32, %c0_i32_0 : i32, i32
  }
  func.func @transform_9(%arg0: i32) -> (i32, i32) {
    %c0_i32 = arith.constant 0 : i32
    %c0_i32_0 = arith.constant 0 : i32
    return %arg0, %c0_i32 : i32, i32
  }
}

</mosaic_0001>

<llo_original>
// kernel: gcnn_rnn_forward.3
$region0: #{gcnn_rnn_forward.3}
  #allocation0 [shape = 'u32[]', space=smem, size = 0x4, offset = 0x4, fixed_abs, tag = 'smem constant byte address 0x4 - core index']
  #allocation1 [shape = 'u32[144,128]{1,0:T(1,128)}', space=vmem, size = 0x12000, scoped, tag = 'internal scratch']
  %s0 = inlined_call_operand.vmem [shape: f32[16,64], index: 0, kind: input, shape index: {}]
  %s1 = inlined_call_operand.vmem [shape: f32[16,16], index: 1, kind: input, shape index: {}]
  %s2 = inlined_call_operand.vmem [shape: f32[1,16], index: 2, kind: input, shape index: {}]
  %s3 = inlined_call_operand.vmem [shape: f32[16,32], index: 3, kind: input, shape index: {}]
  %s4 = inlined_call_operand.vmem [shape: f32[1,32], index: 4, kind: input, shape index: {}]
  %s5 = inlined_call_operand.vmem [shape: f32[32,32], index: 5, kind: input, shape index: {}]
  %s6 = inlined_call_operand.vmem [shape: f32[1,32], index: 6, kind: input, shape index: {}]
  %s7 = inlined_call_operand.vmem [shape: f32[32,12], index: 7, kind: input, shape index: {}]
  %s8 = inlined_call_operand.vmem [shape: f32[1,12], index: 8, kind: input, shape index: {}]
  %s9 = inlined_call_operand.vmem [shape: f32[16,72], index: 9, kind: output, shape index: {}]
  %s10 = sld [smem:[#allocation0]]
  $region69: #{gcnn_rnn_forward.3} parent=0
    _
  %s12 = ssub.s32 1, %s10
  %s13 = scalar_select 0, %s12, %s10
  loop: start=0, step=1, limit=4
  $region2: #{gcnn_rnn_forward.3} parent=0 // loop_pre_header
    _
  $region3: #{gcnn_rnn_forward.3} parent=0 // loop_header
    %s15 = sphi 0, %s19
    %p16 = scmp.ge.s32.totalorder %s15, 4
    %s25 = sphi 0, %s27
    %s28 = sphi 0, %s25
    %s29 = sphi 0, %s28
    %s45 = sphi 0, %s29
    %s49 = sphi 0, %s49
    %s51 = sphi 0, %s49
    %s52 = sphi 0, %s51
    %s66 = sphi 0, %s52
    %s70 = sphi 0, %s70
    %s72 = sphi 0, %s70
    %s73 = sphi 0, %s72
    %s87 = sphi 0, %s73
    %s91 = sphi 0, %s91
    %s93 = sphi 0, %s91
    %s94 = sphi 0, %s93
    %s108 = sphi 0, %s94
    %s112 = sphi 0, %s112
    %s114 = sphi 0, %s112
    %s115 = sphi 0, %s114
    %s129 = sphi 0, %s115
    %s133 = sphi 0, %s133
    %s135 = sphi 0, %s133
    %s136 = sphi 0, %s135
    %s150 = sphi 0, %s136
    %s154 = sphi 0, %s154
    %s156 = sphi 0, %s154
    %s157 = sphi 0, %s156
    %s171 = sphi 0, %s157
    %s175 = sphi 0, %s175
    %s177 = sphi 0, %s175
    %s178 = sphi 0, %s177
    %s192 = sphi 0, %s178
    %s196 = sphi 0, %s196
    %s198 = sphi 0, %s196
    %s199 = sphi 0, %s198
    %s213 = sphi 0, %s199
    %s219 = sphi 0, %s221
    %s222 = sphi 0, %s219
    %s223 = sphi 0, %s222
    %s239 = sphi 0, %s223
  $region4: #{gcnn_rnn_forward.3} parent=0 // loop_header_branch
    %18 = sbr.rel (%p16) target = $region8
  $region5: #{gcnn_rnn_forward.3} parent=0 // loop_body
    %s20 = ssub.s32 %s15, 1
    %s21 = ssub.s32 %s15, 2
    %s22 = sadd.s32 %s15, 1
    %s23 = ssub.s32 %s15, %s22
    %p24 = scmp.eq.s32.totalorder %s23, 0
    %s26 = sadd.s32 %s25, 1
    %s27 = scalar_select %p24, %s25, %s26
    %p30 = pneg %p24
    %p31 = scmp.eq.s32.totalorder %s15, 1
    %p32 = por %p30, %p31
    %p33 = scmp.ne.s32.totalorder %s25, %s28
    %p34 = scmp.eq.s32.totalorder %s15, 0
    %p35 = por %p33, %p34
    %p36 = scmp.ne.s32.totalorder %s25, %s28
    %p37 = scmp.eq.s32.totalorder %s20, 1
    %p38 = por %p36, %p37
    %p39 = scmp.ne.s32.totalorder %s28, %s29
    %p40 = scmp.eq.s32.totalorder %s20, 0
    %p41 = por %p39, %p40
    %p42 = scmp.ne.s32.totalorder %s28, %s29
    %p43 = scmp.eq.s32.totalorder %s21, 1
    %p44 = por %p42, %p43
    %p46 = scmp.ne.s32.totalorder %s29, %s45
    %p47 = scmp.eq.s32.totalorder %s21, 0
    %p48 = por %p46, %p47
    %s50 = sadd.s32 %s49, 1
    %p53 = scmp.eq.s32.totalorder %s15, 1
    %p54 = scmp.ne.s32.totalorder %s49, %s51
    %p55 = scmp.eq.s32.totalorder %s15, 0
    %p56 = por %p54, %p55
    %p57 = scmp.ne.s32.totalorder %s49, %s51
    %p58 = scmp.eq.s32.totalorder %s20, 1
    %p59 = por %p57, %p58
    %p60 = scmp.ne.s32.totalorder %s51, %s52
    %p61 = scmp.eq.s32.totalorder %s20, 0
    %p62 = por %p60, %p61
    %p63 = scmp.ne.s32.totalorder %s51, %s52
    %p64 = scmp.eq.s32.totalorder %s21, 1
    %p65 = por %p63, %p64
    %p67 = scmp.ne.s32.totalorder %s52, %s66
    %p68 = scmp.eq.s32.totalorder %s21, 0
    %p69 = por %p67, %p68
    %s71 = sadd.s32 %s70, 1
    %p74 = scmp.eq.s32.totalorder %s15, 1
    %p75 = scmp.ne.s32.totalorder %s70, %s72
    %p76 = scmp.eq.s32.totalorder %s15, 0
    %p77 = por %p75, %p76
    %p78 = scmp.ne.s32.totalorder %s70, %s72
    %p79 = scmp.eq.s32.totalorder %s20, 1
    %p80 = por %p78, %p79
    %p81 = scmp.ne.s32.totalorder %s72, %s73
    %p82 = scmp.eq.s32.totalorder %s20, 0
    %p83 = por %p81, %p82
    %p84 = scmp.ne.s32.totalorder %s72, %s73
    %p85 = scmp.eq.s32.totalorder %s21, 1
    %p86 = por %p84, %p85
    %p88 = scmp.ne.s32.totalorder %s73, %s87
    %p89 = scmp.eq.s32.totalorder %s21, 0
    %p90 = por %p88, %p89
    %s92 = sadd.s32 %s91, 1
    %p95 = scmp.eq.s32.totalorder %s15, 1
    %p96 = scmp.ne.s32.totalorder %s91, %s93
    %p97 = scmp.eq.s32.totalorder %s15, 0
    %p98 = por %p96, %p97
    %p99 = scmp.ne.s32.totalorder %s91, %s93
    %p100 = scmp.eq.s32.totalorder %s20, 1
    %p101 = por %p99, %p100
    %p102 = scmp.ne.s32.totalorder %s93, %s94
    %p103 = scmp.eq.s32.totalorder %s20, 0
    %p104 = por %p102, %p103
    %p105 = scmp.ne.s32.totalorder %s93, %s94
    %p106 = scmp.eq.s32.totalorder %s21, 1
    %p107 = por %p105, %p106
    %p109 = scmp.ne.s32.totalorder %s94, %s108
    %p110 = scmp.eq.s32.totalorder %s21, 0
    %p111 = por %p109, %p110
    %s113 = sadd.s32 %s112, 1
    %p116 = scmp.eq.s32.totalorder %s15, 1
    %p117 = scmp.ne.s32.totalorder %s112, %s114
    %p118 = scmp.eq.s32.totalorder %s15, 0
    %p119 = por %p117, %p118
    %p120 = scmp.ne.s32.totalorder %s112, %s114
    %p121 = scmp.eq.s32.totalorder %s20, 1
    %p122 = por %p120, %p121
    %p123 = scmp.ne.s32.totalorder %s114, %s115
    %p124 = scmp.eq.s32.totalorder %s20, 0
    %p125 = por %p123, %p124
    %p126 = scmp.ne.s32.totalorder %s114, %s115
    %p127 = scmp.eq.s32.totalorder %s21, 1
    %p128 = por %p126, %p127
    %p130 = scmp.ne.s32.totalorder %s115, %s129
    %p131 = scmp.eq.s32.totalorder %s21, 0
    %p132 = por %p130, %p131
    %s134 = sadd.s32 %s133, 1
    %p137 = scmp.eq.s32.totalorder %s15, 1
    %p138 = scmp.ne.s32.totalorder %s133, %s135
    %p139 = scmp.eq.s32.totalorder %s15, 0
    %p140 = por %p138, %p139
    %p141 = scmp.ne.s32.totalorder %s133, %s135
    %p142 = scmp.eq.s32.totalorder %s20, 1
    %p143 = por %p141, %p142
    %p144 = scmp.ne.s32.totalorder %s135, %s136
    %p145 = scmp.eq.s32.totalorder %s20, 0
    %p146 = por %p144, %p145
    %p147 = scmp.ne.s32.totalorder %s135, %s136
    %p148 = scmp.eq.s32.totalorder %s21, 1
    %p149 = por %p147, %p148
    %p151 = scmp.ne.s32.totalorder %s136, %s150
    %p152 = scmp.eq.s32.totalorder %s21, 0
    %p153 = por %p151, %p152
    %s155 = sadd.s32 %s154, 1
    %p158 = scmp.eq.s32.totalorder %s15, 1
    %p159 = scmp.ne.s32.totalorder %s154, %s156
    %p160 = scmp.eq.s32.totalorder %s15, 0
    %p161 = por %p159, %p160
    %p162 = scmp.ne.s32.totalorder %s154, %s156
    %p163 = scmp.eq.s32.totalorder %s20, 1
    %p164 = por %p162, %p163
    %p165 = scmp.ne.s32.totalorder %s156, %s157
    %p166 = scmp.eq.s32.totalorder %s20, 0
    %p167 = por %p165, %p166
    %p168 = scmp.ne.s32.totalorder %s156, %s157
    %p169 = scmp.eq.s32.totalorder %s21, 1
    %p170 = por %p168, %p169
    %p172 = scmp.ne.s32.totalorder %s157, %s171
    %p173 = scmp.eq.s32.totalorder %s21, 0
    %p174 = por %p172, %p173
    %s176 = sadd.s32 %s175, 1
    %p179 = scmp.eq.s32.totalorder %s15, 1
    %p180 = scmp.ne.s32.totalorder %s175, %s177
    %p181 = scmp.eq.s32.totalorder %s15, 0
    %p182 = por %p180, %p181
    %p183 = scmp.ne.s32.totalorder %s175, %s177
    %p184 = scmp.eq.s32.totalorder %s20, 1
    %p185 = por %p183, %p184
    %p186 = scmp.ne.s32.totalorder %s177, %s178
    %p187 = scmp.eq.s32.totalorder %s20, 0
    %p188 = por %p186, %p187
    %p189 = scmp.ne.s32.totalorder %s177, %s178
    %p190 = scmp.eq.s32.totalorder %s21, 1
    %p191 = por %p189, %p190
    %p193 = scmp.ne.s32.totalorder %s178, %s192
    %p194 = scmp.eq.s32.totalorder %s21, 0
    %p195 = por %p193, %p194
    %s197 = sadd.s32 %s196, 1
    %p200 = scmp.eq.s32.totalorder %s15, 1
    %p201 = scmp.ne.s32.totalorder %s196, %s198
    %p202 = scmp.eq.s32.totalorder %s15, 0
    %p203 = por %p201, %p202
    %p204 = scmp.ne.s32.totalorder %s196, %s198
    %p205 = scmp.eq.s32.totalorder %s20, 1
    %p206 = por %p204, %p205
    %p207 = scmp.ne.s32.totalorder %s198, %s199
    %p208 = scmp.eq.s32.totalorder %s20, 0
    %p209 = por %p207, %p208
    %p210 = scmp.ne.s32.totalorder %s198, %s199
    %p211 = scmp.eq.s32.totalorder %s21, 1
    %p212 = por %p210, %p211
    %p214 = scmp.ne.s32.totalorder %s199, %s213
    %p215 = scmp.eq.s32.totalorder %s21, 0
    %p216 = por %p214, %p215
    %s217 = ssub.s32 %s15, %s22
    %p218 = scmp.eq.s32.totalorder %s217, 0
    %s220 = sadd.s32 %s219, 1
    %s221 = scalar_select %p218, %s219, %s220
    %p224 = pneg %p218
    %p225 = scmp.eq.s32.totalorder %s15, 1
    %p226 = por %p224, %p225
    %p227 = scmp.ne.s32.totalorder %s219, %s222
    %p228 = scmp.eq.s32.totalorder %s15, 0
    %p229 = por %p227, %p228
    %p230 = scmp.ne.s32.totalorder %s219, %s222
    %p231 = scmp.eq.s32.totalorder %s20, 1
    %p232 = por %p230, %p231
    %p233 = scmp.ne.s32.totalorder %s222, %s223
    %p234 = scmp.eq.s32.totalorder %s20, 0
    %p235 = por %p233, %p234
    %p236 = scmp.ne.s32.totalorder %s222, %s223
    %p237 = scmp.eq.s32.totalorder %s21, 1
    %p238 = por %p236, %p237
    %p240 = scmp.ne.s32.totalorder %s223, %s239
    %p241 = scmp.eq.s32.totalorder %s21, 0
    %p242 = por %p240, %p241
    %p243 = scmp.le.s32.totalorder 1, %s15
    %p244 = scmp.lt.s32.totalorder %s15, 3
    %p245 = pnand %p243, %p244
    %p246 = pneg %p245
    // Predicated region
    $region9: #{gcnn_rnn_forward.3} parent=5 // pred_check
      _
    $region10: #{gcnn_rnn_forward.3} parent=5 // pred_check_branch
      %248 = sbr.rel (%p245) target = $region12
    $region11: #{gcnn_rnn_forward.3} parent=5 // pred_region
      %s249 = ssub.s32 %s15, 1
      // Predicated region
      $region13: #{gcnn_rnn_forward.3} parent=11 // pred_check
        %p250 = pneg %p62
      $region14: #{gcnn_rnn_forward.3} parent=11 // pred_check_branch
        %252 = sbr.rel (%p250) target = $region16
      $region15: #{gcnn_rnn_forward.3} parent=11 // pred_region
        _
      $region16: #{gcnn_rnn_forward.3} parent=11 // pred_fallthru
        _
      // Predicated region
      $region17: #{gcnn_rnn_forward.3} parent=11 // pred_check
        %p253 = pneg %p83
      $region18: #{gcnn_rnn_forward.3} parent=11 // pred_check_branch
        %255 = sbr.rel (%p253) target = $region20
      $region19: #{gcnn_rnn_forward.3} parent=11 // pred_region
        _
      $region20: #{gcnn_rnn_forward.3} parent=11 // pred_fallthru
        _
      // Predicated region
      $region21: #{gcnn_rnn_forward.3} parent=11 // pred_check
        %p256 = pneg %p104
      $region22: #{gcnn_rnn_forward.3} parent=11 // pred_check_branch
        %258 = sbr.rel (%p256) target = $region24
      $region23: #{gcnn_rnn_forward.3} parent=11 // pred_region
        _
      $region24: #{gcnn_rnn_forward.3} parent=11 // pred_fallthru
        _
      // Predicated region
      $region25: #{gcnn_rnn_forward.3} parent=11 // pred_check
        %p259 = pneg %p125
      $region26: #{gcnn_rnn_forward.3} parent=11 // pred_check_branch
        %261 = sbr.rel (%p259) target = $region28
      $region27: #{gcnn_rnn_forward.3} parent=11 // pred_region
        _
      $region28: #{gcnn_rnn_forward.3} parent=11 // pred_fallthru
        _
      // Predicated region
      $region29: #{gcnn_rnn_forward.3} parent=11 // pred_check
        %p262 = pneg %p146
      $region30: #{gcnn_rnn_forward.3} parent=11 // pred_check_branch
        %264 = sbr.rel (%p262) target = $region32
      $region31: #{gcnn_rnn_forward.3} parent=11 // pred_region
        _
      $region32: #{gcnn_rnn_forward.3} parent=11 // pred_fallthru
        _
      // Predicated region
      $region33: #{gcnn_rnn_forward.3} parent=11 // pred_check
        %p265 = pneg %p167
      $region34: #{gcnn_rnn_forward.3} parent=11 // pred_check_branch
        %267 = sbr.rel (%p265) target = $region36
      $region35: #{gcnn_rnn_forward.3} parent=11 // pred_region
        _
      $region36: #{gcnn_rnn_forward.3} parent=11 // pred_fallthru
        _
      // Predicated region
      $region37: #{gcnn_rnn_forward.3} parent=11 // pred_check
        %p268 = pneg %p188
      $region38: #{gcnn_rnn_forward.3} parent=11 // pred_check_branch
        %270 = sbr.rel (%p268) target = $region40
      $region39: #{gcnn_rnn_forward.3} parent=11 // pred_region
        _
      $region40: #{gcnn_rnn_forward.3} parent=11 // pred_fallthru
        _
      // Predicated region
      $region41: #{gcnn_rnn_forward.3} parent=11 // pred_check
        %p271 = pneg %p209
      $region42: #{gcnn_rnn_forward.3} parent=11 // pred_check_branch
        %273 = sbr.rel (%p271) target = $region44
      $region43: #{gcnn_rnn_forward.3} parent=11 // pred_region
        _
      $region44: #{gcnn_rnn_forward.3} parent=11 // pred_fallthru
        _
    $region12: #{gcnn_rnn_forward.3} parent=5 // pred_fallthru
      _
    %p274 = scmp.lt.s32.totalorder %s15, 2
    // Predicated region
    $region45: #{gcnn_rnn_forward.3} parent=5 // pred_check
      %p275 = pneg %p274
    $region46: #{gcnn_rnn_forward.3} parent=5 // pred_check_branch
      %277 = sbr.rel (%p275) target = $region48
    $region47: #{gcnn_rnn_forward.3} parent=5 // pred_region
      // Predicated region
      $region49: #{gcnn_rnn_forward.3} parent=47 // pred_check
        %p278 = pneg %p35
      $region50: #{gcnn_rnn_forward.3} parent=47 // pred_check_branch
        %280 = sbr.rel (%p278) target = $region52
      $region51: #{gcnn_rnn_forward.3} parent=47 // pred_region
        %p281 = scmp.lt.s32.totalorder %s15, 1
        %s282 = scalar_select %p281, %s15, 1
        %s283 = smul.addr %s282, 8
        %s284 = scalar_lea.vmem %s0, %s283
      $region52: #{gcnn_rnn_forward.3} parent=47 // pred_fallthru
        _
    $region48: #{gcnn_rnn_forward.3} parent=5 // pred_fallthru
      _
    %p285 = scmp.le.s32.totalorder 1, %s15
    %p286 = scmp.lt.s32.totalorder %s15, 3
    %p287 = pnand %p285, %p286
    %p288 = pneg %p287
    // Predicated region
    $region53: #{gcnn_rnn_forward.3} parent=5 // pred_check
      _
    $region54: #{gcnn_rnn_forward.3} parent=5 // pred_check_branch
      %290 = sbr.rel (%p287) target = $region56
    $region55: #{gcnn_rnn_forward.3} parent=5 // pred_region
      %s291 = ssub.s32 %s15, 1
      %p292 = scmp.lt.s32.totalorder %s20, 1
      %s293 = scalar_select %p292, %s20, 1
      %s294 = smul.addr %s293, 8
      %s295 = scalar_lea.vmem %s0, %s294
      %p296 = pneg %p41
      %p297 = pneg %p38
      %p298 = pneg %p62
      %p299 = pneg %p59
      %p300 = pneg %p83
      %p301 = pneg %p80
      %p302 = pneg %p104
      %p303 = pneg %p101
      %p304 = pneg %p125
      %p305 = pneg %p122
      %p306 = pneg %p146
      %p307 = pneg %p143
      %p308 = pneg %p167
      %p309 = pneg %p164
      %p310 = pneg %p188
      %p311 = pneg %p185
      %p312 = pneg %p209
      %p313 = pneg %p206
      %p314 = pneg %p235
      %p315 = pneg %p232
      %p316 = scmp.lt.s32.totalorder %s20, 1
      %s317 = scalar_select %p316, %s20, 1
      %s318 = smul.addr %s317, 8
      %s319 = scalar_lea.vmem %s9, %s318
      %p320 = scmp.lt.s32.totalorder %s20, 1
      %s321 = scalar_select %p320, %s20, 1
      %s322 = smul.addr %s321, 8
      %s323 = scalar_lea.vmem %s0, %s322
      %p324 = scmp.lt.s32.totalorder %s20, 1
      %s325 = scalar_select %p324, %s20, 1
      %s326 = smul.addr %s325, 8
      %s327 = scalar_lea.vmem %s9, %s326
      %v328 = vld [vmem:[%s323] sm:$0xff]
      %v329 = vld [vmem:[%s1] sm:$0xff]
      %v330 = vld [vmem:[%s1 + $0x8] sm:$0xff]
      %v331 = vld [vmem:[%s2] sm:$0x1]
      %v333 = vlaneseq
      %v334 = vshrl.u32 %v333, 7
      %v335 = vsub.s32 0, %v334
      %v336 = vrot.slane %v331, %v335
      %v338 = vadd.f32 %v328, %v336
      %v339 = vtanh.pop %v338
      %vm340 = vcmask 130048
      %v342 = vsel %vm340, %v339, 0
      %344 = vmatprep.subr.mxu0 0.0
      %345 = vmatpush1.msra.mxu0 %v329
      %346 = vmatprep.subr.mxu0 0.0
      %347 = vmatpush1.msra.mxu0 %v330
      %348 = vmatprep.subr.mxu0 0.0
      %349 = vmatpush1.msra.mxu0 0.0
      %350 = vmatprep.subr.mxu0 0.0
      %351 = vmatpush1.msra.mxu0 0.0
      %352 = vmatprep.subr.mxu0 0.0
      %353 = vmatpush1.msra.mxu0 0.0
      %354 = vmatprep.subr.mxu0 0.0
      %355 = vmatpush1.msra.mxu0 0.0
      %356 = vmatprep.subr.mxu0 0.0
      %357 = vmatpush1.msra.mxu0 0.0
      %358 = vmatprep.subr.mxu0 0.0
      %359 = vmatpush1.msra.mxu0 0.0
      %360 = vmatprep.subr.mxu0 0.0
      %361 = vmatpush1.msra.mxu0 0.0
      %362 = vmatprep.subr.mxu0 0.0
      %363 = vmatpush1.msra.mxu0 0.0
      %364 = vmatprep.subr.mxu0 0.0
      %365 = vmatpush1.msra.mxu0 0.0
      %366 = vmatprep.subr.mxu0 0.0
      %367 = vmatpush1.msra.mxu0 0.0
      %368 = vmatprep.subr.mxu0 0.0
      %369 = vmatpush1.msra.mxu0 0.0
      %370 = vmatprep.subr.mxu0 0.0
      %371 = vmatpush1.msra.mxu0 0.0
      %372 = vmatprep.subr.mxu0 0.0
      %373 = vmatpush1.msra.mxu0 0.0
      %374 = vmatprep.subr.mxu0 0.0
      %375 = vmatpush1.msra.mxu0 0.0
      %376 = vmatprep.subr.mxu0 0.0
      %377 = vmatpush1.msra.mxu0 0.0
      %378 = vmatprep.subr.mxu0 0.0
      %379 = vmatpush1.msra.mxu0 0.0
      %380 = vmatprep.subr.mxu0 0.0
      %381 = vmatpush1.msra.mxu0 0.0
      %382 = vmatprep.subr.mxu0 0.0
      %383 = vmatpush1.msra.mxu0 0.0
      %384 = vmatprep.subr.mxu0 0.0
      %385 = vmatpush1.msra.mxu0 0.0
      %386 = vmatprep.subr.mxu0 0.0
      %387 = vmatpush1.msra.mxu0 0.0
      %388 = vmatprep.subr.mxu0 0.0
      %389 = vmatpush1.msra.mxu0 0.0
      %390 = vmatprep.subr.mxu0 0.0
      %391 = vmatpush1.msra.mxu0 0.0
      %392 = vmatprep.subr.mxu0 0.0
      %393 = vmatpush1.msra.mxu0 0.0
      %394 = vmatprep.subr.mxu0 0.0
      %395 = vmatpush1.msra.mxu0 0.0
      %396 = vmatprep.subr.mxu0 0.0
      %397 = vmatpush1.msra.mxu0 0.0
      %398 = vmatprep.subr.mxu0 0.0
      %399 = vmatpush1.msra.mxu0 0.0
      %400 = vmatprep.subr.mxu0 0.0
      %401 = vmatpush1.msra.mxu0 0.0
      %402 = vmatprep.subr.mxu0 0.0
      %403 = vmatpush1.msra.mxu0 0.0
      %404 = vmatprep.subr.mxu0 0.0
      %405 = vmatpush1.msra.mxu0 0.0
      %406 = vmatprep.subr.mxu0 0.0
      %407 = vmatpush1.msra.mxu0 0.0
      %408 = vmatprep.mubr.f32.mxu0 0.0
      %409 = vmatmul.mubr.f32.gmra.mrb[0].mxu0 %v342
      %v410 = vpop.f32.mrb[0].mxu0
      %v411 = vadd.f32 %v336, %v410
      %v412 = vpop.f32.mrb[0].mxu0
      %413 = vdwg.mxu0
      %415 = vrot.lane.b32.xlu0 %v328, 112
      %v416 = vpop.permute.xlu0 %415
      %v418 = vadd.f32 %v411, %v416
      %v419 = vtanh.pop %v418
      %v421 = vsel %vm340, %v419, 0
      %423 = vmatprep.subr.mxu0 0.0
      %424 = vmatpush1.msra.mxu0 %v329
      %425 = vmatprep.subr.mxu0 0.0
      %426 = vmatpush1.msra.mxu0 %v330
      %427 = vmatprep.subr.mxu0 0.0
      %428 = vmatpush1.msra.mxu0 0.0
      %429 = vmatprep.subr.mxu0 0.0
      %430 = vmatpush1.msra.mxu0 0.0
      %431 = vmatprep.subr.mxu0 0.0
      %432 = vmatpush1.msra.mxu0 0.0
      %433 = vmatprep.subr.mxu0 0.0
      %434 = vmatpush1.msra.mxu0 0.0
      %435 = vmatprep.subr.mxu0 0.0
      %436 = vmatpush1.msra.mxu0 0.0
      %437 = vmatprep.subr.mxu0 0.0
      %438 = vmatpush1.msra.mxu0 0.0
      %439 = vmatprep.subr.mxu0 0.0
      %440 = vmatpush1.msra.mxu0 0.0
      %441 = vmatprep.subr.mxu0 0.0
      %442 = vmatpush1.msra.mxu0 0.0
      %443 = vmatprep.subr.mxu0 0.0
      %444 = vmatpush1.msra.mxu0 0.0
      %445 = vmatprep.subr.mxu0 0.0
      %446 = vmatpush1.msra.mxu0 0.0
      %447 = vmatprep.subr.mxu0 0.0
      %448 = vmatpush1.msra.mxu0 0.0
      %449 = vmatprep.subr.mxu0 0.0
      %450 = vmatpush1.msra.mxu0 0.0
      %451 = vmatprep.subr.mxu0 0.0
      %452 = vmatpush1.msra.mxu0 0.0
      %453 = vmatprep.subr.mxu0 0.0
      %454 = vmatpush1.msra.mxu0 0.0
      %455 = vmatprep.subr.mxu0 0.0
      %456 = vmatpush1.msra.mxu0 0.0
      %457 = vmatprep.subr.mxu0 0.0
      %458 = vmatpush1.msra.mxu0 0.0
      %459 = vmatprep.subr.mxu0 0.0
      %460 = vmatpush1.msra.mxu0 0.0
      %461 = vmatprep.subr.mxu0 0.0
      %462 = vmatpush1.msra.mxu0 0.0
      %463 = vmatprep.subr.mxu0 0.0
      %464 = vmatpush1.msra.mxu0 0.0
      %465 = vmatprep.subr.mxu0 0.0
      %466 = vmatpush1.msra.mxu0 0.0
      %467 = vmatprep.subr.mxu0 0.0
      %468 = vmatpush1.msra.mxu0 0.0
      %469 = vmatprep.subr.mxu0 0.0
      %470 = vmatpush1.msra.mxu0 0.0
      %471 = vmatprep.subr.mxu0 0.0
      %472 = vmatpush1.msra.mxu0 0.0
      %473 = vmatprep.subr.mxu0 0.0
      %474 = vmatpush1.msra.mxu0 0.0
      %475 = vmatprep.subr.mxu0 0.0
      %476 = vmatpush1.msra.mxu0 0.0
      %477 = vmatprep.subr.mxu0 0.0
      %478 = vmatpush1.msra.mxu0 0.0
      %479 = vmatprep.subr.mxu0 0.0
      %480 = vmatpush1.msra.mxu0 0.0
      %481 = vmatprep.subr.mxu0 0.0
      %482 = vmatpush1.msra.mxu0 0.0
      %483 = vmatprep.subr.mxu0 0.0
      %484 = vmatpush1.msra.mxu0 0.0
      %485 = vmatprep.subr.mxu0 0.0
      %486 = vmatpush1.msra.mxu0 0.0
      %487 = vmatprep.mubr.f32.mxu0 0.0
      %488 = vmatmul.mubr.f32.gmra.mrb[0].mxu0 %v421
      %v489 = vpop.f32.mrb[0].mxu0
      %v490 = vadd.f32 %v336, %v489
      %v491 = vpop.f32.mrb[0].mxu0
      %492 = vdwg.mxu0
      %493 = vrot.lane.b32.xlu0 %v328, 96
      %v494 = vpop.permute.xlu0 %493
      %v496 = vadd.f32 %v490, %v494
      %v497 = vtanh.pop %v496
      %v499 = vsel %vm340, %v497, 0
      %501 = vmatprep.subr.mxu0 0.0
      %502 = vmatpush1.msra.mxu0 %v329
      %503 = vmatprep.subr.mxu0 0.0
      %504 = vmatpush1.msra.mxu0 %v330
      %505 = vmatprep.subr.mxu0 0.0
      %506 = vmatpush1.msra.mxu0 0.0
      %507 = vmatprep.subr.mxu0 0.0
      %508 = vmatpush1.msra.mxu0 0.0
      %509 = vmatprep.subr.mxu0 0.0
      %510 = vmatpush1.msra.mxu0 0.0
      %511 = vmatprep.subr.mxu0 0.0
      %512 = vmatpush1.msra.mxu0 0.0
      %513 = vmatprep.subr.mxu0 0.0
      %514 = vmatpush1.msra.mxu0 0.0
      %515 = vmatprep.subr.mxu0 0.0
      %516 = vmatpush1.msra.mxu0 0.0
      %517 = vmatprep.subr.mxu0 0.0
      %518 = vmatpush1.msra.mxu0 0.0
      %519 = vmatprep.subr.mxu0 0.0
      %520 = vmatpush1.msra.mxu0 0.0
      %521 = vmatprep.subr.mxu0 0.0
      %522 = vmatpush1.msra.mxu0 0.0
      %523 = vmatprep.subr.mxu0 0.0
      %524 = vmatpush1.msra.mxu0 0.0
      %525 = vmatprep.subr.mxu0 0.0
      %526 = vmatpush1.msra.mxu0 0.0
      %527 = vmatprep.subr.mxu0 0.0
      %528 = vmatpush1.msra.mxu0 0.0
      %529 = vmatprep.subr.mxu0 0.0
      %530 = vmatpush1.msra.mxu0 0.0
      %531 = vmatprep.subr.mxu0 0.0
      %532 = vmatpush1.msra.mxu0 0.0
      %533 = vmatprep.subr.mxu0 0.0
      %534 = vmatpush1.msra.mxu0 0.0
      %535 = vmatprep.subr.mxu0 0.0
      %536 = vmatpush1.msra.mxu0 0.0
      %537 = vmatprep.subr.mxu0 0.0
      %538 = vmatpush1.msra.mxu0 0.0
      %539 = vmatprep.subr.mxu0 0.0
      %540 = vmatpush1.msra.mxu0 0.0
      %541 = vmatprep.subr.mxu0 0.0
      %542 = vmatpush1.msra.mxu0 0.0
      %543 = vmatprep.subr.mxu0 0.0
      %544 = vmatpush1.msra.mxu0 0.0
      %545 = vmatprep.subr.mxu0 0.0
      %546 = vmatpush1.msra.mxu0 0.0
      %547 = vmatprep.subr.mxu0 0.0
      %548 = vmatpush1.msra.mxu0 0.0
      %549 = vmatprep.subr.mxu0 0.0
      %550 = vmatpush1.msra.mxu0 0.0
      %551 = vmatprep.subr.mxu0 0.0
      %552 = vmatpush1.msra.mxu0 0.0
      %553 = vmatprep.subr.mxu0 0.0
      %554 = vmatpush1.msra.mxu0 0.0
      %555 = vmatprep.subr.mxu0 0.0
      %556 = vmatpush1.msra.mxu0 0.0
      %557 = vmatprep.subr.mxu0 0.0
      %558 = vmatpush1.msra.mxu0 0.0
      %559 = vmatprep.subr.mxu0 0.0
      %560 = vmatpush1.msra.mxu0 0.0
      %561 = vmatprep.subr.mxu0 0.0
      %562 = vmatpush1.msra.mxu0 0.0
      %563 = vmatprep.subr.mxu0 0.0
      %564 = vmatpush1.msra.mxu0 0.0
      %565 = vmatprep.mubr.f32.mxu0 0.0
      %566 = vmatmul.mubr.f32.gmra.mrb[0].mxu0 %v499
      %v567 = vpop.f32.mrb[0].mxu0
      %v568 = vadd.f32 %v336, %v567
      %v569 = vpop.f32.mrb[0].mxu0
      %570 = vdwg.mxu0
      %571 = vrot.lane.b32.xlu0 %v328, 80
      %v572 = vpop.permute.xlu0 %571
      %v574 = vadd.f32 %v568, %v572
      %v575 = vtanh.pop %v574
      %v577 = vsel %vm340, %v575, 0
      %579 = vmatprep.subr.mxu0 0.0
      %580 = vmatpush1.msra.mxu0 %v329
      %581 = vmatprep.subr.mxu0 0.0
      %582 = vmatpush1.msra.mxu0 %v330
      %583 = vmatprep.subr.mxu0 0.0
      %584 = vmatpush1.msra.mxu0 0.0
      %585 = vmatprep.subr.mxu0 0.0
      %586 = vmatpush1.msra.mxu0 0.0
      %587 = vmatprep.subr.mxu0 0.0
      %588 = vmatpush1.msra.mxu0 0.0
      %589 = vmatprep.subr.mxu0 0.0
      %590 = vmatpush1.msra.mxu0 0.0
      %591 = vmatprep.subr.mxu0 0.0
      %592 = vmatpush1.msra.mxu0 0.0
      %593 = vmatprep.subr.mxu0 0.0
      %594 = vmatpush1.msra.mxu0 0.0
      %595 = vmatprep.subr.mxu0 0.0
      %596 = vmatpush1.msra.mxu0 0.0
      %597 = vmatprep.subr.mxu0 0.0
      %598 = vmatpush1.msra.mxu0 0.0
      %599 = vmatprep.subr.mxu0 0.0
      %600 = vmatpush1.msra.mxu0 0.0
      %601 = vmatprep.subr.mxu0 0.0
      %602 = vmatpush1.msra.mxu0 0.0
      %603 = vmatprep.subr.mxu0 0.0
      %604 = vmatpush1.msra.mxu0 0.0
      %605 = vmatprep.subr.mxu0 0.0
      %606 = vmatpush1.msra.mxu0 0.0
      %607 = vmatprep.subr.mxu0 0.0
      %608 = vmatpush1.msra.mxu0 0.0
      %609 = vmatprep.subr.mxu0 0.0
      %610 = vmatpush1.msra.mxu0 0.0
      %611 = vmatprep.subr.mxu0 0.0
      %612 = vmatpush1.msra.mxu0 0.0
      %613 = vmatprep.subr.mxu0 0.0
      %614 = vmatpush1.msra.mxu0 0.0
      %615 = vmatprep.subr.mxu0 0.0
      %616 = vmatpush1.msra.mxu0 0.0
      %617 = vmatprep.subr.mxu0 0.0
      %618 = vmatpush1.msra.mxu0 0.0
      %619 = vmatprep.subr.mxu0 0.0
      %620 = vmatpush1.msra.mxu0 0.0
      %621 = vmatprep.subr.mxu0 0.0
      %622 = vmatpush1.msra.mxu0 0.0
      %623 = vmatprep.subr.mxu0 0.0
      %624 = vmatpush1.msra.mxu0 0.0
      %625 = vmatprep.subr.mxu0 0.0
      %626 = vmatpush1.msra.mxu0 0.0
      %627 = vmatprep.subr.mxu0 0.0
      %628 = vmatpush1.msra.mxu0 0.0
      %629 = vmatprep.subr.mxu0 0.0
      %630 = vmatpush1.msra.mxu0 0.0
      %631 = vmatprep.subr.mxu0 0.0
      %632 = vmatpush1.msra.mxu0 0.0
      %633 = vmatprep.subr.mxu0 0.0
      %634 = vmatpush1.msra.mxu0 0.0
      %635 = vmatprep.subr.mxu0 0.0
      %636 = vmatpush1.msra.mxu0 0.0
      %637 = vmatprep.subr.mxu0 0.0
      %638 = vmatpush1.msra.mxu0 0.0
      %639 = vmatprep.subr.mxu0 0.0
      %640 = vmatpush1.msra.mxu0 0.0
      %641 = vmatprep.subr.mxu0 0.0
      %642 = vmatpush1.msra.mxu0 0.0
      %643 = vmatprep.mubr.f32.mxu0 0.0
      %644 = vmatmul.mubr.f32.gmra.mrb[0].mxu0 %v577
      %v645 = vpop.f32.mrb[0].mxu0
      %v646 = vadd.f32 %v336, %v645
      %v647 = vpop.f32.mrb[0].mxu0
      %648 = vdwg.mxu0
      %v649 = vtanh.pop %v646
      %v651 = vsel %vm340, %v649, 0
      %653 = vmatprep.subr.mxu0 0.0
      %654 = vmatpush1.msra.mxu0 %v329
      %655 = vmatprep.subr.mxu0 0.0
      %656 = vmatpush1.msra.mxu0 %v330
      %657 = vmatprep.subr.mxu0 0.0
      %658 = vmatpush1.msra.mxu0 0.0
      %659 = vmatprep.subr.mxu0 0.0
      %660 = vmatpush1.msra.mxu0 0.0
      %661 = vmatprep.subr.mxu0 0.0
      %662 = vmatpush1.msra.mxu0 0.0
      %663 = vmatprep.subr.mxu0 0.0
      %664 = vmatpush1.msra.mxu0 0.0
      %665 = vmatprep.subr.mxu0 0.0
      %666 = vmatpush1.msra.mxu0 0.0
      %667 = vmatprep.subr.mxu0 0.0
      %668 = vmatpush1.msra.mxu0 0.0
      %669 = vmatprep.subr.mxu0 0.0
      %670 = vmatpush1.msra.mxu0 0.0
      %671 = vmatprep.subr.mxu0 0.0
      %672 = vmatpush1.msra.mxu0 0.0
      %673 = vmatprep.subr.mxu0 0.0
      %674 = vmatpush1.msra.mxu0 0.0
      %675 = vmatprep.subr.mxu0 0.0
      %676 = vmatpush1.msra.mxu0 0.0
      %677 = vmatprep.subr.mxu0 0.0
      %678 = vmatpush1.msra.mxu0 0.0
      %679 = vmatprep.subr.mxu0 0.0
      %680 = vmatpush1.msra.mxu0 0.0
      %681 = vmatprep.subr.mxu0 0.0
      %682 = vmatpush1.msra.mxu0 0.0
      %683 = vmatprep.subr.mxu0 0.0
      %684 = vmatpush1.msra.mxu0 0.0
      %685 = vmatprep.subr.mxu0 0.0
      %686 = vmatpush1.msra.mxu0 0.0
      %687 = vmatprep.subr.mxu0 0.0
      %688 = vmatpush1.msra.mxu0 0.0
      %689 = vmatprep.subr.mxu0 0.0
      %690 = vmatpush1.msra.mxu0 0.0
      %691 = vmatprep.subr.mxu0 0.0
      %692 = vmatpush1.msra.mxu0 0.0
      %693 = vmatprep.subr.mxu0 0.0
      %694 = vmatpush1.msra.mxu0 0.0
      %695 = vmatprep.subr.mxu0 0.0
      %696 = vmatpush1.msra.mxu0 0.0
      %697 = vmatprep.subr.mxu0 0.0
      %698 = vmatpush1.msra.mxu0 0.0
      %699 = vmatprep.subr.mxu0 0.0
      %700 = vmatpush1.msra.mxu0 0.0
      %701 = vmatprep.subr.mxu0 0.0
      %702 = vmatpush1.msra.mxu0 0.0
      %703 = vmatprep.subr.mxu0 0.0
      %704 = vmatpush1.msra.mxu0 0.0
      %705 = vmatprep.subr.mxu0 0.0
      %706 = vmatpush1.msra.mxu0 0.0
      %707 = vmatprep.subr.mxu0 0.0
      %708 = vmatpush1.msra.mxu0 0.0
      %709 = vmatprep.subr.mxu0 0.0
      %710 = vmatpush1.msra.mxu0 0.0
      %711 = vmatprep.subr.mxu0 0.0
      %712 = vmatpush1.msra.mxu0 0.0
      %713 = vmatprep.subr.mxu0 0.0
      %714 = vmatpush1.msra.mxu0 0.0
      %715 = vmatprep.subr.mxu0 0.0
      %716 = vmatpush1.msra.mxu0 0.0
      %717 = vmatprep.mubr.f32.mxu0 0.0
      %718 = vmatmul.mubr.f32.gmra.mrb[0].mxu0 %v651
      %v719 = vpop.f32.mrb[0].mxu0
      %v720 = vadd.f32 %v336, %v719
      %v721 = vpop.f32.mrb[0].mxu0
      %722 = vdwg.mxu0
      %v723 = vtanh.pop %v720
      %v724 = vld [vmem:[%s3] sm:$0xff]
      %v725 = vld [vmem:[%s3 + $0x8] sm:$0xff]
      %v726 = vld [vmem:[%s4] sm:$0x1]
      %v728 = vlaneseq
      %v729 = vshrl.u32 %v728, 7
      %v730 = vsub.s32 0, %v729
      %v731 = vrot.slane %v726, %v730
      %v734 = vsel %vm340, %v723, 0
      %736 = vmatprep.subr.mxu0 0.0
      %737 = vmatpush1.msra.mxu0 %v724
      %738 = vmatprep.subr.mxu0 0.0
      %739 = vmatpush1.msra.mxu0 %v725
      %740 = vmatprep.subr.mxu0 0.0
      %741 = vmatpush1.msra.mxu0 0.0
      %742 = vmatprep.subr.mxu0 0.0
      %743 = vmatpush1.msra.mxu0 0.0
      %744 = vmatprep.subr.mxu0 0.0
      %745 = vmatpush1.msra.mxu0 0.0
      %746 = vmatprep.subr.mxu0 0.0
      %747 = vmatpush1.msra.mxu0 0.0
      %748 = vmatprep.subr.mxu0 0.0
      %749 = vmatpush1.msra.mxu0 0.0
      %750 = vmatprep.subr.mxu0 0.0
      %751 = vmatpush1.msra.mxu0 0.0
      %752 = vmatprep.subr.mxu0 0.0
      %753 = vmatpush1.msra.mxu0 0.0
      %754 = vmatprep.subr.mxu0 0.0
      %755 = vmatpush1.msra.mxu0 0.0
      %756 = vmatprep.subr.mxu0 0.0
      %757 = vmatpush1.msra.mxu0 0.0
      %758 = vmatprep.subr.mxu0 0.0
      %759 = vmatpush1.msra.mxu0 0.0
      %760 = vmatprep.subr.mxu0 0.0
      %761 = vmatpush1.msra.mxu0 0.0
      %762 = vmatprep.subr.mxu0 0.0
      %763 = vmatpush1.msra.mxu0 0.0
      %764 = vmatprep.subr.mxu0 0.0
      %765 = vmatpush1.msra.mxu0 0.0
      %766 = vmatprep.subr.mxu0 0.0
      %767 = vmatpush1.msra.mxu0 0.0
      %768 = vmatprep.subr.mxu0 0.0
      %769 = vmatpush1.msra.mxu0 0.0
      %770 = vmatprep.subr.mxu0 0.0
      %771 = vmatpush1.msra.mxu0 0.0
      %772 = vmatprep.subr.mxu0 0.0
      %773 = vmatpush1.msra.mxu0 0.0
      %774 = vmatprep.subr.mxu0 0.0
      %775 = vmatpush1.msra.mxu0 0.0
      %776 = vmatprep.subr.mxu0 0.0
      %777 = vmatpush1.msra.mxu0 0.0
      %778 = vmatprep.subr.mxu0 0.0
      %779 = vmatpush1.msra.mxu0 0.0
      %780 = vmatprep.subr.mxu0 0.0
      %781 = vmatpush1.msra.mxu0 0.0
      %782 = vmatprep.subr.mxu0 0.0
      %783 = vmatpush1.msra.mxu0 0.0
      %784 = vmatprep.subr.mxu0 0.0
      %785 = vmatpush1.msra.mxu0 0.0
      %786 = vmatprep.subr.mxu0 0.0
      %787 = vmatpush1.msra.mxu0 0.0
      %788 = vmatprep.subr.mxu0 0.0
      %789 = vmatpush1.msra.mxu0 0.0
      %790 = vmatprep.subr.mxu0 0.0
      %791 = vmatpush1.msra.mxu0 0.0
      %792 = vmatprep.subr.mxu0 0.0
      %793 = vmatpush1.msra.mxu0 0.0
      %794 = vmatprep.subr.mxu0 0.0
      %795 = vmatpush1.msra.mxu0 0.0
      %796 = vmatprep.subr.mxu0 0.0
      %797 = vmatpush1.msra.mxu0 0.0
      %798 = vmatprep.subr.mxu0 0.0
      %799 = vmatpush1.msra.mxu0 0.0
      %800 = vmatprep.mubr.f32.mxu0 0.0
      %801 = vmatmul.mubr.f32.gmra.mrb[0].mxu0 %v342
      %v802 = vpop.f32.mrb[0].mxu0
      %v803 = vadd.f32 %v731, %v802
      %v804 = vpop.f32.mrb[0].mxu0
      %805 = vmatprep.mubr.f32.mxu0 0.0
      %806 = vmatmul.mubr.f32.gmra.mrb[0].mxu0 %v421
      %v807 = vpop.f32.mrb[0].mxu0
      %v808 = vadd.f32 %v731, %v807
      %v809 = vpop.f32.mrb[0].mxu0
      %810 = vmatprep.mubr.f32.mxu0 0.0
      %811 = vmatmul.mubr.f32.gmra.mrb[0].mxu0 %v499
      %v812 = vpop.f32.mrb[0].mxu0
      %v813 = vadd.f32 %v731, %v812
      %v814 = vpop.f32.mrb[0].mxu0
      %815 = vmatprep.mubr.f32.mxu0 0.0
      %816 = vmatmul.mubr.f32.gmra.mrb[0].mxu0 %v577
      %v817 = vpop.f32.mrb[0].mxu0
      %v818 = vadd.f32 %v731, %v817
      %v819 = vpop.f32.mrb[0].mxu0
      %820 = vmatprep.mubr.f32.mxu0 0.0
      %821 = vmatmul.mubr.f32.gmra.mrb[0].mxu0 %v651
      %v822 = vpop.f32.mrb[0].mxu0
      %v823 = vadd.f32 %v731, %v822
      %v824 = vpop.f32.mrb[0].mxu0
      %825 = vmatprep.mubr.f32.mxu0 0.0
      %826 = vmatmul.mubr.f32.gmra.mrb[0].mxu0 %v734
      %v827 = vpop.f32.mrb[0].mxu0
      %v828 = vadd.f32 %v731, %v827
      %v829 = vpop.f32.mrb[0].mxu0
      %830 = vdwg.mxu0
      %v831 = vmax.f32 %v803, 0.0
      %v832 = vmax.f32 %v808, 0.0
      %v833 = vmax.f32 %v813, 0.0
      %v834 = vmax.f32 %v818, 0.0
      %v835 = vmax.f32 %v823, 0.0
      %v836 = vmax.f32 %v828, 0.0
      %v837 = vld [vmem:[%s5] sm:$0xff]
      %v838 = vld [vmem:[%s5 + $0x8] sm:$0xff]
      %v839 = vld [vmem:[%s5 + $0x10] sm:$0xff]
      %v840 = vld [vmem:[%s5 + $0x18] sm:$0xff]
      %v841 = vld [vmem:[%s6] sm:$0x1]
      %v843 = vlaneseq
      %v844 = vshrl.u32 %v843, 7
      %v845 = vsub.s32 0, %v844
      %v846 = vrot.slane %v841, %v845
      %vm848 = vcmask 261120
      %v850 = vsel %vm848, %v831, 0
      %v853 = vsel %vm848, %v832, 0
      %v856 = vsel %vm848, %v833, 0
      %v859 = vsel %vm848, %v834, 0
      %v862 = vsel %vm848, %v835, 0
      %v865 = vsel %vm848, %v836, 0
      %867 = vmatprep.subr.mxu0 0.0
      %868 = vmatpush1.msra.mxu0 %v837
      %869 = vmatprep.subr.mxu0 0.0
      %870 = vmatpush1.msra.mxu0 %v838
      %871 = vmatprep.subr.mxu0 0.0
      %872 = vmatpush1.msra.mxu0 %v839
      %873 = vmatprep.subr.mxu0 0.0
      %874 = vmatpush1.msra.mxu0 %v840
      %875 = vmatprep.subr.mxu0 0.0
      %876 = vmatpush1.msra.mxu0 0.0
      %877 = vmatprep.subr.mxu0 0.0
      %878 = vmatpush1.msra.mxu0 0.0
      %879 = vmatprep.subr.mxu0 0.0
      %880 = vmatpush1.msra.mxu0 0.0
      %881 = vmatprep.subr.mxu0 0.0
      %882 = vmatpush1.msra.mxu0 0.0
      %883 = vmatprep.subr.mxu0 0.0
      %884 = vmatpush1.msra.mxu0 0.0
      %885 = vmatprep.subr.mxu0 0.0
      %886 = vmatpush1.msra.mxu0 0.0
      %887 = vmatprep.subr.mxu0 0.0
      %888 = vmatpush1.msra.mxu0 0.0
      %889 = vmatprep.subr.mxu0 0.0
      %890 = vmatpush1.msra.mxu0 0.0
      %891 = vmatprep.subr.mxu0 0.0
      %892 = vmatpush1.msra.mxu0 0.0
      %893 = vmatprep.subr.mxu0 0.0
      %894 = vmatpush1.msra.mxu0 0.0
      %895 = vmatprep.subr.mxu0 0.0
      %896 = vmatpush1.msra.mxu0 0.0
      %897 = vmatprep.subr.mxu0 0.0
      %898 = vmatpush1.msra.mxu0 0.0
      %899 = vmatprep.subr.mxu0 0.0
      %900 = vmatpush1.msra.mxu0 0.0
      %901 = vmatprep.subr.mxu0 0.0
      %902 = vmatpush1.msra.mxu0 0.0
      %903 = vmatprep.subr.mxu0 0.0
      %904 = vmatpush1.msra.mxu0 0.0
      %905 = vmatprep.subr.mxu0 0.0
      %906 = vmatpush1.msra.mxu0 0.0
      %907 = vmatprep.subr.mxu0 0.0
      %908 = vmatpush1.msra.mxu0 0.0
      %909 = vmatprep.subr.mxu0 0.0
      %910 = vmatpush1.msra.mxu0 0.0
      %911 = vmatprep.subr.mxu0 0.0
      %912 = vmatpush1.msra.mxu0 0.0
      %913 = vmatprep.subr.mxu0 0.0
      %914 = vmatpush1.msra.mxu0 0.0
      %915 = vmatprep.subr.mxu0 0.0
      %916 = vmatpush1.msra.mxu0 0.0
      %917 = vmatprep.subr.mxu0 0.0
      %918 = vmatpush1.msra.mxu0 0.0
      %919 = vmatprep.subr.mxu0 0.0
      %920 = vmatpush1.msra.mxu0 0.0
      %921 = vmatprep.subr.mxu0 0.0
      %922 = vmatpush1.msra.mxu0 0.0
      %923 = vmatprep.subr.mxu0 0.0
      %924 = vmatpush1.msra.mxu0 0.0
      %925 = vmatprep.subr.mxu0 0.0
      %926 = vmatpush1.msra.mxu0 0.0
      %927 = vmatprep.subr.mxu0 0.0
      %928 = vmatpush1.msra.mxu0 0.0
      %929 = vmatprep.subr.mxu0 0.0
      %930 = vmatpush1.msra.mxu0 0.0
      %931 = vmatprep.mubr.f32.mxu0 0.0
      %932 = vmatmul.mubr.f32.gmra.mrb[0].mxu0 %v850
      %v933 = vpop.f32.mrb[0].mxu0
      %v934 = vadd.f32 %v846, %v933
      %v935 = vpop.f32.mrb[0].mxu0
      %936 = vmatprep.mubr.f32.mxu0 0.0
      %937 = vmatmul.mubr.f32.gmra.mrb[0].mxu0 %v853
      %v938 = vpop.f32.mrb[0].mxu0
      %v939 = vadd.f32 %v846, %v938
      %v940 = vpop.f32.mrb[0].mxu0
      %941 = vmatprep.mubr.f32.mxu0 0.0
      %942 = vmatmul.mubr.f32.gmra.mrb[0].mxu0 %v856
      %v943 = vpop.f32.mrb[0].mxu0
      %v944 = vadd.f32 %v846, %v943
      %v945 = vpop.f32.mrb[0].mxu0
      %946 = vmatprep.mubr.f32.mxu0 0.0
      %947 = vmatmul.mubr.f32.gmra.mrb[0].mxu0 %v859
      %v948 = vpop.f32.mrb[0].mxu0
      %v949 = vadd.f32 %v846, %v948
      %v950 = vpop.f32.mrb[0].mxu0
      %951 = vmatprep.mubr.f32.mxu0 0.0
      %952 = vmatmul.mubr.f32.gmra.mrb[0].mxu0 %v862
      %v953 = vpop.f32.mrb[0].mxu0
      %v954 = vadd.f32 %v846, %v953
      %v955 = vpop.f32.mrb[0].mxu0
      %956 = vmatprep.mubr.f32.mxu0 0.0
      %957 = vmatmul.mubr.f32.gmra.mrb[0].mxu0 %v865
      %v958 = vpop.f32.mrb[0].mxu0
      %v959 = vadd.f32 %v846, %v958
      %v960 = vpop.f32.mrb[0].mxu0
      %961 = vdwg.mxu0
      %v962 = vmax.f32 %v934, 0.0
      %v963 = vmax.f32 %v939, 0.0
      %v964 = vmax.f32 %v944, 0.0
      %v965 = vmax.f32 %v949, 0.0
      %v966 = vmax.f32 %v954, 0.0
      %v967 = vmax.f32 %v959, 0.0
      %v968 = vld [vmem:[%s7] sm:$0xff]
      %v969 = vld [vmem:[%s7 + $0x8] sm:$0xff]
      %v970 = vld [vmem:[%s7 + $0x10] sm:$0xff]
      %v971 = vld [vmem:[%s7 + $0x18] sm:$0xff]
      %v972 = vld [vmem:[%s8] sm:$0x1]
      %v974 = vlaneseq
      %v975 = vshrl.u32 %v974, 7
      %v976 = vsub.s32 0, %v975
      %v977 = vrot.slane %v972, %v976
      %v980 = vsel %vm848, %v962, 0
      %v983 = vsel %vm848, %v963, 0
      %v986 = vsel %vm848, %v964, 0
      %v989 = vsel %vm848, %v965, 0
      %v992 = vsel %vm848, %v966, 0
      %v995 = vsel %vm848, %v967, 0
      %997 = vmatprep.subr.mxu0 0.0
      %998 = vmatpush1.msra.mxu0 %v968
      %999 = vmatprep.subr.mxu0 0.0
      %1000 = vmatpush1.msra.mxu0 %v969
      %1001 = vmatprep.subr.mxu0 0.0
      %1002 = vmatpush1.msra.mxu0 %v970
      %1003 = vmatprep.subr.mxu0 0.0
      %1004 = vmatpush1.msra.mxu0 %v971
      %1005 = vmatprep.subr.mxu0 0.0
      %1006 = vmatpush1.msra.mxu0 0.0
      %1007 = vmatprep.subr.mxu0 0.0
      %1008 = vmatpush1.msra.mxu0 0.0
      %1009 = vmatprep.subr.mxu0 0.0
      %1010 = vmatpush1.msra.mxu0 0.0
      %1011 = vmatprep.subr.mxu0 0.0
      %1012 = vmatpush1.msra.mxu0 0.0
      %1013 = vmatprep.subr.mxu0 0.0
      %1014 = vmatpush1.msra.mxu0 0.0
      %1015 = vmatprep.subr.mxu0 0.0
      %1016 = vmatpush1.msra.mxu0 0.0
      %1017 = vmatprep.subr.mxu0 0.0
      %1018 = vmatpush1.msra.mxu0 0.0
      %1019 = vmatprep.subr.mxu0 0.0
      %1020 = vmatpush1.msra.mxu0 0.0
      %1021 = vmatprep.subr.mxu0 0.0
      %1022 = vmatpush1.msra.mxu0 0.0
      %1023 = vmatprep.subr.mxu0 0.0
      %1024 = vmatpush1.msra.mxu0 0.0
      %1025 = vmatprep.subr.mxu0 0.0
      %1026 = vmatpush1.msra.mxu0 0.0
      %1027 = vmatprep.subr.mxu0 0.0
      %1028 = vmatpush1.msra.mxu0 0.0
      %1029 = vmatprep.subr.mxu0 0.0
      %1030 = vmatpush1.msra.mxu0 0.0
      %1031 = vmatprep.subr.mxu0 0.0
      %1032 = vmatpush1.msra.mxu0 0.0
      %1033 = vmatprep.subr.mxu0 0.0
      %1034 = vmatpush1.msra.mxu0 0.0
      %1035 = vmatprep.subr.mxu0 0.0
      %1036 = vmatpush1.msra.mxu0 0.0
      %1037 = vmatprep.subr.mxu0 0.0
      %1038 = vmatpush1.msra.mxu0 0.0
      %1039 = vmatprep.subr.mxu0 0.0
      %1040 = vmatpush1.msra.mxu0 0.0
      %1041 = vmatprep.subr.mxu0 0.0
      %1042 = vmatpush1.msra.mxu0 0.0
      %1043 = vmatprep.subr.mxu0 0.0
      %1044 = vmatpush1.msra.mxu0 0.0
      %1045 = vmatprep.subr.mxu0 0.0
      %1046 = vmatpush1.msra.mxu0 0.0
      %1047 = vmatprep.subr.mxu0 0.0
      %1048 = vmatpush1.msra.mxu0 0.0
      %1049 = vmatprep.subr.mxu0 0.0
      %1050 = vmatpush1.msra.mxu0 0.0
      %1051 = vmatprep.subr.mxu0 0.0
      %1052 = vmatpush1.msra.mxu0 0.0
      %1053 = vmatprep.subr.mxu0 0.0
      %1054 = vmatpush1.msra.mxu0 0.0
      %1055 = vmatprep.subr.mxu0 0.0
      %1056 = vmatpush1.msra.mxu0 0.0
      %1057 = vmatprep.subr.mxu0 0.0
      %1058 = vmatpush1.msra.mxu0 0.0
      %1059 = vmatprep.subr.mxu0 0.0
      %1060 = vmatpush1.msra.mxu0 0.0
      %1061 = vmatprep.mubr.f32.mxu0 0.0
      %1062 = vmatmul.mubr.f32.gmra.mrb[0].mxu0 %v980
      %v1063 = vpop.f32.mrb[0].mxu0
      %v1064 = vadd.f32 %v977, %v1063
      %v1065 = vpop.f32.mrb[0].mxu0
      %1066 = vmatprep.mubr.f32.mxu0 0.0
      %1067 = vmatmul.mubr.f32.gmra.mrb[0].mxu0 %v983
      %v1068 = vpop.f32.mrb[0].mxu0
      %v1069 = vadd.f32 %v977, %v1068
      %v1070 = vpop.f32.mrb[0].mxu0
      %1071 = vmatprep.mubr.f32.mxu0 0.0
      %1072 = vmatmul.mubr.f32.gmra.mrb[0].mxu0 %v986
      %v1073 = vpop.f32.mrb[0].mxu0
      %v1074 = vadd.f32 %v977, %v1073
      %v1075 = vpop.f32.mrb[0].mxu0
      %1076 = vmatprep.mubr.f32.mxu0 0.0
      %1077 = vmatmul.mubr.f32.gmra.mrb[0].mxu0 %v989
      %v1078 = vpop.f32.mrb[0].mxu0
      %v1079 = vadd.f32 %v977, %v1078
      %v1080 = vpop.f32.mrb[0].mxu0
      %1081 = vmatprep.mubr.f32.mxu0 0.0
      %1082 = vmatmul.mubr.f32.gmra.mrb[0].mxu0 %v992
      %v1083 = vpop.f32.mrb[0].mxu0
      %v1084 = vadd.f32 %v977, %v1083
      %v1085 = vpop.f32.mrb[0].mxu0
      %1086 = vmatprep.mubr.f32.mxu0 0.0
      %1087 = vmatmul.mubr.f32.gmra.mrb[0].mxu0 %v995
      %v1088 = vpop.f32.mrb[0].mxu0
      %v1089 = vadd.f32 %v977, %v1088
      %v1090 = vpop.f32.mrb[0].mxu0
      %1091 = vdwg.mxu0
      %1093 = vrot.lane.b32.xlu0 %v1069, 12
      %v1094 = vpop.permute.xlu0 %1093
      %1097 = vrot.lane.b32.xlu0 %v1074, 24
      %v1098 = vpop.permute.xlu0 %1097
      %1101 = vrot.lane.b32.xlu0 %v1079, 36
      %v1102 = vpop.permute.xlu0 %1101
      %1105 = vrot.lane.b32.xlu0 %v1084, 48
      %v1106 = vpop.permute.xlu0 %1105
      %1109 = vrot.lane.b32.xlu0 %v1089, 60
      %v1110 = vpop.permute.xlu0 %1109
      %vm1112 = vcmask 97280
      %v1113 = vsel %vm1112, %v1064, %v1094
      %vm1114 = vcmask 195584
      %v1115 = vsel %vm1114, %v1113, %v1098
      %vm1116 = vcmask 293888
      %v1117 = vsel %vm1116, %v1115, %v1102
      %vm1118 = vcmask 392192
      %v1119 = vsel %vm1118, %v1117, %v1106
      %vm1120 = vcmask 490496
      %v1121 = vsel %vm1120, %v1119, %v1110
      %vm1122 = vcmask 588800
      %1123 = vst.msk [vmem:[%s327] sm:$0xff] %vm1122, %v1121
      %p1124 = scmp.lt.s32.totalorder %s20, 1
      %s1125 = scalar_select %p1124, %s20, 1
      %s1126 = smul.addr %s1125, 8
      %s1127 = scalar_lea.vmem %s9, %s1126
      // Predicated region
      $region57: #{gcnn_rnn_forward.3} parent=55 // pred_check
        %p1128 = pneg %p232
      $region58: #{gcnn_rnn_forward.3} parent=55 // pred_check_branch
        %1130 = sbr.rel (%p1128) target = $region60
      $region59: #{gcnn_rnn_forward.3} parent=55 // pred_region
        _
      $region60: #{gcnn_rnn_forward.3} parent=55 // pred_fallthru
        _
    $region56: #{gcnn_rnn_forward.3} parent=5 // pred_fallthru
      _
    %p1131 = scmp.le.s32.totalorder 2, %s15
    // Predicated region
    $region61: #{gcnn_rnn_forward.3} parent=5 // pred_check
      %p1132 = pneg %p1131
    $region62: #{gcnn_rnn_forward.3} parent=5 // pred_check_branch
      %1134 = sbr.rel (%p1132) target = $region64
    $region63: #{gcnn_rnn_forward.3} parent=5 // pred_region
      %s1135 = ssub.s32 %s15, 2
      // Predicated region
      $region65: #{gcnn_rnn_forward.3} parent=63 // pred_check
        %p1136 = pneg %p238
      $region66: #{gcnn_rnn_forward.3} parent=63 // pred_check_branch
        %1138 = sbr.rel (%p1136) target = $region68
      $region67: #{gcnn_rnn_forward.3} parent=63 // pred_region
        %p1139 = scmp.lt.s32.totalorder %s21, 1
        %s1140 = scalar_select %p1139, %s21, 1
        %s1141 = smul.addr %s1140, 8
        %s1142 = scalar_lea.vmem %s9, %s1141
      $region68: #{gcnn_rnn_forward.3} parent=63 // pred_fallthru
        _
    $region64: #{gcnn_rnn_forward.3} parent=5 // pred_fallthru
      _
  $region6: #{gcnn_rnn_forward.3} parent=0 // loop_footer
    %s19 = sadd.s32 1, %s15
  $region7: #{gcnn_rnn_forward.3} parent=0 // loop_footer_branch
    %14 = sbr.rel target = $region3
  $region8: #{gcnn_rnn_forward.3} parent=0 // loop_exit
    _

// kernel: gcnn_rnn_forward.2
$region0: #{gcnn_rnn_forward.2}
  #allocation0 [shape = 'u32[]', space=smem, size = 0x4, offset = 0x4, fixed_abs, tag = 'smem constant byte address 0x4 - core index']
  #allocation1 [shape = 'u32[144,128]{1,0:T(1,128)}', space=vmem, size = 0x12000, scoped, tag = 'internal scratch']
  %s0 = inlined_call_operand.vmem [shape: f32[8,8], index: 0, kind: input, shape index: {}]
  %s1 = inlined_call_operand.vmem [shape: f32[64,4], index: 1, kind: input, shape index: {}]
  %s2 = inlined_call_operand.vmem [shape: f32[4,8], index: 2, kind: input, shape index: {}]
  %s3 = inlined_call_operand.vmem [shape: f32[1,8], index: 3, kind: input, shape index: {}]
  %s4 = inlined_call_operand.vmem [shape: f32[8,8], index: 4, kind: input, shape index: {}]
  %s5 = inlined_call_operand.vmem [shape: f32[1,8], index: 5, kind: input, shape index: {}]
  %s6 = inlined_call_operand.vmem [shape: f32[8,16], index: 6, kind: input, shape index: {}]
  %s7 = inlined_call_operand.vmem [shape: f32[1,16], index: 7, kind: input, shape index: {}]
  %s8 = inlined_call_operand.vmem [shape: f32[16,16], index: 8, kind: input, shape index: {}]
  %s9 = inlined_call_operand.vmem [shape: f32[1,16], index: 9, kind: input, shape index: {}]
  %s10 = inlined_call_operand.vmem [shape: f32[16,8], index: 10, kind: input, shape index: {}]
  %s11 = inlined_call_operand.vmem [shape: f32[1,8], index: 11, kind: input, shape index: {}]
  %s12 = inlined_call_operand.vmem [shape: f32[4,16], index: 12, kind: input, shape index: {}]
  %s13 = inlined_call_operand.vmem [shape: f32[8,16], index: 13, kind: input, shape index: {}]
  %s14 = inlined_call_operand.vmem [shape: f32[64,16], index: 14, kind: output, shape index: {}]
  %s15 = sld [smem:[#allocation0]]
  $region89: #{gcnn_rnn_forward.2} parent=0
    _
  %s17 = ssub.s32 1, %s15
  %s18 = scalar_select 0, %s17, %s15
  loop: start=0, step=1, limit=4
  $region2: #{gcnn_rnn_forward.2} parent=0 // loop_pre_header
    _
  $region3: #{gcnn_rnn_forward.2} parent=0 // loop_header
    %s20 = sphi 0, %s24
    %p21 = scmp.ge.s32.totalorder %s20, 4
    %s28 = sphi 0, %s28
    %s30 = sphi 0, %s28
    %s31 = sphi 0, %s30
    %s45 = sphi 0, %s31
    %s51 = sphi 0, %s53
    %s54 = sphi 0, %s51
    %s55 = sphi 0, %s54
    %s71 = sphi 0, %s55
    %s75 = sphi 0, %s75
    %s77 = sphi 0, %s75
    %s78 = sphi 0, %s77
    %s92 = sphi 0, %s78
    %s96 = sphi 0, %s96
    %s98 = sphi 0, %s96
    %s99 = sphi 0, %s98
    %s113 = sphi 0, %s99
    %s117 = sphi 0, %s117
    %s119 = sphi 0, %s117
    %s120 = sphi 0, %s119
    %s134 = sphi 0, %s120
    %s138 = sphi 0, %s138
    %s140 = sphi 0, %s138
    %s141 = sphi 0, %s140
    %s155 = sphi 0, %s141
    %s159 = sphi 0, %s159
    %s161 = sphi 0, %s159
    %s162 = sphi 0, %s161
    %s176 = sphi 0, %s162
    %s180 = sphi 0, %s180
    %s182 = sphi 0, %s180
    %s183 = sphi 0, %s182
    %s197 = sphi 0, %s183
    %s201 = sphi 0, %s201
    %s203 = sphi 0, %s201
    %s204 = sphi 0, %s203
    %s218 = sphi 0, %s204
    %s222 = sphi 0, %s222
    %s224 = sphi 0, %s222
    %s225 = sphi 0, %s224
    %s239 = sphi 0, %s225
    %s243 = sphi 0, %s243
    %s245 = sphi 0, %s243
    %s246 = sphi 0, %s245
    %s260 = sphi 0, %s246
    %s264 = sphi 0, %s264
    %s266 = sphi 0, %s264
    %s267 = sphi 0, %s266
    %s281 = sphi 0, %s267
    %s285 = sphi 0, %s285
    %s287 = sphi 0, %s285
    %s288 = sphi 0, %s287
    %s302 = sphi 0, %s288
    %s306 = sphi 0, %s306
    %s308 = sphi 0, %s306
    %s309 = sphi 0, %s308
    %s323 = sphi 0, %s309
    %s329 = sphi 0, %s331
    %s332 = sphi 0, %s329
    %s333 = sphi 0, %s332
    %s349 = sphi 0, %s333
  $region4: #{gcnn_rnn_forward.2} parent=0 // loop_header_branch
    %23 = sbr.rel (%p21) target = $region8
  $region5: #{gcnn_rnn_forward.2} parent=0 // loop_body
    %s25 = ssub.s32 %s20, 1
    %s26 = ssub.s32 %s20, 2
    %s27 = sadd.s32 %s20, 1
    %s29 = sadd.s32 %s28, 1
    %p32 = scmp.eq.s32.totalorder %s20, 1
    %p33 = scmp.ne.s32.totalorder %s28, %s30
    %p34 = scmp.eq.s32.totalorder %s20, 0
    %p35 = por %p33, %p34
    %p36 = scmp.ne.s32.totalorder %s28, %s30
    %p37 = scmp.eq.s32.totalorder %s25, 1
    %p38 = por %p36, %p37
    %p39 = scmp.ne.s32.totalorder %s30, %s31
    %p40 = scmp.eq.s32.totalorder %s25, 0
    %p41 = por %p39, %p40
    %p42 = scmp.ne.s32.totalorder %s30, %s31
    %p43 = scmp.eq.s32.totalorder %s26, 1
    %p44 = por %p42, %p43
    %p46 = scmp.ne.s32.totalorder %s31, %s45
    %p47 = scmp.eq.s32.totalorder %s26, 0
    %p48 = por %p46, %p47
    %s49 = ssub.s32 %s20, %s27
    %p50 = scmp.eq.s32.totalorder %s49, 0
    %s52 = sadd.s32 %s51, 1
    %s53 = scalar_select %p50, %s51, %s52
    %p56 = pneg %p50
    %p57 = scmp.eq.s32.totalorder %s20, 1
    %p58 = por %p56, %p57
    %p59 = scmp.ne.s32.totalorder %s51, %s54
    %p60 = scmp.eq.s32.totalorder %s20, 0
    %p61 = por %p59, %p60
    %p62 = scmp.ne.s32.totalorder %s51, %s54
    %p63 = scmp.eq.s32.totalorder %s25, 1
    %p64 = por %p62, %p63
    %p65 = scmp.ne.s32.totalorder %s54, %s55
    %p66 = scmp.eq.s32.totalorder %s25, 0
    %p67 = por %p65, %p66
    %p68 = scmp.ne.s32.totalorder %s54, %s55
    %p69 = scmp.eq.s32.totalorder %s26, 1
    %p70 = por %p68, %p69
    %p72 = scmp.ne.s32.totalorder %s55, %s71
    %p73 = scmp.eq.s32.totalorder %s26, 0
    %p74 = por %p72, %p73
    %s76 = sadd.s32 %s75, 1
    %p79 = scmp.eq.s32.totalorder %s20, 1
    %p80 = scmp.ne.s32.totalorder %s75, %s77
    %p81 = scmp.eq.s32.totalorder %s20, 0
    %p82 = por %p80, %p81
    %p83 = scmp.ne.s32.totalorder %s75, %s77
    %p84 = scmp.eq.s32.totalorder %s25, 1
    %p85 = por %p83, %p84
    %p86 = scmp.ne.s32.totalorder %s77, %s78
    %p87 = scmp.eq.s32.totalorder %s25, 0
    %p88 = por %p86, %p87
    %p89 = scmp.ne.s32.totalorder %s77, %s78
    %p90 = scmp.eq.s32.totalorder %s26, 1
    %p91 = por %p89, %p90
    %p93 = scmp.ne.s32.totalorder %s78, %s92
    %p94 = scmp.eq.s32.totalorder %s26, 0
    %p95 = por %p93, %p94
    %s97 = sadd.s32 %s96, 1
    %p100 = scmp.eq.s32.totalorder %s20, 1
    %p101 = scmp.ne.s32.totalorder %s96, %s98
    %p102 = scmp.eq.s32.totalorder %s20, 0
    %p103 = por %p101, %p102
    %p104 = scmp.ne.s32.totalorder %s96, %s98
    %p105 = scmp.eq.s32.totalorder %s25, 1
    %p106 = por %p104, %p105
    %p107 = scmp.ne.s32.totalorder %s98, %s99
    %p108 = scmp.eq.s32.totalorder %s25, 0
    %p109 = por %p107, %p108
    %p110 = scmp.ne.s32.totalorder %s98, %s99
    %p111 = scmp.eq.s32.totalorder %s26, 1
    %p112 = por %p110, %p111
    %p114 = scmp.ne.s32.totalorder %s99, %s113
    %p115 = scmp.eq.s32.totalorder %s26, 0
    %p116 = por %p114, %p115
    %s118 = sadd.s32 %s117, 1
    %p121 = scmp.eq.s32.totalorder %s20, 1
    %p122 = scmp.ne.s32.totalorder %s117, %s119
    %p123 = scmp.eq.s32.totalorder %s20, 0
    %p124 = por %p122, %p123
    %p125 = scmp.ne.s32.totalorder %s117, %s119
    %p126 = scmp.eq.s32.totalorder %s25, 1
    %p127 = por %p125, %p126
    %p128 = scmp.ne.s32.totalorder %s119, %s120
    %p129 = scmp.eq.s32.totalorder %s25, 0
    %p130 = por %p128, %p129
    %p131 = scmp.ne.s32.totalorder %s119, %s120
    %p132 = scmp.eq.s32.totalorder %s26, 1
    %p133 = por %p131, %p132
    %p135 = scmp.ne.s32.totalorder %s120, %s134
    %p136 = scmp.eq.s32.totalorder %s26, 0
    %p137 = por %p135, %p136
    %s139 = sadd.s32 %s138, 1
    %p142 = scmp.eq.s32.totalorder %s20, 1
    %p143 = scmp.ne.s32.totalorder %s138, %s140
    %p144 = scmp.eq.s32.totalorder %s20, 0
    %p145 = por %p143, %p144
    %p146 = scmp.ne.s32.totalorder %s138, %s140
    %p147 = scmp.eq.s32.totalorder %s25, 1
    %p148 = por %p146, %p147
    %p149 = scmp.ne.s32.totalorder %s140, %s141
    %p150 = scmp.eq.s32.totalorder %s25, 0
    %p151 = por %p149, %p150
    %p152 = scmp.ne.s32.totalorder %s140, %s141
    %p153 = scmp.eq.s32.totalorder %s26, 1
    %p154 = por %p152, %p153
    %p156 = scmp.ne.s32.totalorder %s141, %s155
    %p157 = scmp.eq.s32.totalorder %s26, 0
    %p158 = por %p156, %p157
    %s160 = sadd.s32 %s159, 1
    %p163 = scmp.eq.s32.totalorder %s20, 1
    %p164 = scmp.ne.s32.totalorder %s159, %s161
    %p165 = scmp.eq.s32.totalorder %s20, 0
    %p166 = por %p164, %p165
    %p167 = scmp.ne.s32.totalorder %s159, %s161
    %p168 = scmp.eq.s32.totalorder %s25, 1
    %p169 = por %p167, %p168
    %p170 = scmp.ne.s32.totalorder %s161, %s162
    %p171 = scmp.eq.s32.totalorder %s25, 0
    %p172 = por %p170, %p171
    %p173 = scmp.ne.s32.totalorder %s161, %s162
    %p174 = scmp.eq.s32.totalorder %s26, 1
    %p175 = por %p173, %p174
    %p177 = scmp.ne.s32.totalorder %s162, %s176
    %p178 = scmp.eq.s32.totalorder %s26, 0
    %p179 = por %p177, %p178
    %s181 = sadd.s32 %s180, 1
    %p184 = scmp.eq.s32.totalorder %s20, 1
    %p185 = scmp.ne.s32.totalorder %s180, %s182
    %p186 = scmp.eq.s32.totalorder %s20, 0
    %p187 = por %p185, %p186
    %p188 = scmp.ne.s32.totalorder %s180, %s182
    %p189 = scmp.eq.s32.totalorder %s25, 1
    %p190 = por %p188, %p189
    %p191 = scmp.ne.s32.totalorder %s182, %s183
    %p192 = scmp.eq.s32.totalorder %s25, 0
    %p193 = por %p191, %p192
    %p194 = scmp.ne.s32.totalorder %s182, %s183
    %p195 = scmp.eq.s32.totalorder %s26, 1
    %p196 = por %p194, %p195
    %p198 = scmp.ne.s32.totalorder %s183, %s197
    %p199 = scmp.eq.s32.totalorder %s26, 0
    %p200 = por %p198, %p199
    %s202 = sadd.s32 %s201, 1
    %p205 = scmp.eq.s32.totalorder %s20, 1
    %p206 = scmp.ne.s32.totalorder %s201, %s203
    %p207 = scmp.eq.s32.totalorder %s20, 0
    %p208 = por %p206, %p207
    %p209 = scmp.ne.s32.totalorder %s201, %s203
    %p210 = scmp.eq.s32.totalorder %s25, 1
    %p211 = por %p209, %p210
    %p212 = scmp.ne.s32.totalorder %s203, %s204
    %p213 = scmp.eq.s32.totalorder %s25, 0
    %p214 = por %p212, %p213
    %p215 = scmp.ne.s32.totalorder %s203, %s204
    %p216 = scmp.eq.s32.totalorder %s26, 1
    %p217 = por %p215, %p216
    %p219 = scmp.ne.s32.totalorder %s204, %s218
    %p220 = scmp.eq.s32.totalorder %s26, 0
    %p221 = por %p219, %p220
    %s223 = sadd.s32 %s222, 1
    %p226 = scmp.eq.s32.totalorder %s20, 1
    %p227 = scmp.ne.s32.totalorder %s222, %s224
    %p228 = scmp.eq.s32.totalorder %s20, 0
    %p229 = por %p227, %p228
    %p230 = scmp.ne.s32.totalorder %s222, %s224
    %p231 = scmp.eq.s32.totalorder %s25, 1
    %p232 = por %p230, %p231
    %p233 = scmp.ne.s32.totalorder %s224, %s225
    %p234 = scmp.eq.s32.totalorder %s25, 0
    %p235 = por %p233, %p234
    %p236 = scmp.ne.s32.totalorder %s224, %s225
    %p237 = scmp.eq.s32.totalorder %s26, 1
    %p238 = por %p236, %p237
    %p240 = scmp.ne.s32.totalorder %s225, %s239
    %p241 = scmp.eq.s32.totalorder %s26, 0
    %p242 = por %p240, %p241
    %s244 = sadd.s32 %s243, 1
    %p247 = scmp.eq.s32.totalorder %s20, 1
    %p248 = scmp.ne.s32.totalorder %s243, %s245
    %p249 = scmp.eq.s32.totalorder %s20, 0
    %p250 = por %p248, %p249
    %p251 = scmp.ne.s32.totalorder %s243, %s245
    %p252 = scmp.eq.s32.totalorder %s25, 1
    %p253 = por %p251, %p252
    %p254 = scmp.ne.s32.totalorder %s245, %s246
    %p255 = scmp.eq.s32.totalorder %s25, 0
    %p256 = por %p254, %p255
    %p257 = scmp.ne.s32.totalorder %s245, %s246
    %p258 = scmp.eq.s32.totalorder %s26, 1
    %p259 = por %p257, %p258
    %p261 = scmp.ne.s32.totalorder %s246, %s260
    %p262 = scmp.eq.s32.totalorder %s26, 0
    %p263 = por %p261, %p262
    %s265 = sadd.s32 %s264, 1
    %p268 = scmp.eq.s32.totalorder %s20, 1
    %p269 = scmp.ne.s32.totalorder %s264, %s266
    %p270 = scmp.eq.s32.totalorder %s20, 0
    %p271 = por %p269, %p270
    %p272 = scmp.ne.s32.totalorder %s264, %s266
    %p273 = scmp.eq.s32.totalorder %s25, 1
    %p274 = por %p272, %p273
    %p275 = scmp.ne.s32.totalorder %s266, %s267
    %p276 = scmp.eq.s32.totalorder %s25, 0
    %p277 = por %p275, %p276
    %p278 = scmp.ne.s32.totalorder %s266, %s267
    %p279 = scmp.eq.s32.totalorder %s26, 1
    %p280 = por %p278, %p279
    %p282 = scmp.ne.s32.totalorder %s267, %s281
    %p283 = scmp.eq.s32.totalorder %s26, 0
    %p284 = por %p282, %p283
    %s286 = sadd.s32 %s285, 1
    %p289 = scmp.eq.s32.totalorder %s20, 1
    %p290 = scmp.ne.s32.totalorder %s285, %s287
    %p291 = scmp.eq.s32.totalorder %s20, 0
    %p292 = por %p290, %p291
    %p293 = scmp.ne.s32.totalorder %s285, %s287
    %p294 = scmp.eq.s32.totalorder %s25, 1
    %p295 = por %p293, %p294
    %p296 = scmp.ne.s32.totalorder %s287, %s288
    %p297 = scmp.eq.s32.totalorder %s25, 0
    %p298 = por %p296, %p297
    %p299 = scmp.ne.s32.totalorder %s287, %s288
    %p300 = scmp.eq.s32.totalorder %s26, 1
    %p301 = por %p299, %p300
    %p303 = scmp.ne.s32.totalorder %s288, %s302
    %p304 = scmp.eq.s32.totalorder %s26, 0
    %p305 = por %p303, %p304
    %s307 = sadd.s32 %s306, 1
    %p310 = scmp.eq.s32.totalorder %s20, 1
    %p311 = scmp.ne.s32.totalorder %s306, %s308
    %p312 = scmp.eq.s32.totalorder %s20, 0
    %p313 = por %p311, %p312
    %p314 = scmp.ne.s32.totalorder %s306, %s308
    %p315 = scmp.eq.s32.totalorder %s25, 1
    %p316 = por %p314, %p315
    %p317 = scmp.ne.s32.totalorder %s308, %s309
    %p318 = scmp.eq.s32.totalorder %s25, 0
    %p319 = por %p317, %p318
    %p320 = scmp.ne.s32.totalorder %s308, %s309
    %p321 = scmp.eq.s32.totalorder %s26, 1
    %p322 = por %p320, %p321
    %p324 = scmp.ne.s32.totalorder %s309, %s323
    %p325 = scmp.eq.s32.totalorder %s26, 0
    %p326 = por %p324, %p325
    %s327 = ssub.s32 %s20, %s27
    %p328 = scmp.eq.s32.totalorder %s327, 0
    %s330 = sadd.s32 %s329, 1
    %s331 = scalar_select %p328, %s329, %s330
    %p334 = pneg %p328
    %p335 = scmp.eq.s32.totalorder %s20, 1
    %p336 = por %p334, %p335
    %p337 = scmp.ne.s32.totalorder %s329, %s332
    %p338 = scmp.eq.s32.totalorder %s20, 0
    %p339 = por %p337, %p338
    %p340 = scmp.ne.s32.totalorder %s329, %s332
    %p341 = scmp.eq.s32.totalorder %s25, 1
    %p342 = por %p340, %p341
    %p343 = scmp.ne.s32.totalorder %s332, %s333
    %p344 = scmp.eq.s32.totalorder %s25, 0
    %p345 = por %p343, %p344
    %p346 = scmp.ne.s32.totalorder %s332, %s333
    %p347 = scmp.eq.s32.totalorder %s26, 1
    %p348 = por %p346, %p347
    %p350 = scmp.ne.s32.totalorder %s333, %s349
    %p351 = scmp.eq.s32.totalorder %s26, 0
    %p352 = por %p350, %p351
    %p353 = scmp.le.s32.totalorder 1, %s20
    %p354 = scmp.lt.s32.totalorder %s20, 3
    %p355 = pnand %p353, %p354
    %p356 = pneg %p355
    // Predicated region
    $region9: #{gcnn_rnn_forward.2} parent=5 // pred_check
      _
    $region10: #{gcnn_rnn_forward.2} parent=5 // pred_check_branch
      %358 = sbr.rel (%p355) target = $region12
    $region11: #{gcnn_rnn_forward.2} parent=5 // pred_region
      %s359 = ssub.s32 %s20, 1
      // Predicated region
      $region13: #{gcnn_rnn_forward.2} parent=11 // pred_check
        %p360 = pneg %p41
      $region14: #{gcnn_rnn_forward.2} parent=11 // pred_check_branch
        %362 = sbr.rel (%p360) target = $region16
      $region15: #{gcnn_rnn_forward.2} parent=11 // pred_region
        _
      $region16: #{gcnn_rnn_forward.2} parent=11 // pred_fallthru
        _
      // Predicated region
      $region17: #{gcnn_rnn_forward.2} parent=11 // pred_check
        %p363 = pneg %p88
      $region18: #{gcnn_rnn_forward.2} parent=11 // pred_check_branch
        %365 = sbr.rel (%p363) target = $region20
      $region19: #{gcnn_rnn_forward.2} parent=11 // pred_region
        _
      $region20: #{gcnn_rnn_forward.2} parent=11 // pred_fallthru
        _
      // Predicated region
      $region21: #{gcnn_rnn_forward.2} parent=11 // pred_check
        %p366 = pneg %p109
      $region22: #{gcnn_rnn_forward.2} parent=11 // pred_check_branch
        %368 = sbr.rel (%p366) target = $region24
      $region23: #{gcnn_rnn_forward.2} parent=11 // pred_region
        _
      $region24: #{gcnn_rnn_forward.2} parent=11 // pred_fallthru
        _
      // Predicated region
      $region25: #{gcnn_rnn_forward.2} parent=11 // pred_check
        %p369 = pneg %p130
      $region26: #{gcnn_rnn_forward.2} parent=11 // pred_check_branch
        %371 = sbr.rel (%p369) target = $region28
      $region27: #{gcnn_rnn_forward.2} parent=11 // pred_region
        _
      $region28: #{gcnn_rnn_forward.2} parent=11 // pred_fallthru
        _
      // Predicated region
      $region29: #{gcnn_rnn_forward.2} parent=11 // pred_check
        %p372 = pneg %p151
      $region30: #{gcnn_rnn_forward.2} parent=11 // pred_check_branch
        %374 = sbr.rel (%p372) target = $region32
      $region31: #{gcnn_rnn_forward.2} parent=11 // pred_region
        _
      $region32: #{gcnn_rnn_forward.2} parent=11 // pred_fallthru
        _
      // Predicated region
      $region33: #{gcnn_rnn_forward.2} parent=11 // pred_check
        %p375 = pneg %p172
      $region34: #{gcnn_rnn_forward.2} parent=11 // pred_check_branch
        %377 = sbr.rel (%p375) target = $region36
      $region35: #{gcnn_rnn_forward.2} parent=11 // pred_region
        _
      $region36: #{gcnn_rnn_forward.2} parent=11 // pred_fallthru
        _
      // Predicated region
      $region37: #{gcnn_rnn_forward.2} parent=11 // pred_check
        %p378 = pneg %p193
      $region38: #{gcnn_rnn_forward.2} parent=11 // pred_check_branch
        %380 = sbr.rel (%p378) target = $region40
      $region39: #{gcnn_rnn_forward.2} parent=11 // pred_region
        _
      $region40: #{gcnn_rnn_forward.2} parent=11 // pred_fallthru
        _
      // Predicated region
      $region41: #{gcnn_rnn_forward.2} parent=11 // pred_check
        %p381 = pneg %p214
      $region42: #{gcnn_rnn_forward.2} parent=11 // pred_check_branch
        %383 = sbr.rel (%p381) target = $region44
      $region43: #{gcnn_rnn_forward.2} parent=11 // pred_region
        _
      $region44: #{gcnn_rnn_forward.2} parent=11 // pred_fallthru
        _
      // Predicated region
      $region45: #{gcnn_rnn_forward.2} parent=11 // pred_check
        %p384 = pneg %p235
      $region46: #{gcnn_rnn_forward.2} parent=11 // pred_check_branch
        %386 = sbr.rel (%p384) target = $region48
      $region47: #{gcnn_rnn_forward.2} parent=11 // pred_region
        _
      $region48: #{gcnn_rnn_forward.2} parent=11 // pred_fallthru
        _
      // Predicated region
      $region49: #{gcnn_rnn_forward.2} parent=11 // pred_check
        %p387 = pneg %p256
      $region50: #{gcnn_rnn_forward.2} parent=11 // pred_check_branch
        %389 = sbr.rel (%p387) target = $region52
      $region51: #{gcnn_rnn_forward.2} parent=11 // pred_region
        _
      $region52: #{gcnn_rnn_forward.2} parent=11 // pred_fallthru
        _
      // Predicated region
      $region53: #{gcnn_rnn_forward.2} parent=11 // pred_check
        %p390 = pneg %p277
      $region54: #{gcnn_rnn_forward.2} parent=11 // pred_check_branch
        %392 = sbr.rel (%p390) target = $region56
      $region55: #{gcnn_rnn_forward.2} parent=11 // pred_region
        _
      $region56: #{gcnn_rnn_forward.2} parent=11 // pred_fallthru
        _
      // Predicated region
      $region57: #{gcnn_rnn_forward.2} parent=11 // pred_check
        %p393 = pneg %p298
      $region58: #{gcnn_rnn_forward.2} parent=11 // pred_check_branch
        %395 = sbr.rel (%p393) target = $region60
      $region59: #{gcnn_rnn_forward.2} parent=11 // pred_region
        _
      $region60: #{gcnn_rnn_forward.2} parent=11 // pred_fallthru
        _
      // Predicated region
      $region61: #{gcnn_rnn_forward.2} parent=11 // pred_check
        %p396 = pneg %p319
      $region62: #{gcnn_rnn_forward.2} parent=11 // pred_check_branch
        %398 = sbr.rel (%p396) target = $region64
      $region63: #{gcnn_rnn_forward.2} parent=11 // pred_region
        _
      $region64: #{gcnn_rnn_forward.2} parent=11 // pred_fallthru
        _
    $region12: #{gcnn_rnn_forward.2} parent=5 // pred_fallthru
      _
    %p399 = scmp.lt.s32.totalorder %s20, 2
    // Predicated region
    $region65: #{gcnn_rnn_forward.2} parent=5 // pred_check
      %p400 = pneg %p399
    $region66: #{gcnn_rnn_forward.2} parent=5 // pred_check_branch
      %402 = sbr.rel (%p400) target = $region68
    $region67: #{gcnn_rnn_forward.2} parent=5 // pred_region
      // Predicated region
      $region69: #{gcnn_rnn_forward.2} parent=67 // pred_check
        %p403 = pneg %p61
      $region70: #{gcnn_rnn_forward.2} parent=67 // pred_check_branch
        %405 = sbr.rel (%p403) target = $region72
      $region71: #{gcnn_rnn_forward.2} parent=67 // pred_region
        %s406 = smul.u32 4, %s20
        %p407 = scmp.lt.s32.totalorder %s406, 7
        %s408 = scalar_select %p407, %s406, 7
        %s409 = smul.addr %s408, 8
        %s410 = scalar_lea.vmem %s1, %s409
        %s411 = smul.u32 4, %s20
      $region72: #{gcnn_rnn_forward.2} parent=67 // pred_fallthru
        _
    $region68: #{gcnn_rnn_forward.2} parent=5 // pred_fallthru
      _
    %p412 = scmp.le.s32.totalorder 1, %s20
    %p413 = scmp.lt.s32.totalorder %s20, 3
    %p414 = pnand %p412, %p413
    %p415 = pneg %p414
    // Predicated region
    $region73: #{gcnn_rnn_forward.2} parent=5 // pred_check
      _
    $region74: #{gcnn_rnn_forward.2} parent=5 // pred_check_branch
      %417 = sbr.rel (%p414) target = $region76
    $region75: #{gcnn_rnn_forward.2} parent=5 // pred_region
      %s418 = ssub.s32 %s20, 1
      %p419 = pneg %p41
      %p420 = pneg %p38
      %s421 = smul.u32 4, %s25
      %p422 = scmp.lt.s32.totalorder %s421, 7
      %s423 = scalar_select %p422, %s421, 7
      %s424 = smul.addr %s423, 8
      %s425 = scalar_lea.vmem %s1, %s424
      %p426 = pneg %p67
      %p427 = pneg %p64
      %p428 = pneg %p88
      %p429 = pneg %p85
      %p430 = pneg %p109
      %p431 = pneg %p106
      %p432 = pneg %p130
      %p433 = pneg %p127
      %p434 = pneg %p151
      %p435 = pneg %p148
      %p436 = pneg %p172
      %p437 = pneg %p169
      %p438 = pneg %p193
      %p439 = pneg %p190
      %p440 = pneg %p214
      %p441 = pneg %p211
      %p442 = pneg %p235
      %p443 = pneg %p232
      %p444 = pneg %p256
      %p445 = pneg %p253
      %p446 = pneg %p277
      %p447 = pneg %p274
      %p448 = pneg %p298
      %p449 = pneg %p295
      %p450 = pneg %p319
      %p451 = pneg %p316
      %p452 = pneg %p345
      %p453 = pneg %p342
      %s454 = smul.u32 4, %s25
      %p455 = scmp.lt.s32.totalorder %s454, 7
      %s456 = scalar_select %p455, %s454, 7
      %s457 = smul.addr %s456, 8
      %s458 = scalar_lea.vmem %s14, %s457
      %s459 = smul.u32 4, %s25
      %p460 = scmp.lt.s32.totalorder %s459, 7
      %s461 = scalar_select %p460, %s459, 7
      %s462 = smul.addr %s461, 8
      %s463 = scalar_lea.vmem %s1, %s462
      %s464 = smul.u32 4, %s25
      %s465 = smul.u32 4, %s25
      %p466 = scmp.lt.s32.totalorder %s465, 7
      %s467 = scalar_select %p466, %s465, 7
      %s468 = smul.addr %s467, 8
      %s469 = scalar_lea.vmem %s14, %s468
      %s470 = smul.u32 4, %s25
      %v471 = vld [vmem:[%s0] sm:$0xff]
      %v472 = vld [vmem:[%s463] sm:$0xff]
      %v473 = vld [vmem:[%s463 + $0x8] sm:$0xff]
      %v474 = vld [vmem:[%s463 + $0x10] sm:$0xff]
      %v475 = vld [vmem:[%s463 + $0x18] sm:$0xff]
      %v476 = vld [vmem:[%s2] sm:$0xf]
      %vm477 = vcmask 31744
      %v479 = vsel %vm477, %v472, 0
      %v482 = vsel %vm477, %v473, 0
      %v485 = vsel %vm477, %v474, 0
      %v488 = vsel %vm477, %v475, 0
      %vm490 = vcmask 1043456
      %v492 = vsel %vm490, %v476, 0
      %494 = vmatprep.subr.mxu0 0.0
      %495 = vmatpush1.msra.mxu0 %v492
      %496 = vmatprep.subr.mxu0 0.0
      %497 = vmatpush1.msra.mxu0 0.0
      %498 = vmatprep.subr.mxu0 0.0
      %499 = vmatpush1.msra.mxu0 0.0
      %500 = vmatprep.subr.mxu0 0.0
      %501 = vmatpush1.msra.mxu0 0.0
      %502 = vmatprep.subr.mxu0 0.0
      %503 = vmatpush1.msra.mxu0 0.0
      %504 = vmatprep.subr.mxu0 0.0
      %505 = vmatpush1.msra.mxu0 0.0
      %506 = vmatprep.subr.mxu0 0.0
      %507 = vmatpush1.msra.mxu0 0.0
      %508 = vmatprep.subr.mxu0 0.0
      %509 = vmatpush1.msra.mxu0 0.0
      %510 = vmatprep.subr.mxu0 0.0
      %511 = vmatpush1.msra.mxu0 0.0
      %512 = vmatprep.subr.mxu0 0.0
      %513 = vmatpush1.msra.mxu0 0.0
      %514 = vmatprep.subr.mxu0 0.0
      %515 = vmatpush1.msra.mxu0 0.0
      %516 = vmatprep.subr.mxu0 0.0
      %517 = vmatpush1.msra.mxu0 0.0
      %518 = vmatprep.subr.mxu0 0.0
      %519 = vmatpush1.msra.mxu0 0.0
      %520 = vmatprep.subr.mxu0 0.0
      %521 = vmatpush1.msra.mxu0 0.0
      %522 = vmatprep.subr.mxu0 0.0
      %523 = vmatpush1.msra.mxu0 0.0
      %524 = vmatprep.subr.mxu0 0.0
      %525 = vmatpush1.msra.mxu0 0.0
      %526 = vmatprep.subr.mxu0 0.0
      %527 = vmatpush1.msra.mxu0 0.0
      %528 = vmatprep.subr.mxu0 0.0
      %529 = vmatpush1.msra.mxu0 0.0
      %530 = vmatprep.subr.mxu0 0.0
      %531 = vmatpush1.msra.mxu0 0.0
      %532 = vmatprep.subr.mxu0 0.0
      %533 = vmatpush1.msra.mxu0 0.0
      %534 = vmatprep.subr.mxu0 0.0
      %535 = vmatpush1.msra.mxu0 0.0
      %536 = vmatprep.subr.mxu0 0.0
      %537 = vmatpush1.msra.mxu0 0.0
      %538 = vmatprep.subr.mxu0 0.0
      %539 = vmatpush1.msra.mxu0 0.0
      %540 = vmatprep.subr.mxu0 0.0
      %541 = vmatpush1.msra.mxu0 0.0
      %542 = vmatprep.subr.mxu0 0.0
      %543 = vmatpush1.msra.mxu0 0.0
      %544 = vmatprep.subr.mxu0 0.0
      %545 = vmatpush1.msra.mxu0 0.0
      %546 = vmatprep.subr.mxu0 0.0
      %547 = vmatpush1.msra.mxu0 0.0
      %548 = vmatprep.subr.mxu0 0.0
      %549 = vmatpush1.msra.mxu0 0.0
      %550 = vmatprep.subr.mxu0 0.0
      %551 = vmatpush1.msra.mxu0 0.0
      %552 = vmatprep.subr.mxu0 0.0
      %553 = vmatpush1.msra.mxu0 0.0
      %554 = vmatprep.subr.mxu0 0.0
      %555 = vmatpush1.msra.mxu0 0.0
      %556 = vmatprep.subr.mxu0 0.0
      %557 = vmatpush1.msra.mxu0 0.0
      %558 = vmatprep.mubr.f32.mxu0 0.0
      %559 = vmatmul.mubr.f32.gmra.mrb[0].mxu0 %v479
      %v560 = vpop.f32.mrb[0].mxu0
      %v561 = vadd.f32 0.0, %v560
      %v562 = vpop.f32.mrb[0].mxu0
      %563 = vmatprep.mubr.f32.mxu0 0.0
      %564 = vmatmul.mubr.f32.gmra.mrb[0].mxu0 %v482
      %v565 = vpop.f32.mrb[0].mxu0
      %v566 = vadd.f32 0.0, %v565
      %v567 = vpop.f32.mrb[0].mxu0
      %568 = vmatprep.mubr.f32.mxu0 0.0
      %569 = vmatmul.mubr.f32.gmra.mrb[0].mxu0 %v485
      %v570 = vpop.f32.mrb[0].mxu0
      %v571 = vadd.f32 0.0, %v570
      %v572 = vpop.f32.mrb[0].mxu0
      %573 = vmatprep.mubr.f32.mxu0 0.0
      %574 = vmatmul.mubr.f32.gmra.mrb[0].mxu0 %v488
      %v575 = vpop.f32.mrb[0].mxu0
      %v576 = vadd.f32 0.0, %v575
      %v577 = vpop.f32.mrb[0].mxu0
      %578 = vdwg.mxu0
      %vm579 = vcmask 64512
      %v581 = vsel %vm579, %v471, 0
      %583 = vmatprep.subr.mxu0 0.0
      %584 = vmatpush1.msra.mxu0 %v561
      %585 = vmatprep.subr.mxu0 0.0
      %586 = vmatpush1.msra.mxu0 0.0
      %587 = vmatprep.subr.mxu0 0.0
      %588 = vmatpush1.msra.mxu0 0.0
      %589 = vmatprep.subr.mxu0 0.0
      %590 = vmatpush1.msra.mxu0 0.0
      %591 = vmatprep.subr.mxu0 0.0
      %592 = vmatpush1.msra.mxu0 0.0
      %593 = vmatprep.subr.mxu0 0.0
      %594 = vmatpush1.msra.mxu0 0.0
      %595 = vmatprep.subr.mxu0 0.0
      %596 = vmatpush1.msra.mxu0 0.0
      %597 = vmatprep.subr.mxu0 0.0
      %598 = vmatpush1.msra.mxu0 0.0
      %599 = vmatprep.subr.mxu0 0.0
      %600 = vmatpush1.msra.mxu0 0.0
      %601 = vmatprep.subr.mxu0 0.0
      %602 = vmatpush1.msra.mxu0 0.0
      %603 = vmatprep.subr.mxu0 0.0
      %604 = vmatpush1.msra.mxu0 0.0
      %605 = vmatprep.subr.mxu0 0.0
      %606 = vmatpush1.msra.mxu0 0.0
      %607 = vmatprep.subr.mxu0 0.0
      %608 = vmatpush1.msra.mxu0 0.0
      %609 = vmatprep.subr.mxu0 0.0
      %610 = vmatpush1.msra.mxu0 0.0
      %611 = vmatprep.subr.mxu0 0.0
      %612 = vmatpush1.msra.mxu0 0.0
      %613 = vmatprep.subr.mxu0 0.0
      %614 = vmatpush1.msra.mxu0 0.0
      %615 = vmatprep.subr.mxu0 0.0
      %616 = vmatpush1.msra.mxu0 0.0
      %617 = vmatprep.subr.mxu0 0.0
      %618 = vmatpush1.msra.mxu0 0.0
      %619 = vmatprep.subr.mxu0 0.0
      %620 = vmatpush1.msra.mxu0 0.0
      %621 = vmatprep.subr.mxu0 0.0
      %622 = vmatpush1.msra.mxu0 0.0
      %623 = vmatprep.subr.mxu0 0.0
      %624 = vmatpush1.msra.mxu0 0.0
      %625 = vmatprep.subr.mxu0 0.0
      %626 = vmatpush1.msra.mxu0 0.0
      %627 = vmatprep.subr.mxu0 0.0
      %628 = vmatpush1.msra.mxu0 0.0
      %629 = vmatprep.subr.mxu0 0.0
      %630 = vmatpush1.msra.mxu0 0.0
      %631 = vmatprep.subr.mxu0 0.0
      %632 = vmatpush1.msra.mxu0 0.0
      %633 = vmatprep.subr.mxu0 0.0
      %634 = vmatpush1.msra.mxu0 0.0
      %635 = vmatprep.subr.mxu0 0.0
      %636 = vmatpush1.msra.mxu0 0.0
      %637 = vmatprep.subr.mxu0 0.0
      %638 = vmatpush1.msra.mxu0 0.0
      %639 = vmatprep.subr.mxu0 0.0
      %640 = vmatpush1.msra.mxu0 0.0
      %641 = vmatprep.subr.mxu0 0.0
      %642 = vmatpush1.msra.mxu0 0.0
      %643 = vmatprep.subr.mxu0 0.0
      %644 = vmatpush1.msra.mxu0 0.0
      %645 = vmatprep.subr.mxu0 0.0
      %646 = vmatpush1.msra.mxu0 0.0
      %647 = vmatprep.mubr.f32.mxu0 0.0
      %648 = vmatmul.mubr.f32.gmra.mrb[0].mxu0 %v581
      %v649 = vpop.f32.mrb[0].mxu0
      %v650 = vadd.f32 0.0, %v649
      %v651 = vpop.f32.mrb[0].mxu0
      %652 = vdwg.mxu0
      %653 = vmatprep.subr.mxu0 0.0
      %654 = vmatpush1.msra.mxu0 %v566
      %655 = vmatprep.subr.mxu0 0.0
      %656 = vmatpush1.msra.mxu0 0.0
      %657 = vmatprep.subr.mxu0 0.0
      %658 = vmatpush1.msra.mxu0 0.0
      %659 = vmatprep.subr.mxu0 0.0
      %660 = vmatpush1.msra.mxu0 0.0
      %661 = vmatprep.subr.mxu0 0.0
      %662 = vmatpush1.msra.mxu0 0.0
      %663 = vmatprep.subr.mxu0 0.0
      %664 = vmatpush1.msra.mxu0 0.0
      %665 = vmatprep.subr.mxu0 0.0
      %666 = vmatpush1.msra.mxu0 0.0
      %667 = vmatprep.subr.mxu0 0.0
      %668 = vmatpush1.msra.mxu0 0.0
      %669 = vmatprep.subr.mxu0 0.0
      %670 = vmatpush1.msra.mxu0 0.0
      %671 = vmatprep.subr.mxu0 0.0
      %672 = vmatpush1.msra.mxu0 0.0
      %673 = vmatprep.subr.mxu0 0.0
      %674 = vmatpush1.msra.mxu0 0.0
      %675 = vmatprep.subr.mxu0 0.0
      %676 = vmatpush1.msra.mxu0 0.0
      %677 = vmatprep.subr.mxu0 0.0
      %678 = vmatpush1.msra.mxu0 0.0
      %679 = vmatprep.subr.mxu0 0.0
      %680 = vmatpush1.msra.mxu0 0.0
      %681 = vmatprep.subr.mxu0 0.0
      %682 = vmatpush1.msra.mxu0 0.0
      %683 = vmatprep.subr.mxu0 0.0
      %684 = vmatpush1.msra.mxu0 0.0
      %685 = vmatprep.subr.mxu0 0.0
      %686 = vmatpush1.msra.mxu0 0.0
      %687 = vmatprep.subr.mxu0 0.0
      %688 = vmatpush1.msra.mxu0 0.0
      %689 = vmatprep.subr.mxu0 0.0
      %690 = vmatpush1.msra.mxu0 0.0
      %691 = vmatprep.subr.mxu0 0.0
      %692 = vmatpush1.msra.mxu0 0.0
      %693 = vmatprep.subr.mxu0 0.0
      %694 = vmatpush1.msra.mxu0 0.0
      %695 = vmatprep.subr.mxu0 0.0
      %696 = vmatpush1.msra.mxu0 0.0
      %697 = vmatprep.subr.mxu0 0.0
      %698 = vmatpush1.msra.mxu0 0.0
      %699 = vmatprep.subr.mxu0 0.0
      %700 = vmatpush1.msra.mxu0 0.0
      %701 = vmatprep.subr.mxu0 0.0
      %702 = vmatpush1.msra.mxu0 0.0
      %703 = vmatprep.subr.mxu0 0.0
      %704 = vmatpush1.msra.mxu0 0.0
      %705 = vmatprep.subr.mxu0 0.0
      %706 = vmatpush1.msra.mxu0 0.0
      %707 = vmatprep.subr.mxu0 0.0
      %708 = vmatpush1.msra.mxu0 0.0
      %709 = vmatprep.subr.mxu0 0.0
      %710 = vmatpush1.msra.mxu0 0.0
      %711 = vmatprep.subr.mxu0 0.0
      %712 = vmatpush1.msra.mxu0 0.0
      %713 = vmatprep.subr.mxu0 0.0
      %714 = vmatpush1.msra.mxu0 0.0
      %715 = vmatprep.subr.mxu0 0.0
      %716 = vmatpush1.msra.mxu0 0.0
      %717 = vmatprep.mubr.f32.mxu0 0.0
      %718 = vmatmul.mubr.f32.gmra.mrb[0].mxu0 %v581
      %v719 = vpop.f32.mrb[0].mxu0
      %v720 = vadd.f32 0.0, %v719
      %v721 = vpop.f32.mrb[0].mxu0
      %722 = vdwg.mxu0
      %723 = vmatprep.subr.mxu0 0.0
      %724 = vmatpush1.msra.mxu0 %v571
      %725 = vmatprep.subr.mxu0 0.0
      %726 = vmatpush1.msra.mxu0 0.0
      %727 = vmatprep.subr.mxu0 0.0
      %728 = vmatpush1.msra.mxu0 0.0
      %729 = vmatprep.subr.mxu0 0.0
      %730 = vmatpush1.msra.mxu0 0.0
      %731 = vmatprep.subr.mxu0 0.0
      %732 = vmatpush1.msra.mxu0 0.0
      %733 = vmatprep.subr.mxu0 0.0
      %734 = vmatpush1.msra.mxu0 0.0
      %735 = vmatprep.subr.mxu0 0.0
      %736 = vmatpush1.msra.mxu0 0.0
      %737 = vmatprep.subr.mxu0 0.0
      %738 = vmatpush1.msra.mxu0 0.0
      %739 = vmatprep.subr.mxu0 0.0
      %740 = vmatpush1.msra.mxu0 0.0
      %741 = vmatprep.subr.mxu0 0.0
      %742 = vmatpush1.msra.mxu0 0.0
      %743 = vmatprep.subr.mxu0 0.0
      %744 = vmatpush1.msra.mxu0 0.0
      %745 = vmatprep.subr.mxu0 0.0
      %746 = vmatpush1.msra.mxu0 0.0
      %747 = vmatprep.subr.mxu0 0.0
      %748 = vmatpush1.msra.mxu0 0.0
      %749 = vmatprep.subr.mxu0 0.0
      %750 = vmatpush1.msra.mxu0 0.0
      %751 = vmatprep.subr.mxu0 0.0
      %752 = vmatpush1.msra.mxu0 0.0
      %753 = vmatprep.subr.mxu0 0.0
      %754 = vmatpush1.msra.mxu0 0.0
      %755 = vmatprep.subr.mxu0 0.0
      %756 = vmatpush1.msra.mxu0 0.0
      %757 = vmatprep.subr.mxu0 0.0
      %758 = vmatpush1.msra.mxu0 0.0
      %759 = vmatprep.subr.mxu0 0.0
      %760 = vmatpush1.msra.mxu0 0.0
      %761 = vmatprep.subr.mxu0 0.0
      %762 = vmatpush1.msra.mxu0 0.0
      %763 = vmatprep.subr.mxu0 0.0
      %764 = vmatpush1.msra.mxu0 0.0
      %765 = vmatprep.subr.mxu0 0.0
      %766 = vmatpush1.msra.mxu0 0.0
      %767 = vmatprep.subr.mxu0 0.0
      %768 = vmatpush1.msra.mxu0 0.0
      %769 = vmatprep.subr.mxu0 0.0
      %770 = vmatpush1.msra.mxu0 0.0
      %771 = vmatprep.subr.mxu0 0.0
      %772 = vmatpush1.msra.mxu0 0.0
      %773 = vmatprep.subr.mxu0 0.0
      %774 = vmatpush1.msra.mxu0 0.0
      %775 = vmatprep.subr.mxu0 0.0
      %776 = vmatpush1.msra.mxu0 0.0
      %777 = vmatprep.subr.mxu0 0.0
      %778 = vmatpush1.msra.mxu0 0.0
      %779 = vmatprep.subr.mxu0 0.0
      %780 = vmatpush1.msra.mxu0 0.0
      %781 = vmatprep.subr.mxu0 0.0
      %782 = vmatpush1.msra.mxu0 0.0
      %783 = vmatprep.subr.mxu0 0.0
      %784 = vmatpush1.msra.mxu0 0.0
      %785 = vmatprep.subr.mxu0 0.0
      %786 = vmatpush1.msra.mxu0 0.0
      %787 = vmatprep.mubr.f32.mxu0 0.0
      %788 = vmatmul.mubr.f32.gmra.mrb[0].mxu0 %v581
      %v789 = vpop.f32.mrb[0].mxu0
      %v790 = vadd.f32 0.0, %v789
      %v791 = vpop.f32.mrb[0].mxu0
      %792 = vdwg.mxu0
      %793 = vmatprep.subr.mxu0 0.0
      %794 = vmatpush1.msra.mxu0 %v576
      %795 = vmatprep.subr.mxu0 0.0
      %796 = vmatpush1.msra.mxu0 0.0
      %797 = vmatprep.subr.mxu0 0.0
      %798 = vmatpush1.msra.mxu0 0.0
      %799 = vmatprep.subr.mxu0 0.0
      %800 = vmatpush1.msra.mxu0 0.0
      %801 = vmatprep.subr.mxu0 0.0
      %802 = vmatpush1.msra.mxu0 0.0
      %803 = vmatprep.subr.mxu0 0.0
      %804 = vmatpush1.msra.mxu0 0.0
      %805 = vmatprep.subr.mxu0 0.0
      %806 = vmatpush1.msra.mxu0 0.0
      %807 = vmatprep.subr.mxu0 0.0
      %808 = vmatpush1.msra.mxu0 0.0
      %809 = vmatprep.subr.mxu0 0.0
      %810 = vmatpush1.msra.mxu0 0.0
      %811 = vmatprep.subr.mxu0 0.0
      %812 = vmatpush1.msra.mxu0 0.0
      %813 = vmatprep.subr.mxu0 0.0
      %814 = vmatpush1.msra.mxu0 0.0
      %815 = vmatprep.subr.mxu0 0.0
      %816 = vmatpush1.msra.mxu0 0.0
      %817 = vmatprep.subr.mxu0 0.0
      %818 = vmatpush1.msra.mxu0 0.0
      %819 = vmatprep.subr.mxu0 0.0
      %820 = vmatpush1.msra.mxu0 0.0
      %821 = vmatprep.subr.mxu0 0.0
      %822 = vmatpush1.msra.mxu0 0.0
      %823 = vmatprep.subr.mxu0 0.0
      %824 = vmatpush1.msra.mxu0 0.0
      %825 = vmatprep.subr.mxu0 0.0
      %826 = vmatpush1.msra.mxu0 0.0
      %827 = vmatprep.subr.mxu0 0.0
      %828 = vmatpush1.msra.mxu0 0.0
      %829 = vmatprep.subr.mxu0 0.0
      %830 = vmatpush1.msra.mxu0 0.0
      %831 = vmatprep.subr.mxu0 0.0
      %832 = vmatpush1.msra.mxu0 0.0
      %833 = vmatprep.subr.mxu0 0.0
      %834 = vmatpush1.msra.mxu0 0.0
      %835 = vmatprep.subr.mxu0 0.0
      %836 = vmatpush1.msra.mxu0 0.0
      %837 = vmatprep.subr.mxu0 0.0
      %838 = vmatpush1.msra.mxu0 0.0
      %839 = vmatprep.subr.mxu0 0.0
      %840 = vmatpush1.msra.mxu0 0.0
      %841 = vmatprep.subr.mxu0 0.0
      %842 = vmatpush1.msra.mxu0 0.0
      %843 = vmatprep.subr.mxu0 0.0
      %844 = vmatpush1.msra.mxu0 0.0
      %845 = vmatprep.subr.mxu0 0.0
      %846 = vmatpush1.msra.mxu0 0.0
      %847 = vmatprep.subr.mxu0 0.0
      %848 = vmatpush1.msra.mxu0 0.0
      %849 = vmatprep.subr.mxu0 0.0
      %850 = vmatpush1.msra.mxu0 0.0
      %851 = vmatprep.subr.mxu0 0.0
      %852 = vmatpush1.msra.mxu0 0.0
      %853 = vmatprep.subr.mxu0 0.0
      %854 = vmatpush1.msra.mxu0 0.0
      %855 = vmatprep.subr.mxu0 0.0
      %856 = vmatpush1.msra.mxu0 0.0
      %857 = vmatprep.mubr.f32.mxu0 0.0
      %858 = vmatmul.mubr.f32.gmra.mrb[0].mxu0 %v581
      %v859 = vpop.f32.mrb[0].mxu0
      %v860 = vadd.f32 0.0, %v859
      %v861 = vpop.f32.mrb[0].mxu0
      %862 = vdwg.mxu0
      %v863 = vld [vmem:[%s3] sm:$0x1]
      %v865 = vlaneseq
      %v866 = vshrl.u32 %v865, 7
      %v867 = vsub.s32 0, %v866
      %v868 = vrot.slane %v863, %v867
      %v870 = vadd.f32 %v650, %v868
      %v871 = vadd.f32 %v720, %v868
      %v872 = vadd.f32 %v790, %v868
      %v873 = vadd.f32 %v860, %v868
      %v874 = vmax.f32 %v870, 0.0
      %v875 = vmax.f32 %v871, 0.0
      %v876 = vmax.f32 %v872, 0.0
      %v877 = vmax.f32 %v873, 0.0
      %v878 = vld [vmem:[%s4] sm:$0xff]
      %v880 = vsel %vm579, %v874, 0
      %v883 = vsel %vm579, %v875, 0
      %v886 = vsel %vm579, %v876, 0
      %v889 = vsel %vm579, %v877, 0
      %891 = vmatprep.subr.mxu0 0.0
      %892 = vmatpush1.msra.mxu0 %v878
      %893 = vmatprep.subr.mxu0 0.0
      %894 = vmatpush1.msra.mxu0 0.0
      %895 = vmatprep.subr.mxu0 0.0
      %896 = vmatpush1.msra.mxu0 0.0
      %897 = vmatprep.subr.mxu0 0.0
      %898 = vmatpush1.msra.mxu0 0.0
      %899 = vmatprep.subr.mxu0 0.0
      %900 = vmatpush1.msra.mxu0 0.0
      %901 = vmatprep.subr.mxu0 0.0
      %902 = vmatpush1.msra.mxu0 0.0
      %903 = vmatprep.subr.mxu0 0.0
      %904 = vmatpush1.msra.mxu0 0.0
      %905 = vmatprep.subr.mxu0 0.0
      %906 = vmatpush1.msra.mxu0 0.0
      %907 = vmatprep.subr.mxu0 0.0
      %908 = vmatpush1.msra.mxu0 0.0
      %909 = vmatprep.subr.mxu0 0.0
      %910 = vmatpush1.msra.mxu0 0.0
      %911 = vmatprep.subr.mxu0 0.0
      %912 = vmatpush1.msra.mxu0 0.0
      %913 = vmatprep.subr.mxu0 0.0
      %914 = vmatpush1.msra.mxu0 0.0
      %915 = vmatprep.subr.mxu0 0.0
      %916 = vmatpush1.msra.mxu0 0.0
      %917 = vmatprep.subr.mxu0 0.0
      %918 = vmatpush1.msra.mxu0 0.0
      %919 = vmatprep.subr.mxu0 0.0
      %920 = vmatpush1.msra.mxu0 0.0
      %921 = vmatprep.subr.mxu0 0.0
      %922 = vmatpush1.msra.mxu0 0.0
      %923 = vmatprep.subr.mxu0 0.0
      %924 = vmatpush1.msra.mxu0 0.0
      %925 = vmatprep.subr.mxu0 0.0
      %926 = vmatpush1.msra.mxu0 0.0
      %927 = vmatprep.subr.mxu0 0.0
      %928 = vmatpush1.msra.mxu0 0.0
      %929 = vmatprep.subr.mxu0 0.0
      %930 = vmatpush1.msra.mxu0 0.0
      %931 = vmatprep.subr.mxu0 0.0
      %932 = vmatpush1.msra.mxu0 0.0
      %933 = vmatprep.subr.mxu0 0.0
      %934 = vmatpush1.msra.mxu0 0.0
      %935 = vmatprep.subr.mxu0 0.0
      %936 = vmatpush1.msra.mxu0 0.0
      %937 = vmatprep.subr.mxu0 0.0
      %938 = vmatpush1.msra.mxu0 0.0
      %939 = vmatprep.subr.mxu0 0.0
      %940 = vmatpush1.msra.mxu0 0.0
      %941 = vmatprep.subr.mxu0 0.0
      %942 = vmatpush1.msra.mxu0 0.0
      %943 = vmatprep.subr.mxu0 0.0
      %944 = vmatpush1.msra.mxu0 0.0
      %945 = vmatprep.subr.mxu0 0.0
      %946 = vmatpush1.msra.mxu0 0.0
      %947 = vmatprep.subr.mxu0 0.0
      %948 = vmatpush1.msra.mxu0 0.0
      %949 = vmatprep.subr.mxu0 0.0
      %950 = vmatpush1.msra.mxu0 0.0
      %951 = vmatprep.subr.mxu0 0.0
      %952 = vmatpush1.msra.mxu0 0.0
      %953 = vmatprep.subr.mxu0 0.0
      %954 = vmatpush1.msra.mxu0 0.0
      %955 = vmatprep.mubr.f32.mxu0 0.0
      %956 = vmatmul.mubr.f32.gmra.mrb[0].mxu0 %v880
      %v957 = vpop.f32.mrb[0].mxu0
      %v958 = vadd.f32 0.0, %v957
      %v959 = vpop.f32.mrb[0].mxu0
      %960 = vmatprep.mubr.f32.mxu0 0.0
      %961 = vmatmul.mubr.f32.gmra.mrb[0].mxu0 %v883
      %v962 = vpop.f32.mrb[0].mxu0
      %v963 = vadd.f32 0.0, %v962
      %v964 = vpop.f32.mrb[0].mxu0
      %965 = vmatprep.mubr.f32.mxu0 0.0
      %966 = vmatmul.mubr.f32.gmra.mrb[0].mxu0 %v886
      %v967 = vpop.f32.mrb[0].mxu0
      %v968 = vadd.f32 0.0, %v967
      %v969 = vpop.f32.mrb[0].mxu0
      %970 = vmatprep.mubr.f32.mxu0 0.0
      %971 = vmatmul.mubr.f32.gmra.mrb[0].mxu0 %v889
      %v972 = vpop.f32.mrb[0].mxu0
      %v973 = vadd.f32 0.0, %v972
      %v974 = vpop.f32.mrb[0].mxu0
      %975 = vdwg.mxu0
      %976 = vmatprep.subr.mxu0 0.0
      %977 = vmatpush1.msra.mxu0 %v958
      %978 = vmatprep.subr.mxu0 0.0
      %979 = vmatpush1.msra.mxu0 0.0
      %980 = vmatprep.subr.mxu0 0.0
      %981 = vmatpush1.msra.mxu0 0.0
      %982 = vmatprep.subr.mxu0 0.0
      %983 = vmatpush1.msra.mxu0 0.0
      %984 = vmatprep.subr.mxu0 0.0
      %985 = vmatpush1.msra.mxu0 0.0
      %986 = vmatprep.subr.mxu0 0.0
      %987 = vmatpush1.msra.mxu0 0.0
      %988 = vmatprep.subr.mxu0 0.0
      %989 = vmatpush1.msra.mxu0 0.0
      %990 = vmatprep.subr.mxu0 0.0
      %991 = vmatpush1.msra.mxu0 0.0
      %992 = vmatprep.subr.mxu0 0.0
      %993 = vmatpush1.msra.mxu0 0.0
      %994 = vmatprep.subr.mxu0 0.0
      %995 = vmatpush1.msra.mxu0 0.0
      %996 = vmatprep.subr.mxu0 0.0
      %997 = vmatpush1.msra.mxu0 0.0
      %998 = vmatprep.subr.mxu0 0.0
      %999 = vmatpush1.msra.mxu0 0.0
      %1000 = vmatprep.subr.mxu0 0.0
      %1001 = vmatpush1.msra.mxu0 0.0
      %1002 = vmatprep.subr.mxu0 0.0
      %1003 = vmatpush1.msra.mxu0 0.0
      %1004 = vmatprep.subr.mxu0 0.0
      %1005 = vmatpush1.msra.mxu0 0.0
      %1006 = vmatprep.subr.mxu0 0.0
      %1007 = vmatpush1.msra.mxu0 0.0
      %1008 = vmatprep.subr.mxu0 0.0
      %1009 = vmatpush1.msra.mxu0 0.0
      %1010 = vmatprep.subr.mxu0 0.0
      %1011 = vmatpush1.msra.mxu0 0.0
      %1012 = vmatprep.subr.mxu0 0.0
      %1013 = vmatpush1.msra.mxu0 0.0
      %1014 = vmatprep.subr.mxu0 0.0
      %1015 = vmatpush1.msra.mxu0 0.0
      %1016 = vmatprep.subr.mxu0 0.0
      %1017 = vmatpush1.msra.mxu0 0.0
      %1018 = vmatprep.subr.mxu0 0.0
      %1019 = vmatpush1.msra.mxu0 0.0
      %1020 = vmatprep.subr.mxu0 0.0
      %1021 = vmatpush1.msra.mxu0 0.0
      %1022 = vmatprep.subr.mxu0 0.0
      %1023 = vmatpush1.msra.mxu0 0.0
      %1024 = vmatprep.subr.mxu0 0.0
      %1025 = vmatpush1.msra.mxu0 0.0
      %1026 = vmatprep.subr.mxu0 0.0
      %1027 = vmatpush1.msra.mxu0 0.0
      %1028 = vmatprep.subr.mxu0 0.0
      %1029 = vmatpush1.msra.mxu0 0.0
      %1030 = vmatprep.subr.mxu0 0.0
      %1031 = vmatpush1.msra.mxu0 0.0
      %1032 = vmatprep.subr.mxu0 0.0
      %1033 = vmatpush1.msra.mxu0 0.0
      %1034 = vmatprep.subr.mxu0 0.0
      %1035 = vmatpush1.msra.mxu0 0.0
      %1036 = vmatprep.subr.mxu0 0.0
      %1037 = vmatpush1.msra.mxu0 0.0
      %1038 = vmatprep.subr.mxu0 0.0
      %1039 = vmatpush1.msra.mxu0 0.0
      %1040 = vmatprep.mubr.f32.mxu0 0.0
      %1041 = vmatmul.mubr.f32.gmra.mrb[0].mxu0 %v581
      %v1042 = vpop.f32.mrb[0].mxu0
      %v1043 = vadd.f32 0.0, %v1042
      %v1044 = vpop.f32.mrb[0].mxu0
      %1045 = vdwg.mxu0
      %1046 = vmatprep.subr.mxu0 0.0
      %1047 = vmatpush1.msra.mxu0 %v963
      %1048 = vmatprep.subr.mxu0 0.0
      %1049 = vmatpush1.msra.mxu0 0.0
      %1050 = vmatprep.subr.mxu0 0.0
      %1051 = vmatpush1.msra.mxu0 0.0
      %1052 = vmatprep.subr.mxu0 0.0
      %1053 = vmatpush1.msra.mxu0 0.0
      %1054 = vmatprep.subr.mxu0 0.0
      %1055 = vmatpush1.msra.mxu0 0.0
      %1056 = vmatprep.subr.mxu0 0.0
      %1057 = vmatpush1.msra.mxu0 0.0
      %1058 = vmatprep.subr.mxu0 0.0
      %1059 = vmatpush1.msra.mxu0 0.0
      %1060 = vmatprep.subr.mxu0 0.0
      %1061 = vmatpush1.msra.mxu0 0.0
      %1062 = vmatprep.subr.mxu0 0.0
      %1063 = vmatpush1.msra.mxu0 0.0
      %1064 = vmatprep.subr.mxu0 0.0
      %1065 = vmatpush1.msra.mxu0 0.0
      %1066 = vmatprep.subr.mxu0 0.0
      %1067 = vmatpush1.msra.mxu0 0.0
      %1068 = vmatprep.subr.mxu0 0.0
      %1069 = vmatpush1.msra.mxu0 0.0
      %1070 = vmatprep.subr.mxu0 0.0
      %1071 = vmatpush1.msra.mxu0 0.0
      %1072 = vmatprep.subr.mxu0 0.0
      %1073 = vmatpush1.msra.mxu0 0.0
      %1074 = vmatprep.subr.mxu0 0.0
      %1075 = vmatpush1.msra.mxu0 0.0
      %1076 = vmatprep.subr.mxu0 0.0
      %1077 = vmatpush1.msra.mxu0 0.0
      %1078 = vmatprep.subr.mxu0 0.0
      %1079 = vmatpush1.msra.mxu0 0.0
      %1080 = vmatprep.subr.mxu0 0.0
      %1081 = vmatpush1.msra.mxu0 0.0
      %1082 = vmatprep.subr.mxu0 0.0
      %1083 = vmatpush1.msra.mxu0 0.0
      %1084 = vmatprep.subr.mxu0 0.0
      %1085 = vmatpush1.msra.mxu0 0.0
      %1086 = vmatprep.subr.mxu0 0.0
      %1087 = vmatpush1.msra.mxu0 0.0
      %1088 = vmatprep.subr.mxu0 0.0
      %1089 = vmatpush1.msra.mxu0 0.0
      %1090 = vmatprep.subr.mxu0 0.0
      %1091 = vmatpush1.msra.mxu0 0.0
      %1092 = vmatprep.subr.mxu0 0.0
      %1093 = vmatpush1.msra.mxu0 0.0
      %1094 = vmatprep.subr.mxu0 0.0
      %1095 = vmatpush1.msra.mxu0 0.0
      %1096 = vmatprep.subr.mxu0 0.0
      %1097 = vmatpush1.msra.mxu0 0.0
      %1098 = vmatprep.subr.mxu0 0.0
      %1099 = vmatpush1.msra.mxu0 0.0
      %1100 = vmatprep.subr.mxu0 0.0
      %1101 = vmatpush1.msra.mxu0 0.0
      %1102 = vmatprep.subr.mxu0 0.0
      %1103 = vmatpush1.msra.mxu0 0.0
      %1104 = vmatprep.subr.mxu0 0.0
      %1105 = vmatpush1.msra.mxu0 0.0
      %1106 = vmatprep.subr.mxu0 0.0
      %1107 = vmatpush1.msra.mxu0 0.0
      %1108 = vmatprep.subr.mxu0 0.0
      %1109 = vmatpush1.msra.mxu0 0.0
      %1110 = vmatprep.mubr.f32.mxu0 0.0
      %1111 = vmatmul.mubr.f32.gmra.mrb[0].mxu0 %v581
      %v1112 = vpop.f32.mrb[0].mxu0
      %v1113 = vadd.f32 0.0, %v1112
      %v1114 = vpop.f32.mrb[0].mxu0
      %1115 = vdwg.mxu0
      %1116 = vmatprep.subr.mxu0 0.0
      %1117 = vmatpush1.msra.mxu0 %v968
      %1118 = vmatprep.subr.mxu0 0.0
      %1119 = vmatpush1.msra.mxu0 0.0
      %1120 = vmatprep.subr.mxu0 0.0
      %1121 = vmatpush1.msra.mxu0 0.0
      %1122 = vmatprep.subr.mxu0 0.0
      %1123 = vmatpush1.msra.mxu0 0.0
      %1124 = vmatprep.subr.mxu0 0.0
      %1125 = vmatpush1.msra.mxu0 0.0
      %1126 = vmatprep.subr.mxu0 0.0
      %1127 = vmatpush1.msra.mxu0 0.0
      %1128 = vmatprep.subr.mxu0 0.0
      %1129 = vmatpush1.msra.mxu0 0.0
      %1130 = vmatprep.subr.mxu0 0.0
      %1131 = vmatpush1.msra.mxu0 0.0
      %1132 = vmatprep.subr.mxu0 0.0
      %1133 = vmatpush1.msra.mxu0 0.0
      %1134 = vmatprep.subr.mxu0 0.0
      %1135 = vmatpush1.msra.mxu0 0.0
      %1136 = vmatprep.subr.mxu0 0.0
      %1137 = vmatpush1.msra.mxu0 0.0
      %1138 = vmatprep.subr.mxu0 0.0
      %1139 = vmatpush1.msra.mxu0 0.0
      %1140 = vmatprep.subr.mxu0 0.0
      %1141 = vmatpush1.msra.mxu0 0.0
      %1142 = vmatprep.subr.mxu0 0.0
      %1143 = vmatpush1.msra.mxu0 0.0
      %1144 = vmatprep.subr.mxu0 0.0
      %1145 = vmatpush1.msra.mxu0 0.0
      %1146 = vmatprep.subr.mxu0 0.0
      %1147 = vmatpush1.msra.mxu0 0.0
      %1148 = vmatprep.subr.mxu0 0.0
      %1149 = vmatpush1.msra.mxu0 0.0
      %1150 = vmatprep.subr.mxu0 0.0
      %1151 = vmatpush1.msra.mxu0 0.0
      %1152 = vmatprep.subr.mxu0 0.0
      %1153 = vmatpush1.msra.mxu0 0.0
      %1154 = vmatprep.subr.mxu0 0.0
      %1155 = vmatpush1.msra.mxu0 0.0
      %1156 = vmatprep.subr.mxu0 0.0
      %1157 = vmatpush1.msra.mxu0 0.0
      %1158 = vmatprep.subr.mxu0 0.0
      %1159 = vmatpush1.msra.mxu0 0.0
      %1160 = vmatprep.subr.mxu0 0.0
      %1161 = vmatpush1.msra.mxu0 0.0
      %1162 = vmatprep.subr.mxu0 0.0
      %1163 = vmatpush1.msra.mxu0 0.0
      %1164 = vmatprep.subr.mxu0 0.0
      %1165 = vmatpush1.msra.mxu0 0.0
      %1166 = vmatprep.subr.mxu0 0.0
      %1167 = vmatpush1.msra.mxu0 0.0
      %1168 = vmatprep.subr.mxu0 0.0
      %1169 = vmatpush1.msra.mxu0 0.0
      %1170 = vmatprep.subr.mxu0 0.0
      %1171 = vmatpush1.msra.mxu0 0.0
      %1172 = vmatprep.subr.mxu0 0.0
      %1173 = vmatpush1.msra.mxu0 0.0
      %1174 = vmatprep.subr.mxu0 0.0
      %1175 = vmatpush1.msra.mxu0 0.0
      %1176 = vmatprep.subr.mxu0 0.0
      %1177 = vmatpush1.msra.mxu0 0.0
      %1178 = vmatprep.subr.mxu0 0.0
      %1179 = vmatpush1.msra.mxu0 0.0
      %1180 = vmatprep.mubr.f32.mxu0 0.0
      %1181 = vmatmul.mubr.f32.gmra.mrb[0].mxu0 %v581
      %v1182 = vpop.f32.mrb[0].mxu0
      %v1183 = vadd.f32 0.0, %v1182
      %v1184 = vpop.f32.mrb[0].mxu0
      %1185 = vdwg.mxu0
      %1186 = vmatprep.subr.mxu0 0.0
      %1187 = vmatpush1.msra.mxu0 %v973
      %1188 = vmatprep.subr.mxu0 0.0
      %1189 = vmatpush1.msra.mxu0 0.0
      %1190 = vmatprep.subr.mxu0 0.0
      %1191 = vmatpush1.msra.mxu0 0.0
      %1192 = vmatprep.subr.mxu0 0.0
      %1193 = vmatpush1.msra.mxu0 0.0
      %1194 = vmatprep.subr.mxu0 0.0
      %1195 = vmatpush1.msra.mxu0 0.0
      %1196 = vmatprep.subr.mxu0 0.0
      %1197 = vmatpush1.msra.mxu0 0.0
      %1198 = vmatprep.subr.mxu0 0.0
      %1199 = vmatpush1.msra.mxu0 0.0
      %1200 = vmatprep.subr.mxu0 0.0
      %1201 = vmatpush1.msra.mxu0 0.0
      %1202 = vmatprep.subr.mxu0 0.0
      %1203 = vmatpush1.msra.mxu0 0.0
      %1204 = vmatprep.subr.mxu0 0.0
      %1205 = vmatpush1.msra.mxu0 0.0
      %1206 = vmatprep.subr.mxu0 0.0
      %1207 = vmatpush1.msra.mxu0 0.0
      %1208 = vmatprep.subr.mxu0 0.0
      %1209 = vmatpush1.msra.mxu0 0.0
      %1210 = vmatprep.subr.mxu0 0.0
      %1211 = vmatpush1.msra.mxu0 0.0
      %1212 = vmatprep.subr.mxu0 0.0
      %1213 = vmatpush1.msra.mxu0 0.0
      %1214 = vmatprep.subr.mxu0 0.0
      %1215 = vmatpush1.msra.mxu0 0.0
      %1216 = vmatprep.subr.mxu0 0.0
      %1217 = vmatpush1.msra.mxu0 0.0
      %1218 = vmatprep.subr.mxu0 0.0
      %1219 = vmatpush1.msra.mxu0 0.0
      %1220 = vmatprep.subr.mxu0 0.0
      %1221 = vmatpush1.msra.mxu0 0.0
      %1222 = vmatprep.subr.mxu0 0.0
      %1223 = vmatpush1.msra.mxu0 0.0
      %1224 = vmatprep.subr.mxu0 0.0
      %1225 = vmatpush1.msra.mxu0 0.0
      %1226 = vmatprep.subr.mxu0 0.0
      %1227 = vmatpush1.msra.mxu0 0.0
      %1228 = vmatprep.subr.mxu0 0.0
      %1229 = vmatpush1.msra.mxu0 0.0
      %1230 = vmatprep.subr.mxu0 0.0
      %1231 = vmatpush1.msra.mxu0 0.0
      %1232 = vmatprep.subr.mxu0 0.0
      %1233 = vmatpush1.msra.mxu0 0.0
      %1234 = vmatprep.subr.mxu0 0.0
      %1235 = vmatpush1.msra.mxu0 0.0
      %1236 = vmatprep.subr.mxu0 0.0
      %1237 = vmatpush1.msra.mxu0 0.0
      %1238 = vmatprep.subr.mxu0 0.0
      %1239 = vmatpush1.msra.mxu0 0.0
      %1240 = vmatprep.subr.mxu0 0.0
      %1241 = vmatpush1.msra.mxu0 0.0
      %1242 = vmatprep.subr.mxu0 0.0
      %1243 = vmatpush1.msra.mxu0 0.0
      %1244 = vmatprep.subr.mxu0 0.0
      %1245 = vmatpush1.msra.mxu0 0.0
      %1246 = vmatprep.subr.mxu0 0.0
      %1247 = vmatpush1.msra.mxu0 0.0
      %1248 = vmatprep.subr.mxu0 0.0
      %1249 = vmatpush1.msra.mxu0 0.0
      %1250 = vmatprep.mubr.f32.mxu0 0.0
      %1251 = vmatmul.mubr.f32.gmra.mrb[0].mxu0 %v581
      %v1252 = vpop.f32.mrb[0].mxu0
      %v1253 = vadd.f32 0.0, %v1252
      %v1254 = vpop.f32.mrb[0].mxu0
      %1255 = vdwg.mxu0
      %v1256 = vld [vmem:[%s5] sm:$0x1]
      %v1258 = vlaneseq
      %v1259 = vshrl.u32 %v1258, 7
      %v1260 = vsub.s32 0, %v1259
      %v1261 = vrot.slane %v1256, %v1260
      %v1263 = vadd.f32 %v1043, %v1261
      %v1264 = vadd.f32 %v1113, %v1261
      %v1265 = vadd.f32 %v1183, %v1261
      %v1266 = vadd.f32 %v1253, %v1261
      %v1267 = vmax.f32 %v1263, 0.0
      %v1268 = vmax.f32 %v1264, 0.0
      %v1269 = vmax.f32 %v1265, 0.0
      %v1270 = vmax.f32 %v1266, 0.0
      %v1271 = vld [vmem:[%s6] sm:$0xff]
      %v1272 = vld [vmem:[%s7] sm:$0x1]
      %v1274 = vlaneseq
      %v1275 = vshrl.u32 %v1274, 7
      %v1276 = vsub.s32 0, %v1275
      %v1277 = vrot.slane %v1272, %v1276
      %v1280 = vsel %vm579, %v1267, 0
      %v1283 = vsel %vm579, %v1268, 0
      %v1286 = vsel %vm579, %v1269, 0
      %v1289 = vsel %vm579, %v1270, 0
      %1291 = vmatprep.subr.mxu0 0.0
      %1292 = vmatpush1.msra.mxu0 %v1271
      %1293 = vmatprep.subr.mxu0 0.0
      %1294 = vmatpush1.msra.mxu0 0.0
      %1295 = vmatprep.subr.mxu0 0.0
      %1296 = vmatpush1.msra.mxu0 0.0
      %1297 = vmatprep.subr.mxu0 0.0
      %1298 = vmatpush1.msra.mxu0 0.0
      %1299 = vmatprep.subr.mxu0 0.0
      %1300 = vmatpush1.msra.mxu0 0.0
      %1301 = vmatprep.subr.mxu0 0.0
      %1302 = vmatpush1.msra.mxu0 0.0
      %1303 = vmatprep.subr.mxu0 0.0
      %1304 = vmatpush1.msra.mxu0 0.0
      %1305 = vmatprep.subr.mxu0 0.0
      %1306 = vmatpush1.msra.mxu0 0.0
      %1307 = vmatprep.subr.mxu0 0.0
      %1308 = vmatpush1.msra.mxu0 0.0
      %1309 = vmatprep.subr.mxu0 0.0
      %1310 = vmatpush1.msra.mxu0 0.0
      %1311 = vmatprep.subr.mxu0 0.0
      %1312 = vmatpush1.msra.mxu0 0.0
      %1313 = vmatprep.subr.mxu0 0.0
      %1314 = vmatpush1.msra.mxu0 0.0
      %1315 = vmatprep.subr.mxu0 0.0
      %1316 = vmatpush1.msra.mxu0 0.0
      %1317 = vmatprep.subr.mxu0 0.0
      %1318 = vmatpush1.msra.mxu0 0.0
      %1319 = vmatprep.subr.mxu0 0.0
      %1320 = vmatpush1.msra.mxu0 0.0
      %1321 = vmatprep.subr.mxu0 0.0
      %1322 = vmatpush1.msra.mxu0 0.0
      %1323 = vmatprep.subr.mxu0 0.0
      %1324 = vmatpush1.msra.mxu0 0.0
      %1325 = vmatprep.subr.mxu0 0.0
      %1326 = vmatpush1.msra.mxu0 0.0
      %1327 = vmatprep.subr.mxu0 0.0
      %1328 = vmatpush1.msra.mxu0 0.0
      %1329 = vmatprep.subr.mxu0 0.0
      %1330 = vmatpush1.msra.mxu0 0.0
      %1331 = vmatprep.subr.mxu0 0.0
      %1332 = vmatpush1.msra.mxu0 0.0
      %1333 = vmatprep.subr.mxu0 0.0
      %1334 = vmatpush1.msra.mxu0 0.0
      %1335 = vmatprep.subr.mxu0 0.0
      %1336 = vmatpush1.msra.mxu0 0.0
      %1337 = vmatprep.subr.mxu0 0.0
      %1338 = vmatpush1.msra.mxu0 0.0
      %1339 = vmatprep.subr.mxu0 0.0
      %1340 = vmatpush1.msra.mxu0 0.0
      %1341 = vmatprep.subr.mxu0 0.0
      %1342 = vmatpush1.msra.mxu0 0.0
      %1343 = vmatprep.subr.mxu0 0.0
      %1344 = vmatpush1.msra.mxu0 0.0
      %1345 = vmatprep.subr.mxu0 0.0
      %1346 = vmatpush1.msra.mxu0 0.0
      %1347 = vmatprep.subr.mxu0 0.0
      %1348 = vmatpush1.msra.mxu0 0.0
      %1349 = vmatprep.subr.mxu0 0.0
      %1350 = vmatpush1.msra.mxu0 0.0
      %1351 = vmatprep.subr.mxu0 0.0
      %1352 = vmatpush1.msra.mxu0 0.0
      %1353 = vmatprep.subr.mxu0 0.0
      %1354 = vmatpush1.msra.mxu0 0.0
      %1355 = vmatprep.mubr.f32.mxu0 0.0
      %1356 = vmatmul.mubr.f32.gmra.mrb[0].mxu0 %v1280
      %v1357 = vpop.f32.mrb[0].mxu0
      %v1358 = vadd.f32 %v1277, %v1357
      %v1359 = vpop.f32.mrb[0].mxu0
      %1360 = vmatprep.mubr.f32.mxu0 0.0
      %1361 = vmatmul.mubr.f32.gmra.mrb[0].mxu0 %v1283
      %v1362 = vpop.f32.mrb[0].mxu0
      %v1363 = vadd.f32 %v1277, %v1362
      %v1364 = vpop.f32.mrb[0].mxu0
      %1365 = vmatprep.mubr.f32.mxu0 0.0
      %1366 = vmatmul.mubr.f32.gmra.mrb[0].mxu0 %v1286
      %v1367 = vpop.f32.mrb[0].mxu0
      %v1368 = vadd.f32 %v1277, %v1367
      %v1369 = vpop.f32.mrb[0].mxu0
      %1370 = vmatprep.mubr.f32.mxu0 0.0
      %1371 = vmatmul.mubr.f32.gmra.mrb[0].mxu0 %v1289
      %v1372 = vpop.f32.mrb[0].mxu0
      %v1373 = vadd.f32 %v1277, %v1372
      %v1374 = vpop.f32.mrb[0].mxu0
      %1375 = vdwg.mxu0
      %v1376 = vmax.f32 %v1358, 0.0
      %v1377 = vmax.f32 %v1363, 0.0
      %v1378 = vmax.f32 %v1368, 0.0
      %v1379 = vmax.f32 %v1373, 0.0
      %v1380 = vld [vmem:[%s8] sm:$0xff]
      %v1381 = vld [vmem:[%s8 + $0x8] sm:$0xff]
      %v1382 = vld [vmem:[%s9] sm:$0x1]
      %v1384 = vlaneseq
      %v1385 = vshrl.u32 %v1384, 7
      %v1386 = vsub.s32 0, %v1385
      %v1387 = vrot.slane %v1382, %v1386
      %vm1389 = vcmask 130048
      %v1391 = vsel %vm1389, %v1376, 0
      %v1394 = vsel %vm1389, %v1377, 0
      %v1397 = vsel %vm1389, %v1378, 0
      %v1400 = vsel %vm1389, %v1379, 0
      %1402 = vmatprep.subr.mxu0 0.0
      %1403 = vmatpush1.msra.mxu0 %v1380
      %1404 = vmatprep.subr.mxu0 0.0
      %1405 = vmatpush1.msra.mxu0 %v1381
      %1406 = vmatprep.subr.mxu0 0.0
      %1407 = vmatpush1.msra.mxu0 0.0
      %1408 = vmatprep.subr.mxu0 0.0
      %1409 = vmatpush1.msra.mxu0 0.0
      %1410 = vmatprep.subr.mxu0 0.0
      %1411 = vmatpush1.msra.mxu0 0.0
      %1412 = vmatprep.subr.mxu0 0.0
      %1413 = vmatpush1.msra.mxu0 0.0
      %1414 = vmatprep.subr.mxu0 0.0
      %1415 = vmatpush1.msra.mxu0 0.0
      %1416 = vmatprep.subr.mxu0 0.0
      %1417 = vmatpush1.msra.mxu0 0.0
      %1418 = vmatprep.subr.mxu0 0.0
      %1419 = vmatpush1.msra.mxu0 0.0
      %1420 = vmatprep.subr.mxu0 0.0
      %1421 = vmatpush1.msra.mxu0 0.0
      %1422 = vmatprep.subr.mxu0 0.0
      %1423 = vmatpush1.msra.mxu0 0.0
      %1424 = vmatprep.subr.mxu0 0.0
      %1425 = vmatpush1.msra.mxu0 0.0
      %1426 = vmatprep.subr.mxu0 0.0
      %1427 = vmatpush1.msra.mxu0 0.0
      %1428 = vmatprep.subr.mxu0 0.0
      %1429 = vmatpush1.msra.mxu0 0.0
      %1430 = vmatprep.subr.mxu0 0.0
      %1431 = vmatpush1.msra.mxu0 0.0
      %1432 = vmatprep.subr.mxu0 0.0
      %1433 = vmatpush1.msra.mxu0 0.0
      %1434 = vmatprep.subr.mxu0 0.0
      %1435 = vmatpush1.msra.mxu0 0.0
      %1436 = vmatprep.subr.mxu0 0.0
      %1437 = vmatpush1.msra.mxu0 0.0
      %1438 = vmatprep.subr.mxu0 0.0
      %1439 = vmatpush1.msra.mxu0 0.0
      %1440 = vmatprep.subr.mxu0 0.0
      %1441 = vmatpush1.msra.mxu0 0.0
      %1442 = vmatprep.subr.mxu0 0.0
      %1443 = vmatpush1.msra.mxu0 0.0
      %1444 = vmatprep.subr.mxu0 0.0
      %1445 = vmatpush1.msra.mxu0 0.0
      %1446 = vmatprep.subr.mxu0 0.0
      %1447 = vmatpush1.msra.mxu0 0.0
      %1448 = vmatprep.subr.mxu0 0.0
      %1449 = vmatpush1.msra.mxu0 0.0
      %1450 = vmatprep.subr.mxu0 0.0
      %1451 = vmatpush1.msra.mxu0 0.0
      %1452 = vmatprep.subr.mxu0 0.0
      %1453 = vmatpush1.msra.mxu0 0.0
      %1454 = vmatprep.subr.mxu0 0.0
      %1455 = vmatpush1.msra.mxu0 0.0
      %1456 = vmatprep.subr.mxu0 0.0
      %1457 = vmatpush1.msra.mxu0 0.0
      %1458 = vmatprep.subr.mxu0 0.0
      %1459 = vmatpush1.msra.mxu0 0.0
      %1460 = vmatprep.subr.mxu0 0.0
      %1461 = vmatpush1.msra.mxu0 0.0
      %1462 = vmatprep.subr.mxu0 0.0
      %1463 = vmatpush1.msra.mxu0 0.0
      %1464 = vmatprep.subr.mxu0 0.0
      %1465 = vmatpush1.msra.mxu0 0.0
      %1466 = vmatprep.mubr.f32.mxu0 0.0
      %1467 = vmatmul.mubr.f32.gmra.mrb[0].mxu0 %v1391
      %v1468 = vpop.f32.mrb[0].mxu0
      %v1469 = vadd.f32 %v1387, %v1468
      %v1470 = vpop.f32.mrb[0].mxu0
      %1471 = vmatprep.mubr.f32.mxu0 0.0
      %1472 = vmatmul.mubr.f32.gmra.mrb[0].mxu0 %v1394
      %v1473 = vpop.f32.mrb[0].mxu0
      %v1474 = vadd.f32 %v1387, %v1473
      %v1475 = vpop.f32.mrb[0].mxu0
      %1476 = vmatprep.mubr.f32.mxu0 0.0
      %1477 = vmatmul.mubr.f32.gmra.mrb[0].mxu0 %v1397
      %v1478 = vpop.f32.mrb[0].mxu0
      %v1479 = vadd.f32 %v1387, %v1478
      %v1480 = vpop.f32.mrb[0].mxu0
      %1481 = vmatprep.mubr.f32.mxu0 0.0
      %1482 = vmatmul.mubr.f32.gmra.mrb[0].mxu0 %v1400
      %v1483 = vpop.f32.mrb[0].mxu0
      %v1484 = vadd.f32 %v1387, %v1483
      %v1485 = vpop.f32.mrb[0].mxu0
      %1486 = vdwg.mxu0
      %v1487 = vmax.f32 %v1469, 0.0
      %v1488 = vmax.f32 %v1474, 0.0
      %v1489 = vmax.f32 %v1479, 0.0
      %v1490 = vmax.f32 %v1484, 0.0
      %v1491 = vld [vmem:[%s10] sm:$0xff]
      %v1492 = vld [vmem:[%s10 + $0x8] sm:$0xff]
      %v1493 = vld [vmem:[%s11] sm:$0x1]
      %v1495 = vlaneseq
      %v1496 = vshrl.u32 %v1495, 7
      %v1497 = vsub.s32 0, %v1496
      %v1498 = vrot.slane %v1493, %v1497
      %v1501 = vsel %vm1389, %v1487, 0
      %v1504 = vsel %vm1389, %v1488, 0
      %v1507 = vsel %vm1389, %v1489, 0
      %v1510 = vsel %vm1389, %v1490, 0
      %1512 = vmatprep.subr.mxu0 0.0
      %1513 = vmatpush1.msra.mxu0 %v1491
      %1514 = vmatprep.subr.mxu0 0.0
      %1515 = vmatpush1.msra.mxu0 %v1492
      %1516 = vmatprep.subr.mxu0 0.0
      %1517 = vmatpush1.msra.mxu0 0.0
      %1518 = vmatprep.subr.mxu0 0.0
      %1519 = vmatpush1.msra.mxu0 0.0
      %1520 = vmatprep.subr.mxu0 0.0
      %1521 = vmatpush1.msra.mxu0 0.0
      %1522 = vmatprep.subr.mxu0 0.0
      %1523 = vmatpush1.msra.mxu0 0.0
      %1524 = vmatprep.subr.mxu0 0.0
      %1525 = vmatpush1.msra.mxu0 0.0
      %1526 = vmatprep.subr.mxu0 0.0
      %1527 = vmatpush1.msra.mxu0 0.0
      %1528 = vmatprep.subr.mxu0 0.0
      %1529 = vmatpush1.msra.mxu0 0.0
      %1530 = vmatprep.subr.mxu0 0.0
      %1531 = vmatpush1.msra.mxu0 0.0
      %1532 = vmatprep.subr.mxu0 0.0
      %1533 = vmatpush1.msra.mxu0 0.0
      %1534 = vmatprep.subr.mxu0 0.0
      %1535 = vmatpush1.msra.mxu0 0.0
      %1536 = vmatprep.subr.mxu0 0.0
      %1537 = vmatpush1.msra.mxu0 0.0
      %1538 = vmatprep.subr.mxu0 0.0
      %1539 = vmatpush1.msra.mxu0 0.0
      %1540 = vmatprep.subr.mxu0 0.0
      %1541 = vmatpush1.msra.mxu0 0.0
      %1542 = vmatprep.subr.mxu0 0.0
      %1543 = vmatpush1.msra.mxu0 0.0
      %1544 = vmatprep.subr.mxu0 0.0
      %1545 = vmatpush1.msra.mxu0 0.0
      %1546 = vmatprep.subr.mxu0 0.0
      %1547 = vmatpush1.msra.mxu0 0.0
      %1548 = vmatprep.subr.mxu0 0.0
      %1549 = vmatpush1.msra.mxu0 0.0
      %1550 = vmatprep.subr.mxu0 0.0
      %1551 = vmatpush1.msra.mxu0 0.0
      %1552 = vmatprep.subr.mxu0 0.0
      %1553 = vmatpush1.msra.mxu0 0.0
      %1554 = vmatprep.subr.mxu0 0.0
      %1555 = vmatpush1.msra.mxu0 0.0
      %1556 = vmatprep.subr.mxu0 0.0
      %1557 = vmatpush1.msra.mxu0 0.0
      %1558 = vmatprep.subr.mxu0 0.0
      %1559 = vmatpush1.msra.mxu0 0.0
      %1560 = vmatprep.subr.mxu0 0.0
      %1561 = vmatpush1.msra.mxu0 0.0
      %1562 = vmatprep.subr.mxu0 0.0
      %1563 = vmatpush1.msra.mxu0 0.0
      %1564 = vmatprep.subr.mxu0 0.0
      %1565 = vmatpush1.msra.mxu0 0.0
      %1566 = vmatprep.subr.mxu0 0.0
      %1567 = vmatpush1.msra.mxu0 0.0
      %1568 = vmatprep.subr.mxu0 0.0
      %1569 = vmatpush1.msra.mxu0 0.0
      %1570 = vmatprep.subr.mxu0 0.0
      %1571 = vmatpush1.msra.mxu0 0.0
      %1572 = vmatprep.subr.mxu0 0.0
      %1573 = vmatpush1.msra.mxu0 0.0
      %1574 = vmatprep.subr.mxu0 0.0
      %1575 = vmatpush1.msra.mxu0 0.0
      %1576 = vmatprep.mubr.f32.mxu0 0.0
      %1577 = vmatmul.mubr.f32.gmra.mrb[0].mxu0 %v1501
      %v1578 = vpop.f32.mrb[0].mxu0
      %v1579 = vadd.f32 %v1498, %v1578
      %v1580 = vpop.f32.mrb[0].mxu0
      %1581 = vmatprep.mubr.f32.mxu0 0.0
      %1582 = vmatmul.mubr.f32.gmra.mrb[0].mxu0 %v1504
      %v1583 = vpop.f32.mrb[0].mxu0
      %v1584 = vadd.f32 %v1498, %v1583
      %v1585 = vpop.f32.mrb[0].mxu0
      %1586 = vmatprep.mubr.f32.mxu0 0.0
      %1587 = vmatmul.mubr.f32.gmra.mrb[0].mxu0 %v1507
      %v1588 = vpop.f32.mrb[0].mxu0
      %v1589 = vadd.f32 %v1498, %v1588
      %v1590 = vpop.f32.mrb[0].mxu0
      %1591 = vmatprep.mubr.f32.mxu0 0.0
      %1592 = vmatmul.mubr.f32.gmra.mrb[0].mxu0 %v1510
      %v1593 = vpop.f32.mrb[0].mxu0
      %v1594 = vadd.f32 %v1498, %v1593
      %v1595 = vpop.f32.mrb[0].mxu0
      %1596 = vdwg.mxu0
      %v1597 = vld [vmem:[%s12] sm:$0xf]
      %v1598 = vld [vmem:[%s13] sm:$0xff]
      %v1600 = vsel %vm579, %v1579, 0
      %v1603 = vsel %vm579, %v1584, 0
      %v1606 = vsel %vm579, %v1589, 0
      %v1609 = vsel %vm579, %v1594, 0
      %1611 = vmatprep.subr.mxu0 0.0
      %1612 = vmatpush1.msra.mxu0 %v1598
      %1613 = vmatprep.subr.mxu0 0.0
      %1614 = vmatpush1.msra.mxu0 0.0
      %1615 = vmatprep.subr.mxu0 0.0
      %1616 = vmatpush1.msra.mxu0 0.0
      %1617 = vmatprep.subr.mxu0 0.0
      %1618 = vmatpush1.msra.mxu0 0.0
      %1619 = vmatprep.subr.mxu0 0.0
      %1620 = vmatpush1.msra.mxu0 0.0
      %1621 = vmatprep.subr.mxu0 0.0
      %1622 = vmatpush1.msra.mxu0 0.0
      %1623 = vmatprep.subr.mxu0 0.0
      %1624 = vmatpush1.msra.mxu0 0.0
      %1625 = vmatprep.subr.mxu0 0.0
      %1626 = vmatpush1.msra.mxu0 0.0
      %1627 = vmatprep.subr.mxu0 0.0
      %1628 = vmatpush1.msra.mxu0 0.0
      %1629 = vmatprep.subr.mxu0 0.0
      %1630 = vmatpush1.msra.mxu0 0.0
      %1631 = vmatprep.subr.mxu0 0.0
      %1632 = vmatpush1.msra.mxu0 0.0
      %1633 = vmatprep.subr.mxu0 0.0
      %1634 = vmatpush1.msra.mxu0 0.0
      %1635 = vmatprep.subr.mxu0 0.0
      %1636 = vmatpush1.msra.mxu0 0.0
      %1637 = vmatprep.subr.mxu0 0.0
      %1638 = vmatpush1.msra.mxu0 0.0
      %1639 = vmatprep.subr.mxu0 0.0
      %1640 = vmatpush1.msra.mxu0 0.0
      %1641 = vmatprep.subr.mxu0 0.0
      %1642 = vmatpush1.msra.mxu0 0.0
      %1643 = vmatprep.subr.mxu0 0.0
      %1644 = vmatpush1.msra.mxu0 0.0
      %1645 = vmatprep.subr.mxu0 0.0
      %1646 = vmatpush1.msra.mxu0 0.0
      %1647 = vmatprep.subr.mxu0 0.0
      %1648 = vmatpush1.msra.mxu0 0.0
      %1649 = vmatprep.subr.mxu0 0.0
      %1650 = vmatpush1.msra.mxu0 0.0
      %1651 = vmatprep.subr.mxu0 0.0
      %1652 = vmatpush1.msra.mxu0 0.0
      %1653 = vmatprep.subr.mxu0 0.0
      %1654 = vmatpush1.msra.mxu0 0.0
      %1655 = vmatprep.subr.mxu0 0.0
      %1656 = vmatpush1.msra.mxu0 0.0
      %1657 = vmatprep.subr.mxu0 0.0
      %1658 = vmatpush1.msra.mxu0 0.0
      %1659 = vmatprep.subr.mxu0 0.0
      %1660 = vmatpush1.msra.mxu0 0.0
      %1661 = vmatprep.subr.mxu0 0.0
      %1662 = vmatpush1.msra.mxu0 0.0
      %1663 = vmatprep.subr.mxu0 0.0
      %1664 = vmatpush1.msra.mxu0 0.0
      %1665 = vmatprep.subr.mxu0 0.0
      %1666 = vmatpush1.msra.mxu0 0.0
      %1667 = vmatprep.subr.mxu0 0.0
      %1668 = vmatpush1.msra.mxu0 0.0
      %1669 = vmatprep.subr.mxu0 0.0
      %1670 = vmatpush1.msra.mxu0 0.0
      %1671 = vmatprep.subr.mxu0 0.0
      %1672 = vmatpush1.msra.mxu0 0.0
      %1673 = vmatprep.subr.mxu0 0.0
      %1674 = vmatpush1.msra.mxu0 0.0
      %1675 = vmatprep.mubr.f32.mxu0 0.0
      %1676 = vmatmul.mubr.f32.gmra.mrb[0].mxu0 %v1600
      %v1677 = vpop.f32.mrb[0].mxu0
      %v1678 = vadd.f32 0.0, %v1677
      %v1679 = vpop.f32.mrb[0].mxu0
      %1680 = vmatprep.mubr.f32.mxu0 0.0
      %1681 = vmatmul.mubr.f32.gmra.mrb[0].mxu0 %v1603
      %v1682 = vpop.f32.mrb[0].mxu0
      %v1683 = vadd.f32 0.0, %v1682
      %v1684 = vpop.f32.mrb[0].mxu0
      %1685 = vmatprep.mubr.f32.mxu0 0.0
      %1686 = vmatmul.mubr.f32.gmra.mrb[0].mxu0 %v1606
      %v1687 = vpop.f32.mrb[0].mxu0
      %v1688 = vadd.f32 0.0, %v1687
      %v1689 = vpop.f32.mrb[0].mxu0
      %1690 = vmatprep.mubr.f32.mxu0 0.0
      %1691 = vmatmul.mubr.f32.gmra.mrb[0].mxu0 %v1609
      %v1692 = vpop.f32.mrb[0].mxu0
      %v1693 = vadd.f32 0.0, %v1692
      %v1694 = vpop.f32.mrb[0].mxu0
      %1695 = vdwg.mxu0
      %v1697 = vsel %vm490, %v1597, 0
      %1699 = vmatprep.subr.mxu0 0.0
      %1700 = vmatpush1.msra.mxu0 %v1697
      %1701 = vmatprep.subr.mxu0 0.0
      %1702 = vmatpush1.msra.mxu0 0.0
      %1703 = vmatprep.subr.mxu0 0.0
      %1704 = vmatpush1.msra.mxu0 0.0
      %1705 = vmatprep.subr.mxu0 0.0
      %1706 = vmatpush1.msra.mxu0 0.0
      %1707 = vmatprep.subr.mxu0 0.0
      %1708 = vmatpush1.msra.mxu0 0.0
      %1709 = vmatprep.subr.mxu0 0.0
      %1710 = vmatpush1.msra.mxu0 0.0
      %1711 = vmatprep.subr.mxu0 0.0
      %1712 = vmatpush1.msra.mxu0 0.0
      %1713 = vmatprep.subr.mxu0 0.0
      %1714 = vmatpush1.msra.mxu0 0.0
      %1715 = vmatprep.subr.mxu0 0.0
      %1716 = vmatpush1.msra.mxu0 0.0
      %1717 = vmatprep.subr.mxu0 0.0
      %1718 = vmatpush1.msra.mxu0 0.0
      %1719 = vmatprep.subr.mxu0 0.0
      %1720 = vmatpush1.msra.mxu0 0.0
      %1721 = vmatprep.subr.mxu0 0.0
      %1722 = vmatpush1.msra.mxu0 0.0
      %1723 = vmatprep.subr.mxu0 0.0
      %1724 = vmatpush1.msra.mxu0 0.0
      %1725 = vmatprep.subr.mxu0 0.0
      %1726 = vmatpush1.msra.mxu0 0.0
      %1727 = vmatprep.subr.mxu0 0.0
      %1728 = vmatpush1.msra.mxu0 0.0
      %1729 = vmatprep.subr.mxu0 0.0
      %1730 = vmatpush1.msra.mxu0 0.0
      %1731 = vmatprep.subr.mxu0 0.0
      %1732 = vmatpush1.msra.mxu0 0.0
      %1733 = vmatprep.subr.mxu0 0.0
      %1734 = vmatpush1.msra.mxu0 0.0
      %1735 = vmatprep.subr.mxu0 0.0
      %1736 = vmatpush1.msra.mxu0 0.0
      %1737 = vmatprep.subr.mxu0 0.0
      %1738 = vmatpush1.msra.mxu0 0.0
      %1739 = vmatprep.subr.mxu0 0.0
      %1740 = vmatpush1.msra.mxu0 0.0
      %1741 = vmatprep.subr.mxu0 0.0
      %1742 = vmatpush1.msra.mxu0 0.0
      %1743 = vmatprep.subr.mxu0 0.0
      %1744 = vmatpush1.msra.mxu0 0.0
      %1745 = vmatprep.subr.mxu0 0.0
      %1746 = vmatpush1.msra.mxu0 0.0
      %1747 = vmatprep.subr.mxu0 0.0
      %1748 = vmatpush1.msra.mxu0 0.0
      %1749 = vmatprep.subr.mxu0 0.0
      %1750 = vmatpush1.msra.mxu0 0.0
      %1751 = vmatprep.subr.mxu0 0.0
      %1752 = vmatpush1.msra.mxu0 0.0
      %1753 = vmatprep.subr.mxu0 0.0
      %1754 = vmatpush1.msra.mxu0 0.0
      %1755 = vmatprep.subr.mxu0 0.0
      %1756 = vmatpush1.msra.mxu0 0.0
      %1757 = vmatprep.subr.mxu0 0.0
      %1758 = vmatpush1.msra.mxu0 0.0
      %1759 = vmatprep.subr.mxu0 0.0
      %1760 = vmatpush1.msra.mxu0 0.0
      %1761 = vmatprep.subr.mxu0 0.0
      %1762 = vmatpush1.msra.mxu0 0.0
      %1763 = vmatprep.mubr.f32.mxu0 0.0
      %1764 = vmatmul.mubr.f32.gmra.mrb[0].mxu0 %v479
      %v1765 = vpop.f32.mrb[0].mxu0
      %v1766 = vadd.f32 %v1678, %v1765
      %v1767 = vpop.f32.mrb[0].mxu0
      %1768 = vmatprep.mubr.f32.mxu0 0.0
      %1769 = vmatmul.mubr.f32.gmra.mrb[0].mxu0 %v482
      %v1770 = vpop.f32.mrb[0].mxu0
      %v1771 = vadd.f32 %v1683, %v1770
      %v1772 = vpop.f32.mrb[0].mxu0
      %1773 = vmatprep.mubr.f32.mxu0 0.0
      %1774 = vmatmul.mubr.f32.gmra.mrb[0].mxu0 %v485
      %v1775 = vpop.f32.mrb[0].mxu0
      %v1776 = vadd.f32 %v1688, %v1775
      %v1777 = vpop.f32.mrb[0].mxu0
      %1778 = vmatprep.mubr.f32.mxu0 0.0
      %1779 = vmatmul.mubr.f32.gmra.mrb[0].mxu0 %v488
      %v1780 = vpop.f32.mrb[0].mxu0
      %v1781 = vadd.f32 %v1693, %v1780
      %v1782 = vpop.f32.mrb[0].mxu0
      %1783 = vdwg.mxu0
      %1784 = vst.msk [vmem:[%s469] sm:$0xff] %vm1389, %v1766
      %1785 = vst.msk [vmem:[%s469 + $0x8] sm:$0xff] %vm1389, %v1771
      %1786 = vst.msk [vmem:[%s469 + $0x10] sm:$0xff] %vm1389, %v1776
      %1787 = vst.msk [vmem:[%s469 + $0x18] sm:$0xff] %vm1389, %v1781
      %s1788 = smul.u32 4, %s25
      %p1789 = scmp.lt.s32.totalorder %s1788, 7
      %s1790 = scalar_select %p1789, %s1788, 7
      %s1791 = smul.addr %s1790, 8
      %s1792 = scalar_lea.vmem %s14, %s1791
      // Predicated region
      $region77: #{gcnn_rnn_forward.2} parent=75 // pred_check
        %p1793 = pneg %p342
      $region78: #{gcnn_rnn_forward.2} parent=75 // pred_check_branch
        %1795 = sbr.rel (%p1793) target = $region80
      $region79: #{gcnn_rnn_forward.2} parent=75 // pred_region
        %s1796 = smul.u32 4, %s25
      $region80: #{gcnn_rnn_forward.2} parent=75 // pred_fallthru
        _
    $region76: #{gcnn_rnn_forward.2} parent=5 // pred_fallthru
      _
    %p1797 = scmp.le.s32.totalorder 2, %s20
    // Predicated region
    $region81: #{gcnn_rnn_forward.2} parent=5 // pred_check
      %p1798 = pneg %p1797
    $region82: #{gcnn_rnn_forward.2} parent=5 // pred_check_branch
      %1800 = sbr.rel (%p1798) target = $region84
    $region83: #{gcnn_rnn_forward.2} parent=5 // pred_region
      %s1801 = ssub.s32 %s20, 2
      // Predicated region
      $region85: #{gcnn_rnn_forward.2} parent=83 // pred_check
        %p1802 = pneg %p348
      $region86: #{gcnn_rnn_forward.2} parent=83 // pred_check_branch
        %1804 = sbr.rel (%p1802) target = $region88
      $region87: #{gcnn_rnn_forward.2} parent=83 // pred_region
        %s1805 = smul.u32 4, %s26
        %p1806 = scmp.lt.s32.totalorder %s1805, 7
        %s1807 = scalar_select %p1806, %s1805, 7
        %s1808 = smul.addr %s1807, 8
        %s1809 = scalar_lea.vmem %s14, %s1808
      $region88: #{gcnn_rnn_forward.2} parent=83 // pred_fallthru
        _
    $region84: #{gcnn_rnn_forward.2} parent=5 // pred_fallthru
      _
  $region6: #{gcnn_rnn_forward.2} parent=0 // loop_footer
    %s24 = sadd.s32 1, %s20
  $region7: #{gcnn_rnn_forward.2} parent=0 // loop_footer_branch
    %19 = sbr.rel target = $region3
  $region8: #{gcnn_rnn_forward.2} parent=0 // loop_exit
    _

</llo_original>
